<compile_context>
chip_gen: v6e
topology: v6e:2x2x1
jax: 0.10.0
libtpu: 0.0.40
codegen_flags: <defaults>
</compile_context>

<pallas_src>
"""
Pallas/TPU implementation of the DeepSORT `BasicBlock` (Yolov3_DeepSort_Pytorch).

Design (inference mode, BatchNorm folded into per-channel scale/bias):
  * every convolution is lowered to a single tiled Pallas GEMM (im2col built
    in bf16 as glue) with a fused epilogue:  BN scale/bias  (+ residual add)
    (+ ReLU).  The residual add+ReLU of the block is fused into the conv2
    GEMM epilogue, so there is no separate elementwise pass over HBM.
  * GEMM operands are bf16 (native MXU path), accumulation is f32 in a VMEM
    scratch accumulator, inter-layer activations are bf16, final output f32.
  * M is always padded up to a >=16-row tile (no tiny-tile fallback) and is
    split into at least two parallel tiles for dual-TensorCore chips.
  * layout: kernels work on NHWC; the public entry point takes/returns
    PyTorch-style NCHW.

# TODO(synk): fuse the 3x3 im2col gather into the GEMM via halo/element-offset
# BlockSpecs (or 9 accumulated shifted GEMMs) to avoid materializing the 9x
# `cols` slab in HBM; for now it is only built in bf16 to halve that traffic.
"""

import functools
import math

import jax
import jax.numpy as jnp
from jax import lax
from jax.experimental import pallas as pl
from jax.experimental.pallas import tpu as pltpu

_BN_EPS = 1e-5


def _round_up(v, m):
    return (v + m - 1) // m * m


# ---------------------------------------------------------------------------
# Pallas kernel: tiled GEMM + fused BN scale/bias (+ residual) (+ ReLU)
# ---------------------------------------------------------------------------
def _make_gemm_kernel(act, has_residual):
    def kernel(*refs):
        if has_residual:
            x_ref, w_ref, s_ref, b_ref, r_ref, o_ref, acc_ref = refs
        else:
            x_ref, w_ref, s_ref, b_ref, o_ref, acc_ref = refs
            r_ref = None

        @pl.when(pl.program_id(1) == 0)
        def _():
            acc_ref[...] = jnp.zeros_like(acc_ref)

        acc_ref[...] += jnp.dot(x_ref[...], w_ref[...],
                                preferred_element_type=jnp.float32)

        @pl.when(pl.program_id(1) == pl.num_programs(1) - 1)
        def _():
            y = acc_ref[...] * s_ref[...] + b_ref[...]
            if has_residual:
                y = y + r_ref[...].astype(jnp.float32)
            if act == "relu":
                y = jnp.maximum(y, 0.0)
            o_ref[...] = y.astype(o_ref.dtype)

    return kernel


def gemm_bn_act(x, w, scale, bias, *, residual=None, act="none",
                out_dtype=jnp.bfloat16):
    """act((x @ w) * scale + bias [+ residual]) with a tiled Pallas GEMM.

    Operands are cast to bf16 (f32 MXU accumulation); output dtype is
    `out_dtype`.  M and (if needed) K are padded; the pad rows are sliced off.
    """
    m, k = x.shape
    k2, n = w.shape
    assert k == k2

    x = x.astype(jnp.bfloat16)
    w = w.astype(jnp.bfloat16)

    # --- M tiling: >=16-row tiles (bf16 sublane packing), large fixed tile on
    # big problems, and >=2 parallel tiles on small ones (dual-core chips).
    m16 = _round_up(m, 16)
    if m16 >= 512:
        tm = 256
    else:
        tm = max(16, _round_up(m16 // 2, 16))
    m_pad = _round_up(m, tm)
    if m_pad != m:
        x = jnp.pad(x, ((0, m_pad - m), (0, 0)))
        if residual is not None:
            residual = jnp.pad(residual, ((0, m_pad - m), (0, 0)))

    # --- K tiling: single full-K step when it fits, else 1024-wide K tiles.
    if k <= 2048:
        tk = k
        k_pad = k
    else:
        tk = 1024
        k_pad = _round_up(k, tk)
        x = jnp.pad(x, ((0, 0), (0, k_pad - k)))
        w = jnp.pad(w, ((0, k_pad - k), (0, 0)))

    scale2 = scale.reshape(1, n).astype(jnp.float32)
    bias2 = bias.reshape(1, n).astype(jnp.float32)

    has_res = residual is not None
    kernel = _make_gemm_kernel(act, has_res)

    in_specs = [
        pl.BlockSpec((tm, tk), lambda i, kk: (i, kk)),
        pl.BlockSpec((tk, n), lambda i, kk: (kk, 0)),
        pl.BlockSpec((1, n), lambda i, kk: (0, 0)),
        pl.BlockSpec((1, n), lambda i, kk: (0, 0)),
    ]
    args = [x, w, scale2, bias2]
    if has_res:
        in_specs.append(pl.BlockSpec((tm, n), lambda i, kk: (i, 0)))
        args.append(residual.astype(jnp.bfloat16))

    out = pl.pallas_call(
        kernel,
        out_shape=jax.ShapeDtypeStruct((m_pad, n), out_dtype),
        grid_spec=pltpu.PrefetchScalarGridSpec(
            num_scalar_prefetch=0,
            grid=(m_pad // tm, k_pad // tk),
            in_specs=in_specs,
            out_specs=pl.BlockSpec((tm, n), lambda i, kk: (i, 0)),
            scratch_shapes=[pltpu.VMEM((tm, n), jnp.float32)],
        ),
        compiler_params=pltpu.CompilerParams(
            dimension_semantics=("parallel", "arbitrary"),
            vmem_limit_bytes=48 * 1024 * 1024),
    )(*args)
    return out[:m]


# ---------------------------------------------------------------------------
# Convolution glue (im2col in bf16) + block forward
# ---------------------------------------------------------------------------
def _im2col(x, ksize, stride, pad):
    n, h, w, c = x.shape
    if pad:
        x = jnp.pad(x, ((0, 0), (pad, pad), (pad, pad), (0, 0)))
    ho = (h + 2 * pad - ksize) // stride + 1
    wo = (w + 2 * pad - ksize) // stride + 1
    parts = []
    for kh in range(ksize):
        for kw in range(ksize):
            parts.append(x[:, kh:kh + stride * ho:stride,
                           kw:kw + stride * wo:stride, :])
    cols = parts[0] if len(parts) == 1 else jnp.concatenate(parts, axis=-1)
    return cols.reshape(n * ho * wo, ksize * ksize * c), (n, ho, wo)


def conv_bn_act(x, layer, *, ksize, stride, pad, act, residual=None,
                out_dtype=jnp.bfloat16):
    """Conv2d (bias-free) + folded BatchNorm2d (+ residual) + activation."""
    cols, (n, ho, wo) = _im2col(x.astype(jnp.bfloat16), ksize, stride, pad)
    cout = layer["wmat"].shape[1]
    res2d = None
    if residual is not None:
        res2d = residual.reshape(n * ho * wo, cout)
    y = gemm_bn_act(cols, layer["wmat"], layer["scale"], layer["bias"],
                    residual=res2d, act=act, out_dtype=out_dtype)
    return y.reshape(n, ho, wo, cout)


def basic_block_forward(x, blk):
    """BasicBlock forward on NHWC input (inference mode)."""
    stride = 2 if blk["is_downsample"] else 1
    y = conv_bn_act(x, blk["conv1"], ksize=3, stride=stride, pad=1,
                    act="relu", out_dtype=jnp.bfloat16)
    if blk["shortcut"] is not None:
        sc = conv_bn_act(x, blk["shortcut"], ksize=1, stride=stride, pad=0,
                         act="none", out_dtype=jnp.bfloat16)
    else:
        sc = x.astype(jnp.bfloat16)
    # conv2 + BN2 + residual add + ReLU, all fused in one GEMM epilogue.
    out = conv_bn_act(y, blk["conv2"], ksize=3, stride=1, pad=1,
                      act="relu", residual=sc, out_dtype=jnp.float32)
    return out


def basic_block_nchw(x_nchw, blk):
    """PyTorch-style entry point: NCHW in, NCHW out."""
    x = jnp.transpose(x_nchw, (0, 2, 3, 1)).astype(jnp.float32)
    y = basic_block_forward(x, blk)
    return jnp.transpose(y, (0, 3, 1, 2))


# ---------------------------------------------------------------------------
# Parameters: torch-layout init + one-time prep (transpose + BN fold)
# ---------------------------------------------------------------------------
def init_basic_block(key, c_in, c_out, is_downsample=False):
    keys = iter(jax.random.split(key, 16))
    nk = lambda: next(keys)

    def conv_w(cin, cout, ksz):
        fan = cin * ksz * ksz
        return (jax.random.normal(nk(), (cout, cin, ksz, ksz), jnp.float32)
                / math.sqrt(fan))

    def bn_p(c):
        return {
            "gamma": 1.0 + 0.1 * jax.random.normal(nk(), (c,), jnp.float32),
            "beta": 0.1 * jax.random.normal(nk(), (c,), jnp.float32),
            "mean": 0.1 * jax.random.normal(nk(), (c,), jnp.float32),
            "var": 0.9 + 0.2 * jax.random.uniform(nk(), (c,), jnp.float32),
        }

    p = {
        "is_downsample": is_downsample,          # constructor flag (strides)
        "conv1_w": conv_w(c_in, c_out, 3),
        "bn1": bn_p(c_out),
        "conv2_w": conv_w(c_out, c_out, 3),
        "bn2": bn_p(c_out),
        "down_conv_w": None,
        "down_bn": None,
    }
    if is_downsample or c_in != c_out:
        p["down_conv_w"] = conv_w(c_in, c_out, 1)
        p["down_bn"] = bn_p(c_out)
    return p


def _fold_conv_bn(w_oihw, bn):
    """One-time prep: torch (O,I,KH,KW) -> (KH*KW*I, O) bf16 + folded BN."""
    cout, cin, kh, kw = w_oihw.shape
    wmat = jnp.transpose(w_oihw, (2, 3, 1, 0)).reshape(kh * kw * cin, cout)
    scale = bn["gamma"] / jnp.sqrt(bn["var"] + _BN_EPS)
    bias = bn["beta"] - bn["mean"] * scale
    return {"wmat": wmat.astype(jnp.bfloat16),
            "scale": scale.astype(jnp.float32),
            "bias": bias.astype(jnp.float32)}


def prepare_basic_block(p):
    blk = {
        "is_downsample": p["is_downsample"],
        "conv1": _fold_conv_bn(p["conv1_w"], p["bn1"]),
        "conv2": _fold_conv_bn(p["conv2_w"], p["bn2"]),
        "shortcut": None,
    }
    if p["down_conv_w"] is not None:
        blk["shortcut"] = _fold_conv_bn(p["down_conv_w"], p["down_bn"])
    return blk


# ---------------------------------------------------------------------------
# Pure-JAX reference (mirrors the kernel's bf16 dtype flow)
# ---------------------------------------------------------------------------
def _conv_ref(x_nhwc, w_oihw, stride, pad):
    w = jnp.transpose(w_oihw, (2, 3, 1, 0)).astype(jnp.bfloat16)  # HWIO
    return lax.conv_general_dilated(
        x_nhwc.astype(jnp.bfloat16), w,
        window_strides=(stride, stride),
        padding=[(pad, pad), (pad, pad)],
        dimension_numbers=("NHWC", "HWIO", "NHWC"),
        preferred_element_type=jnp.float32)


def basic_block_reference(x_nchw, p):
    x = jnp.transpose(x_nchw, (0, 2, 3, 1)).astype(jnp.float32)
    stride = 2 if p["is_downsample"] else 1

    def bn(y, b):
        s = b["gamma"] / jnp.sqrt(b["var"] + _BN_EPS)
        return y * s + (b["beta"] - b["mean"] * s)

    y = jnp.maximum(bn(_conv_ref(x, p["conv1_w"], stride, 1), p["bn1"]), 0.0)
    y = y.astype(jnp.bfloat16)
    y2 = bn(_conv_ref(y, p["conv2_w"], 1, 1), p["bn2"])
    if p["down_conv_w"] is not None:
        sc = bn(_conv_ref(x, p["down_conv_w"], stride, 0), p["down_bn"])
        sc = sc.astype(jnp.bfloat16).astype(jnp.float32)
    else:
        sc = x.astype(jnp.bfloat16).astype(jnp.float32)
    out = jnp.maximum(y2 + sc, 0.0)
    return jnp.transpose(out, (0, 3, 1, 2))


# ---------------------------------------------------------------------------
if __name__ == "__main__":
    key = jax.random.PRNGKey(0)
    k1, k2, k3, k4 = jax.random.split(key, 4)

    # 1) Down-sampling block: c_in=64 -> c_out=128, stride 2, 1x1 shortcut.
    p_down = init_basic_block(k1, 64, 128, is_downsample=True)
    blk_down = prepare_basic_block(p_down)
    x_down = jax.random.normal(k2, (2, 64, 16, 16), jnp.float32)
    fwd_down = jax.jit(functools.partial(basic_block_nchw, blk=blk_down))
    out_down = jax.block_until_ready(fwd_down(x_down))
    assert out_down.shape == (2, 128, 8, 8), out_down.shape
    err_down = float(jnp.max(jnp.abs(out_down
                                     - basic_block_reference(x_down, p_down))))
    assert err_down < 2e-2, f"downsample block mismatch: {err_down}"

    # 2) Identity-shortcut block: c_in = c_out = 64, stride 1.
    p_id = init_basic_block(k3, 64, 64, is_downsample=False)
    blk_id = prepare_basic_block(p_id)
    x_id = jax.random.normal(k4, (2, 64, 16, 16), jnp.float32)
    fwd_id = jax.jit(functools.partial(basic_block_nchw, blk=blk_id))
    out_id = jax.block_until_ready(fwd_id(x_id))
    assert out_id.shape == (2, 64, 16, 16), out_id.shape
    err_id = float(jnp.max(jnp.abs(out_id
                                   - basic_block_reference(x_id, p_id))))
    assert err_id < 2e-2, f"identity block mismatch: {err_id}"

    assert bool(jnp.all(jnp.isfinite(out_down)))
    assert bool(jnp.all(jnp.isfinite(out_id)))
    print("KERNEL_OK")
</pallas_src>

<mosaic_0001>
module attributes {stable_mosaic.version = 11 : i64} {
  func.func @kernel(%arg0: i32, %arg1: i32, %arg2: memref<64x64xbf16, #tpu.memory_space<vmem>>, %arg3: memref<64x128xbf16, #tpu.memory_space<vmem>>, %arg4: memref<1x128xf32, #tpu.memory_space<vmem>>, %arg5: memref<1x128xf32, #tpu.memory_space<vmem>>, %arg6: memref<64x128xbf16, #tpu.memory_space<vmem>>, %arg7: memref<64x128xf32, #tpu.memory_space<vmem>>) attributes {dimension_semantics = [#tpu.dimension_semantics<parallel>, #tpu.dimension_semantics<arbitrary>], iteration_bounds = array<i64: 2, 1>, scalar_prefetch = 0 : i64, scratch_operands = 1 : i64, tpu.core_type = #tpu.core_type<tc>, window_params = [{transform_indices = @transform_0, window_bounds = array<i64: 64, 64>}, {transform_indices = @transform_1, window_bounds = array<i64: 64, 128>}, {pipeline_mode = #tpu.pipeline_mode<synchronous>, transform_indices = @transform_2, window_bounds = array<i64: 1, 128>}, {pipeline_mode = #tpu.pipeline_mode<synchronous>, transform_indices = @transform_3, window_bounds = array<i64: 1, 128>}, {transform_indices = @transform_4, window_bounds = array<i64: 64, 128>}]} {
    %c0_i32 = arith.constant 0 : i32
    %0 = arith.cmpi eq, %arg1, %c0_i32 : i32
    %1 = arith.extui %0 : i1 to i32
    %c0_i32_0 = arith.constant 0 : i32
    %2 = arith.cmpi ne, %1, %c0_i32_0 : i32
    scf.if %2 {
      %cst_10 = arith.constant 0.000000e+00 : f32
      %12 = vector.broadcast %cst_10 : f32 to vector<64x128xf32>
      %c0_11 = arith.constant 0 : index
      %c0_12 = arith.constant 0 : index
      %13 = vector.load %arg7[%c0_11, %c0_12] : memref<64x128xf32, #tpu.memory_space<vmem>>, vector<64x128xf32>
      tpu.vector_store %arg7[%c0_11, %c0_12], %12 {strides = array<i32>} : memref<64x128xf32, #tpu.memory_space<vmem>>, vector<64x128xf32>,
    } else {
    }
    %c0 = arith.constant 0 : index
    %c0_1 = arith.constant 0 : index
    %3 = vector.load %arg7[%c0, %c0_1] : memref<64x128xf32, #tpu.memory_space<vmem>>, vector<64x128xf32>
    %c0_2 = arith.constant 0 : index
    %c0_3 = arith.constant 0 : index
    %4 = vector.load %arg2[%c0_2, %c0_3] : memref<64x64xbf16, #tpu.memory_space<vmem>>, vector<64x64xbf16>
    %c0_4 = arith.constant 0 : index
    %c0_5 = arith.constant 0 : index
    %5 = vector.load %arg3[%c0_4, %c0_5] : memref<64x128xbf16, #tpu.memory_space<vmem>>, vector<64x128xbf16>
    %cst = arith.constant dense<0.000000e+00> : vector<64x128xf32>
    %6 = tpu.matmul %4, %5, %cst {dimension_numbers = #tpu.dot_dimension_numbers<[1], [0], [0], [1], [0, 0, 1, 1], [], []>} : vector<64x64xbf16>, vector<64x128xbf16>, vector<64x128xf32> -> vector<64x128xf32>
    %7 = arith.addf %3, %6 : vector<64x128xf32>
    %c0_6 = arith.constant 0 : index
    %c0_7 = arith.constant 0 : index
    %8 = vector.load %arg7[%c0_6, %c0_7] : memref<64x128xf32, #tpu.memory_space<vmem>>, vector<64x128xf32>
    tpu.vector_store %arg7[%c0_6, %c0_7], %7 {strides = array<i32>} : memref<64x128xf32, #tpu.memory_space<vmem>>, vector<64x128xf32>,
    %c0_i32_8 = arith.constant 0 : i32
    %9 = arith.cmpi eq, %arg1, %c0_i32_8 : i32
    %10 = arith.extui %9 : i1 to i32
    %c0_i32_9 = arith.constant 0 : i32
    %11 = arith.cmpi ne, %10, %c0_i32_9 : i32
    scf.if %11 {
      %c0_10 = arith.constant 0 : index
      %c0_11 = arith.constant 0 : index
      %12 = vector.load %arg7[%c0_10, %c0_11] : memref<64x128xf32, #tpu.memory_space<vmem>>, vector<64x128xf32>
      %c0_12 = arith.constant 0 : index
      %c0_13 = arith.constant 0 : index
      %13 = vector.load %arg4[%c0_12, %c0_13] : memref<1x128xf32, #tpu.memory_space<vmem>>, vector<1x128xf32>
      %14 = vector.broadcast %13 : vector<1x128xf32> to vector<64x128xf32>
      %15 = arith.mulf %12, %14 : vector<64x128xf32>
      %c0_14 = arith.constant 0 : index
      %c0_15 = arith.constant 0 : index
      %16 = vector.load %arg5[%c0_14, %c0_15] : memref<1x128xf32, #tpu.memory_space<vmem>>, vector<1x128xf32>
      %17 = vector.broadcast %16 : vector<1x128xf32> to vector<64x128xf32>
      %18 = arith.addf %15, %17 : vector<64x128xf32>
      %19 = arith.truncf %18 : vector<64x128xf32> to vector<64x128xbf16>
      %c0_16 = arith.constant 0 : index
      %c0_17 = arith.constant 0 : index
      %20 = vector.load %arg6[%c0_16, %c0_17] : memref<64x128xbf16, #tpu.memory_space<vmem>>, vector<64x128xbf16>
      tpu.vector_store %arg6[%c0_16, %c0_17], %19 {strides = array<i32>} : memref<64x128xbf16, #tpu.memory_space<vmem>>, vector<64x128xbf16>,
    } else {
    }
    return
  }
  func.func @transform_0(%arg0: i32, %arg1: i32) -> (i32, i32) {
    %c0_i32 = arith.constant 0 : i32
    return %arg0, %arg1 : i32, i32
  }
  func.func @transform_1(%arg0: i32, %arg1: i32) -> (i32, i32) {
    %c0_i32 = arith.constant 0 : i32
    %c0_i32_0 = arith.constant 0 : i32
    return %arg1, %c0_i32 : i32, i32
  }
  func.func @transform_2(%arg0: i32, %arg1: i32) -> (i32, i32) {
    %c0_i32 = arith.constant 0 : i32
    %c0_i32_0 = arith.constant 0 : i32
    %c0_i32_1 = arith.constant 0 : i32
    return %c0_i32, %c0_i32_0 : i32, i32
  }
  func.func @transform_3(%arg0: i32, %arg1: i32) -> (i32, i32) {
    %c0_i32 = arith.constant 0 : i32
    %c0_i32_0 = arith.constant 0 : i32
    %c0_i32_1 = arith.constant 0 : i32
    return %c0_i32, %c0_i32_0 : i32, i32
  }
  func.func @transform_4(%arg0: i32, %arg1: i32) -> (i32, i32) {
    %c0_i32 = arith.constant 0 : i32
    %c0_i32_0 = arith.constant 0 : i32
    return %arg0, %c0_i32 : i32, i32
  }
}

module attributes {stable_mosaic.version = 11 : i64} {
  func.func @kernel(%arg0: i32, %arg1: i32, %arg2: memref<64x576xbf16, #tpu.memory_space<vmem>>, %arg3: memref<576x128xbf16, #tpu.memory_space<vmem>>, %arg4: memref<1x128xf32, #tpu.memory_space<vmem>>, %arg5: memref<1x128xf32, #tpu.memory_space<vmem>>, %arg6: memref<64x128xbf16, #tpu.memory_space<vmem>>, %arg7: memref<64x128xf32, #tpu.memory_space<vmem>>) attributes {dimension_semantics = [#tpu.dimension_semantics<parallel>, #tpu.dimension_semantics<arbitrary>], iteration_bounds = array<i64: 2, 1>, scalar_prefetch = 0 : i64, scratch_operands = 1 : i64, tpu.core_type = #tpu.core_type<tc>, window_params = [{transform_indices = @transform_0, window_bounds = array<i64: 64, 576>}, {transform_indices = @transform_1, window_bounds = array<i64: 576, 128>}, {pipeline_mode = #tpu.pipeline_mode<synchronous>, transform_indices = @transform_2, window_bounds = array<i64: 1, 128>}, {pipeline_mode = #tpu.pipeline_mode<synchronous>, transform_indices = @transform_3, window_bounds = array<i64: 1, 128>}, {transform_indices = @transform_4, window_bounds = array<i64: 64, 128>}]} {
    %c0_i32 = arith.constant 0 : i32
    %0 = arith.cmpi eq, %arg1, %c0_i32 : i32
    %1 = arith.extui %0 : i1 to i32
    %c0_i32_0 = arith.constant 0 : i32
    %2 = arith.cmpi ne, %1, %c0_i32_0 : i32
    scf.if %2 {
      %cst_10 = arith.constant 0.000000e+00 : f32
      %12 = vector.broadcast %cst_10 : f32 to vector<64x128xf32>
      %c0_11 = arith.constant 0 : index
      %c0_12 = arith.constant 0 : index
      %13 = vector.load %arg7[%c0_11, %c0_12] : memref<64x128xf32, #tpu.memory_space<vmem>>, vector<64x128xf32>
      tpu.vector_store %arg7[%c0_11, %c0_12], %12 {strides = array<i32>} : memref<64x128xf32, #tpu.memory_space<vmem>>, vector<64x128xf32>,
    } else {
    }
    %c0 = arith.constant 0 : index
    %c0_1 = arith.constant 0 : index
    %3 = vector.load %arg7[%c0, %c0_1] : memref<64x128xf32, #tpu.memory_space<vmem>>, vector<64x128xf32>
    %c0_2 = arith.constant 0 : index
    %c0_3 = arith.constant 0 : index
    %4 = vector.load %arg2[%c0_2, %c0_3] : memref<64x576xbf16, #tpu.memory_space<vmem>>, vector<64x576xbf16>
    %c0_4 = arith.constant 0 : index
    %c0_5 = arith.constant 0 : index
    %5 = vector.load %arg3[%c0_4, %c0_5] : memref<576x128xbf16, #tpu.memory_space<vmem>>, vector<576x128xbf16>
    %cst = arith.constant dense<0.000000e+00> : vector<64x128xf32>
    %6 = tpu.matmul %4, %5, %cst {dimension_numbers = #tpu.dot_dimension_numbers<[1], [0], [0], [1], [0, 0, 1, 1], [], []>} : vector<64x576xbf16>, vector<576x128xbf16>, vector<64x128xf32> -> vector<64x128xf32>
    %7 = arith.addf %3, %6 : vector<64x128xf32>
    %c0_6 = arith.constant 0 : index
    %c0_7 = arith.constant 0 : index
    %8 = vector.load %arg7[%c0_6, %c0_7] : memref<64x128xf32, #tpu.memory_space<vmem>>, vector<64x128xf32>
    tpu.vector_store %arg7[%c0_6, %c0_7], %7 {strides = array<i32>} : memref<64x128xf32, #tpu.memory_space<vmem>>, vector<64x128xf32>,
    %c0_i32_8 = arith.constant 0 : i32
    %9 = arith.cmpi eq, %arg1, %c0_i32_8 : i32
    %10 = arith.extui %9 : i1 to i32
    %c0_i32_9 = arith.constant 0 : i32
    %11 = arith.cmpi ne, %10, %c0_i32_9 : i32
    scf.if %11 {
      %c0_10 = arith.constant 0 : index
      %c0_11 = arith.constant 0 : index
      %12 = vector.load %arg7[%c0_10, %c0_11] : memref<64x128xf32, #tpu.memory_space<vmem>>, vector<64x128xf32>
      %c0_12 = arith.constant 0 : index
      %c0_13 = arith.constant 0 : index
      %13 = vector.load %arg4[%c0_12, %c0_13] : memref<1x128xf32, #tpu.memory_space<vmem>>, vector<1x128xf32>
      %14 = vector.broadcast %13 : vector<1x128xf32> to vector<64x128xf32>
      %15 = arith.mulf %12, %14 : vector<64x128xf32>
      %c0_14 = arith.constant 0 : index
      %c0_15 = arith.constant 0 : index
      %16 = vector.load %arg5[%c0_14, %c0_15] : memref<1x128xf32, #tpu.memory_space<vmem>>, vector<1x128xf32>
      %17 = vector.broadcast %16 : vector<1x128xf32> to vector<64x128xf32>
      %18 = arith.addf %15, %17 : vector<64x128xf32>
      %cst_16 = arith.constant 0.000000e+00 : f32
      %19 = vector.broadcast %cst_16 : f32 to vector<64x128xf32>
      %20 = arith.maximumf %18, %19 : vector<64x128xf32>
      %21 = arith.truncf %20 : vector<64x128xf32> to vector<64x128xbf16>
      %c0_17 = arith.constant 0 : index
      %c0_18 = arith.constant 0 : index
      %22 = vector.load %arg6[%c0_17, %c0_18] : memref<64x128xbf16, #tpu.memory_space<vmem>>, vector<64x128xbf16>
      tpu.vector_store %arg6[%c0_17, %c0_18], %21 {strides = array<i32>} : memref<64x128xbf16, #tpu.memory_space<vmem>>, vector<64x128xbf16>,
    } else {
    }
    return
  }
  func.func @transform_0(%arg0: i32, %arg1: i32) -> (i32, i32) {
    %c0_i32 = arith.constant 0 : i32
    return %arg0, %arg1 : i32, i32
  }
  func.func @transform_1(%arg0: i32, %arg1: i32) -> (i32, i32) {
    %c0_i32 = arith.constant 0 : i32
    %c0_i32_0 = arith.constant 0 : i32
    return %arg1, %c0_i32 : i32, i32
  }
  func.func @transform_2(%arg0: i32, %arg1: i32) -> (i32, i32) {
    %c0_i32 = arith.constant 0 : i32
    %c0_i32_0 = arith.constant 0 : i32
    %c0_i32_1 = arith.constant 0 : i32
    return %c0_i32, %c0_i32_0 : i32, i32
  }
  func.func @transform_3(%arg0: i32, %arg1: i32) -> (i32, i32) {
    %c0_i32 = arith.constant 0 : i32
    %c0_i32_0 = arith.constant 0 : i32
    %c0_i32_1 = arith.constant 0 : i32
    return %c0_i32, %c0_i32_0 : i32, i32
  }
  func.func @transform_4(%arg0: i32, %arg1: i32) -> (i32, i32) {
    %c0_i32 = arith.constant 0 : i32
    %c0_i32_0 = arith.constant 0 : i32
    return %arg0, %c0_i32 : i32, i32
  }
}

module attributes {stable_mosaic.version = 11 : i64} {
  func.func @kernel(%arg0: i32, %arg1: i32, %arg2: memref<64x1152xbf16, #tpu.memory_space<vmem>>, %arg3: memref<1152x128xbf16, #tpu.memory_space<vmem>>, %arg4: memref<1x128xf32, #tpu.memory_space<vmem>>, %arg5: memref<1x128xf32, #tpu.memory_space<vmem>>, %arg6: memref<64x128xbf16, #tpu.memory_space<vmem>>, %arg7: memref<64x128xf32, #tpu.memory_space<vmem>>, %arg8: memref<64x128xf32, #tpu.memory_space<vmem>>) attributes {dimension_semantics = [#tpu.dimension_semantics<parallel>, #tpu.dimension_semantics<arbitrary>], iteration_bounds = array<i64: 2, 1>, scalar_prefetch = 0 : i64, scratch_operands = 1 : i64, tpu.core_type = #tpu.core_type<tc>, window_params = [{transform_indices = @transform_0, window_bounds = array<i64: 64, 1152>}, {transform_indices = @transform_1, window_bounds = array<i64: 1152, 128>}, {pipeline_mode = #tpu.pipeline_mode<synchronous>, transform_indices = @transform_2, window_bounds = array<i64: 1, 128>}, {pipeline_mode = #tpu.pipeline_mode<synchronous>, transform_indices = @transform_3, window_bounds = array<i64: 1, 128>}, {transform_indices = @transform_4, window_bounds = array<i64: 64, 128>}, {transform_indices = @transform_5, window_bounds = array<i64: 64, 128>}]} {
    %c0_i32 = arith.constant 0 : i32
    %0 = arith.cmpi eq, %arg1, %c0_i32 : i32
    %1 = arith.extui %0 : i1 to i32
    %c0_i32_0 = arith.constant 0 : i32
    %2 = arith.cmpi ne, %1, %c0_i32_0 : i32
    scf.if %2 {
      %cst_10 = arith.constant 0.000000e+00 : f32
      %12 = vector.broadcast %cst_10 : f32 to vector<64x128xf32>
      %c0_11 = arith.constant 0 : index
      %c0_12 = arith.constant 0 : index
      %13 = vector.load %arg8[%c0_11, %c0_12] : memref<64x128xf32, #tpu.memory_space<vmem>>, vector<64x128xf32>
      tpu.vector_store %arg8[%c0_11, %c0_12], %12 {strides = array<i32>} : memref<64x128xf32, #tpu.memory_space<vmem>>, vector<64x128xf32>,
    } else {
    }
    %c0 = arith.constant 0 : index
    %c0_1 = arith.constant 0 : index
    %3 = vector.load %arg8[%c0, %c0_1] : memref<64x128xf32, #tpu.memory_space<vmem>>, vector<64x128xf32>
    %c0_2 = arith.constant 0 : index
    %c0_3 = arith.constant 0 : index
    %4 = vector.load %arg2[%c0_2, %c0_3] : memref<64x1152xbf16, #tpu.memory_space<vmem>>, vector<64x1152xbf16>
    %c0_4 = arith.constant 0 : index
    %c0_5 = arith.constant 0 : index
    %5 = vector.load %arg3[%c0_4, %c0_5] : memref<1152x128xbf16, #tpu.memory_space<vmem>>, vector<1152x128xbf16>
    %cst = arith.constant dense<0.000000e+00> : vector<64x128xf32>
    %6 = tpu.matmul %4, %5, %cst {dimension_numbers = #tpu.dot_dimension_numbers<[1], [0], [0], [1], [0, 0, 1, 1], [], []>} : vector<64x1152xbf16>, vector<1152x128xbf16>, vector<64x128xf32> -> vector<64x128xf32>
    %7 = arith.addf %3, %6 : vector<64x128xf32>
    %c0_6 = arith.constant 0 : index
    %c0_7 = arith.constant 0 : index
    %8 = vector.load %arg8[%c0_6, %c0_7] : memref<64x128xf32, #tpu.memory_space<vmem>>, vector<64x128xf32>
    tpu.vector_store %arg8[%c0_6, %c0_7], %7 {strides = array<i32>} : memref<64x128xf32, #tpu.memory_space<vmem>>, vector<64x128xf32>,
    %c0_i32_8 = arith.constant 0 : i32
    %9 = arith.cmpi eq, %arg1, %c0_i32_8 : i32
    %10 = arith.extui %9 : i1 to i32
    %c0_i32_9 = arith.constant 0 : i32
    %11 = arith.cmpi ne, %10, %c0_i32_9 : i32
    scf.if %11 {
      %c0_10 = arith.constant 0 : index
      %c0_11 = arith.constant 0 : index
      %12 = vector.load %arg8[%c0_10, %c0_11] : memref<64x128xf32, #tpu.memory_space<vmem>>, vector<64x128xf32>
      %c0_12 = arith.constant 0 : index
      %c0_13 = arith.constant 0 : index
      %13 = vector.load %arg4[%c0_12, %c0_13] : memref<1x128xf32, #tpu.memory_space<vmem>>, vector<1x128xf32>
      %14 = vector.broadcast %13 : vector<1x128xf32> to vector<64x128xf32>
      %15 = arith.mulf %12, %14 : vector<64x128xf32>
      %c0_14 = arith.constant 0 : index
      %c0_15 = arith.constant 0 : index
      %16 = vector.load %arg5[%c0_14, %c0_15] : memref<1x128xf32, #tpu.memory_space<vmem>>, vector<1x128xf32>
      %17 = vector.broadcast %16 : vector<1x128xf32> to vector<64x128xf32>
      %18 = arith.addf %15, %17 : vector<64x128xf32>
      %c0_16 = arith.constant 0 : index
      %c0_17 = arith.constant 0 : index
      %19 = vector.load %arg6[%c0_16, %c0_17] : memref<64x128xbf16, #tpu.memory_space<vmem>>, vector<64x128xbf16>
      %20 = arith.extf %19 : vector<64x128xbf16> to vector<64x128xf32>
      %21 = arith.addf %18, %20 : vector<64x128xf32>
      %cst_18 = arith.constant 0.000000e+00 : f32
      %22 = vector.broadcast %cst_18 : f32 to vector<64x128xf32>
      %23 = arith.maximumf %21, %22 : vector<64x128xf32>
      %c0_19 = arith.constant 0 : index
      %c0_20 = arith.constant 0 : index
      %24 = vector.load %arg7[%c0_19, %c0_20] : memref<64x128xf32, #tpu.memory_space<vmem>>, vector<64x128xf32>
      tpu.vector_store %arg7[%c0_19, %c0_20], %23 {strides = array<i32>} : memref<64x128xf32, #tpu.memory_space<vmem>>, vector<64x128xf32>,
    } else {
    }
    return
  }
  func.func @transform_0(%arg0: i32, %arg1: i32) -> (i32, i32) {
    %c0_i32 = arith.constant 0 : i32
    return %arg0, %arg1 : i32, i32
  }
  func.func @transform_1(%arg0: i32, %arg1: i32) -> (i32, i32) {
    %c0_i32 = arith.constant 0 : i32
    %c0_i32_0 = arith.constant 0 : i32
    return %arg1, %c0_i32 : i32, i32
  }
  func.func @transform_2(%arg0: i32, %arg1: i32) -> (i32, i32) {
    %c0_i32 = arith.constant 0 : i32
    %c0_i32_0 = arith.constant 0 : i32
    %c0_i32_1 = arith.constant 0 : i32
    return %c0_i32, %c0_i32_0 : i32, i32
  }
  func.func @transform_3(%arg0: i32, %arg1: i32) -> (i32, i32) {
    %c0_i32 = arith.constant 0 : i32
    %c0_i32_0 = arith.constant 0 : i32
    %c0_i32_1 = arith.constant 0 : i32
    return %c0_i32, %c0_i32_0 : i32, i32
  }
  func.func @transform_4(%arg0: i32, %arg1: i32) -> (i32, i32) {
    %c0_i32 = arith.constant 0 : i32
    %c0_i32_0 = arith.constant 0 : i32
    return %arg0, %c0_i32 : i32, i32
  }
  func.func @transform_5(%arg0: i32, %arg1: i32) -> (i32, i32) {
    %c0_i32 = arith.constant 0 : i32
    %c0_i32_0 = arith.constant 0 : i32
    return %arg0, %c0_i32 : i32, i32
  }
}

</mosaic_0001>

<llo_original>
// kernel: basic_block_nchw.4
$region0: #{basic_block_nchw.4}
  #allocation0 [shape = 'u32[]', space=smem, size = 0x4, offset = 0x4, fixed_abs, tag = 'smem constant byte address 0x4 - core index']
  #allocation1 [shape = 'u32[144,128]{1,0:T(1,128)}', space=vmem, size = 0x12000, scoped, tag = 'internal scratch']
  #allocation2 [shape = 'f32[64,128]{1,0:T(8,128)}', space=vmem, size = 0x8000, scoped, tag = 'scratch operand']
  %s0 = inlined_call_operand.vmem [shape: bf16[128,64], index: 0, kind: input, shape index: {}]
  %s1 = inlined_call_operand.vmem [shape: bf16[64,128], index: 1, kind: input, shape index: {}]
  %s2 = inlined_call_operand.vmem [shape: f32[1,128], index: 2, kind: input, shape index: {}]
  %s3 = inlined_call_operand.vmem [shape: f32[1,128], index: 3, kind: input, shape index: {}]
  %s4 = inlined_call_operand.vmem [shape: bf16[128,128], index: 4, kind: output, shape index: {}]
  %s5 = sld [smem:[#allocation0]]
  $region57: #{basic_block_nchw.4} parent=0
    _
  %s7 = ssub.s32 1, %s5
  %s8 = scalar_select 0, %s7, %s5
  loop: start=0, step=1, limit=4
  $region2: #{basic_block_nchw.4} parent=0 // loop_pre_header
    _
  $region3: #{basic_block_nchw.4} parent=0 // loop_header
    %s10 = sphi 0, %s14
    %p11 = scmp.ge.s32.totalorder %s10, 4
    %s17 = sphi 0, %s29
    %s18 = sphi 0, %s25
    %s19 = sphi 0, %s17
    %s20 = sphi 0, %s18
    %s21 = sphi 0, %s19
    %s22 = sphi 0, %s20
    %s34 = sphi 0, %s36
    %s37 = sphi 0, %s34
    %s38 = sphi 0, %s37
    %s54 = sphi 0, %s38
    %s60 = sphi 0, %s62
    %s63 = sphi 0, %s60
    %s64 = sphi 0, %s63
    %s80 = sphi 0, %s64
    %s84 = sphi 0, %s84
    %s86 = sphi 0, %s84
    %s87 = sphi 0, %s86
    %s101 = sphi 0, %s87
    %s105 = sphi 0, %s105
    %s107 = sphi 0, %s105
    %s108 = sphi 0, %s107
    %s122 = sphi 0, %s108
    %s128 = sphi 0, %s130
    %s131 = sphi 0, %s128
    %s132 = sphi 0, %s131
    %s148 = sphi 0, %s132
  $region4: #{basic_block_nchw.4} parent=0 // loop_header_branch
    %13 = sbr.rel (%p11) target = $region8
  $region5: #{basic_block_nchw.4} parent=0 // loop_body
    %s15 = ssub.s32 %s10, 1
    %s16 = ssub.s32 %s10, 2
    %s23 = sadd.s32 1, %s18
    %p24 = scmp.ge.s32.totalorder %s23, 1
    %s25 = scalar_select %p24, 0, %s23
    %s26 = sadd.s32 1, %s17
    %s27 = scalar_select %p24, %s26, %s17
    %p28 = scmp.ge.s32.totalorder %s27, 2
    %s29 = scalar_select %p28, 0, %s27
    %s30 = ssub.s32 %s17, %s29
    %s31 = ssub.s32 %s18, %s25
    %s32 = sor.u32 %s30, %s31
    %p33 = scmp.eq.s32.totalorder %s32, 0
    %s35 = sadd.s32 %s34, 1
    %s36 = scalar_select %p33, %s34, %s35
    %p39 = pneg %p33
    %p40 = scmp.eq.s32.totalorder %s10, 1
    %p41 = por %p39, %p40
    %p42 = scmp.ne.s32.totalorder %s34, %s37
    %p43 = scmp.eq.s32.totalorder %s10, 0
    %p44 = por %p42, %p43
    %p45 = scmp.ne.s32.totalorder %s34, %s37
    %p46 = scmp.eq.s32.totalorder %s15, 1
    %p47 = por %p45, %p46
    %p48 = scmp.ne.s32.totalorder %s37, %s38
    %p49 = scmp.eq.s32.totalorder %s15, 0
    %p50 = por %p48, %p49
    %p51 = scmp.ne.s32.totalorder %s37, %s38
    %p52 = scmp.eq.s32.totalorder %s16, 1
    %p53 = por %p51, %p52
    %p55 = scmp.ne.s32.totalorder %s38, %s54
    %p56 = scmp.eq.s32.totalorder %s16, 0
    %p57 = por %p55, %p56
    %s58 = ssub.s32 %s18, %s25
    %p59 = scmp.eq.s32.totalorder %s58, 0
    %s61 = sadd.s32 %s60, 1
    %s62 = scalar_select %p59, %s60, %s61
    %p65 = pneg %p59
    %p66 = scmp.eq.s32.totalorder %s10, 1
    %p67 = por %p65, %p66
    %p68 = scmp.ne.s32.totalorder %s60, %s63
    %p69 = scmp.eq.s32.totalorder %s10, 0
    %p70 = por %p68, %p69
    %p71 = scmp.ne.s32.totalorder %s60, %s63
    %p72 = scmp.eq.s32.totalorder %s15, 1
    %p73 = por %p71, %p72
    %p74 = scmp.ne.s32.totalorder %s63, %s64
    %p75 = scmp.eq.s32.totalorder %s15, 0
    %p76 = por %p74, %p75
    %p77 = scmp.ne.s32.totalorder %s63, %s64
    %p78 = scmp.eq.s32.totalorder %s16, 1
    %p79 = por %p77, %p78
    %p81 = scmp.ne.s32.totalorder %s64, %s80
    %p82 = scmp.eq.s32.totalorder %s16, 0
    %p83 = por %p81, %p82
    %s85 = sadd.s32 %s84, 1
    %p88 = scmp.eq.s32.totalorder %s10, 1
    %p89 = scmp.ne.s32.totalorder %s84, %s86
    %p90 = scmp.eq.s32.totalorder %s10, 0
    %p91 = por %p89, %p90
    %p92 = scmp.ne.s32.totalorder %s84, %s86
    %p93 = scmp.eq.s32.totalorder %s15, 1
    %p94 = por %p92, %p93
    %p95 = scmp.ne.s32.totalorder %s86, %s87
    %p96 = scmp.eq.s32.totalorder %s15, 0
    %p97 = por %p95, %p96
    %p98 = scmp.ne.s32.totalorder %s86, %s87
    %p99 = scmp.eq.s32.totalorder %s16, 1
    %p100 = por %p98, %p99
    %p102 = scmp.ne.s32.totalorder %s87, %s101
    %p103 = scmp.eq.s32.totalorder %s16, 0
    %p104 = por %p102, %p103
    %s106 = sadd.s32 %s105, 1
    %p109 = scmp.eq.s32.totalorder %s10, 1
    %p110 = scmp.ne.s32.totalorder %s105, %s107
    %p111 = scmp.eq.s32.totalorder %s10, 0
    %p112 = por %p110, %p111
    %p113 = scmp.ne.s32.totalorder %s105, %s107
    %p114 = scmp.eq.s32.totalorder %s15, 1
    %p115 = por %p113, %p114
    %p116 = scmp.ne.s32.totalorder %s107, %s108
    %p117 = scmp.eq.s32.totalorder %s15, 0
    %p118 = por %p116, %p117
    %p119 = scmp.ne.s32.totalorder %s107, %s108
    %p120 = scmp.eq.s32.totalorder %s16, 1
    %p121 = por %p119, %p120
    %p123 = scmp.ne.s32.totalorder %s108, %s122
    %p124 = scmp.eq.s32.totalorder %s16, 0
    %p125 = por %p123, %p124
    %s126 = ssub.s32 %s17, %s29
    %p127 = scmp.eq.s32.totalorder %s126, 0
    %s129 = sadd.s32 %s128, 1
    %s130 = scalar_select %p127, %s128, %s129
    %p133 = pneg %p127
    %p134 = scmp.eq.s32.totalorder %s10, 1
    %p135 = por %p133, %p134
    %p136 = scmp.ne.s32.totalorder %s128, %s131
    %p137 = scmp.eq.s32.totalorder %s10, 0
    %p138 = por %p136, %p137
    %p139 = scmp.ne.s32.totalorder %s128, %s131
    %p140 = scmp.eq.s32.totalorder %s15, 1
    %p141 = por %p139, %p140
    %p142 = scmp.ne.s32.totalorder %s131, %s132
    %p143 = scmp.eq.s32.totalorder %s15, 0
    %p144 = por %p142, %p143
    %p145 = scmp.ne.s32.totalorder %s131, %s132
    %p146 = scmp.eq.s32.totalorder %s16, 1
    %p147 = por %p145, %p146
    %p149 = scmp.ne.s32.totalorder %s132, %s148
    %p150 = scmp.eq.s32.totalorder %s16, 0
    %p151 = por %p149, %p150
    %p152 = scmp.le.s32.totalorder 1, %s10
    %p153 = scmp.lt.s32.totalorder %s10, 3
    %p154 = pnand %p152, %p153
    %p155 = pneg %p154
    // Predicated region
    $region9: #{basic_block_nchw.4} parent=5 // pred_check
      _
    $region10: #{basic_block_nchw.4} parent=5 // pred_check_branch
      %157 = sbr.rel (%p154) target = $region12
    $region11: #{basic_block_nchw.4} parent=5 // pred_region
      %s158 = ssub.s32 %s10, 1
      // Predicated region
      $region13: #{basic_block_nchw.4} parent=11 // pred_check
        %p159 = pneg %p76
      $region14: #{basic_block_nchw.4} parent=11 // pred_check_branch
        %161 = sbr.rel (%p159) target = $region16
      $region15: #{basic_block_nchw.4} parent=11 // pred_region
        %s162 = smul.u32 8, %s20
        %p163 = scmp.lt.s32.totalorder %s162, 7
        %s164 = scalar_select %p163, %s162, 7
        %s165 = smul.addr %s164, 4
        %s166 = scalar_lea.vmem %s1, %s165
        %s167 = smul.u32 8, %s20
      $region16: #{basic_block_nchw.4} parent=11 // pred_fallthru
        _
      // Predicated region
      $region17: #{basic_block_nchw.4} parent=11 // pred_check
        %p168 = pneg %p97
      $region18: #{basic_block_nchw.4} parent=11 // pred_check_branch
        %170 = sbr.rel (%p168) target = $region20
      $region19: #{basic_block_nchw.4} parent=11 // pred_region
        _
      $region20: #{basic_block_nchw.4} parent=11 // pred_fallthru
        _
      // Predicated region
      $region21: #{basic_block_nchw.4} parent=11 // pred_check
        %p171 = pneg %p118
      $region22: #{basic_block_nchw.4} parent=11 // pred_check_branch
        %173 = sbr.rel (%p171) target = $region24
      $region23: #{basic_block_nchw.4} parent=11 // pred_region
        _
      $region24: #{basic_block_nchw.4} parent=11 // pred_fallthru
        _
    $region12: #{basic_block_nchw.4} parent=5 // pred_fallthru
      _
    %p174 = scmp.lt.s32.totalorder %s10, 2
    // Predicated region
    $region25: #{basic_block_nchw.4} parent=5 // pred_check
      %p175 = pneg %p174
    $region26: #{basic_block_nchw.4} parent=5 // pred_check_branch
      %177 = sbr.rel (%p175) target = $region28
    $region27: #{basic_block_nchw.4} parent=5 // pred_region
      // Predicated region
      $region29: #{basic_block_nchw.4} parent=27 // pred_check
        %p178 = pneg %p44
      $region30: #{basic_block_nchw.4} parent=27 // pred_check_branch
        %180 = sbr.rel (%p178) target = $region32
      $region31: #{basic_block_nchw.4} parent=27 // pred_region
        %s181 = smul.u32 8, %s17
        %p182 = scmp.lt.s32.totalorder %s181, 15
        %s183 = scalar_select %p182, %s181, 15
        %p184 = scmp.lt.s32.totalorder %s18, 0
        %s185 = scalar_select %p184, %s18, 0
        %s186 = sadd.s32 %s185, %s183
        %s187 = smul.addr %s186, 4
        %s188 = scalar_lea.vmem %s0, %s187
        %s189 = smul.u32 8, %s17
      $region32: #{basic_block_nchw.4} parent=27 // pred_fallthru
        _
    $region28: #{basic_block_nchw.4} parent=5 // pred_fallthru
      _
    %p190 = scmp.le.s32.totalorder 1, %s10
    %p191 = scmp.lt.s32.totalorder %s10, 3
    %p192 = pnand %p190, %p191
    %p193 = pneg %p192
    // Predicated region
    $region33: #{basic_block_nchw.4} parent=5 // pred_check
      _
    $region34: #{basic_block_nchw.4} parent=5 // pred_check_branch
      %195 = sbr.rel (%p192) target = $region36
    $region35: #{basic_block_nchw.4} parent=5 // pred_region
      %s196 = ssub.s32 %s10, 1
      %s197 = smul.u32 8, %s19
      %p198 = scmp.lt.s32.totalorder %s197, 15
      %s199 = scalar_select %p198, %s197, 15
      %p200 = scmp.lt.s32.totalorder %s20, 0
      %s201 = scalar_select %p200, %s20, 0
      %s202 = sadd.s32 %s201, %s199
      %s203 = smul.addr %s202, 4
      %s204 = scalar_lea.vmem %s0, %s203
      %p205 = pneg %p50
      %p206 = pneg %p47
      %s207 = smul.u32 8, %s20
      %p208 = scmp.lt.s32.totalorder %s207, 7
      %s209 = scalar_select %p208, %s207, 7
      %s210 = smul.addr %s209, 4
      %s211 = scalar_lea.vmem %s1, %s210
      %p212 = pneg %p76
      %p213 = pneg %p73
      %p214 = pneg %p97
      %p215 = pneg %p94
      %p216 = pneg %p118
      %p217 = pneg %p115
      %p218 = pneg %p144
      %p219 = pneg %p141
      %s220 = smul.u32 8, %s19
      %p221 = scmp.lt.s32.totalorder %s220, 15
      %s222 = scalar_select %p221, %s220, 15
      %s223 = smul.addr %s222, 4
      %s224 = scalar_lea.vmem %s4, %s223
      %s225 = smul.u32 8, %s19
      %p226 = scmp.lt.s32.totalorder %s225, 15
      %s227 = scalar_select %p226, %s225, 15
      %p228 = scmp.lt.s32.totalorder %s20, 0
      %s229 = scalar_select %p228, %s20, 0
      %s230 = sadd.s32 %s229, %s227
      %s231 = smul.addr %s230, 4
      %s232 = scalar_lea.vmem %s0, %s231
      %s233 = smul.u32 8, %s19
      %s234 = smul.u32 8, %s20
      %p235 = scmp.lt.s32.totalorder %s234, 7
      %s236 = scalar_select %p235, %s234, 7
      %s237 = smul.addr %s236, 4
      %s238 = scalar_lea.vmem %s1, %s237
      %s239 = smul.u32 8, %s20
      %s240 = smul.u32 8, %s19
      %p241 = scmp.lt.s32.totalorder %s240, 15
      %s242 = scalar_select %p241, %s240, 15
      %s243 = smul.addr %s242, 4
      %s244 = scalar_lea.vmem %s4, %s243
      %s245 = smul.u32 8, %s19
      %p247 = scmp.eq.s32.totalorder %s20, 0
      // Predicated region
      $region37: #{basic_block_nchw.4} parent=35 // pred_check
        %p248 = pneg %p247
      $region38: #{basic_block_nchw.4} parent=35 // pred_check_branch
        %250 = sbr.rel (%p248) target = $region40
      $region39: #{basic_block_nchw.4} parent=35 // pred_region
        %251 = vst [vmem:[#allocation2] sm:$0xff] 0.0
        %252 = vst [vmem:[#allocation2 + $0x8] sm:$0xff] 0.0
        %253 = vst [vmem:[#allocation2 + $0x10] sm:$0xff] 0.0
        %254 = vst [vmem:[#allocation2 + $0x18] sm:$0xff] 0.0
        %255 = vst [vmem:[#allocation2 + $0x20] sm:$0xff] 0.0
        %256 = vst [vmem:[#allocation2 + $0x28] sm:$0xff] 0.0
        %257 = vst [vmem:[#allocation2 + $0x30] sm:$0xff] 0.0
        %258 = vst [vmem:[#allocation2 + $0x38] sm:$0xff] 0.0
      $region40: #{basic_block_nchw.4} parent=35 // pred_fallthru
        _
      %v259 = vld [vmem:[#allocation2] sm:$0xff]
      %v260 = vld [vmem:[#allocation2 + $0x8] sm:$0xff]
      %v261 = vld [vmem:[#allocation2 + $0x10] sm:$0xff]
      %v262 = vld [vmem:[#allocation2 + $0x18] sm:$0xff]
      %v263 = vld [vmem:[#allocation2 + $0x20] sm:$0xff]
      %v264 = vld [vmem:[#allocation2 + $0x28] sm:$0xff]
      %v265 = vld [vmem:[#allocation2 + $0x30] sm:$0xff]
      %v266 = vld [vmem:[#allocation2 + $0x38] sm:$0xff]
      %v267 = vld [vmem:[%s232] sm:$0xf]
      %v268 = vld [vmem:[%s232 + $0x4] sm:$0xf]
      %v269 = vld [vmem:[%s232 + $0x8] sm:$0xf]
      %v270 = vld [vmem:[%s232 + $0xc] sm:$0xf]
      %v271 = vld [vmem:[%s232 + $0x10] sm:$0xf]
      %v272 = vld [vmem:[%s232 + $0x14] sm:$0xf]
      %v273 = vld [vmem:[%s232 + $0x18] sm:$0xf]
      %v274 = vld [vmem:[%s232 + $0x1c] sm:$0xf]
      %v275 = vld [vmem:[%s238] sm:$0xf]
      %v276 = vld [vmem:[%s238 + $0x4] sm:$0xf]
      %v277 = vld [vmem:[%s238 + $0x8] sm:$0xf]
      %v278 = vld [vmem:[%s238 + $0xc] sm:$0xf]
      %v279 = vld [vmem:[%s238 + $0x10] sm:$0xf]
      %v280 = vld [vmem:[%s238 + $0x14] sm:$0xf]
      %v281 = vld [vmem:[%s238 + $0x18] sm:$0xf]
      %v282 = vld [vmem:[%s238 + $0x1c] sm:$0xf]
      %v291 = vunpack.c.l.b16 %v267
      %v292 = vunpack.c.l.b16 %v268
      %v293 = vunpack.c.l.b16 %v269
      %v294 = vunpack.c.l.b16 %v270
      %v295 = vunpack.c.l.b16 %v271
      %v296 = vunpack.c.l.b16 %v272
      %v297 = vunpack.c.l.b16 %v273
      %v298 = vunpack.c.l.b16 %v274
      %v299 = vpack.c.b16 %v292, %v291
      %v300 = vpack.c.b16 %v294, %v293
      %v301 = vpack.c.b16 %v296, %v295
      %v302 = vpack.c.b16 %v298, %v297
      %v311 = vunpack.c.l.b16 %v275
      %v312 = vunpack.c.l.b16 %v276
      %v313 = vunpack.c.l.b16 %v277
      %v314 = vunpack.c.l.b16 %v278
      %v315 = vunpack.c.l.b16 %v279
      %v316 = vunpack.c.l.b16 %v280
      %v317 = vunpack.c.l.b16 %v281
      %v318 = vunpack.c.l.b16 %v282
      %v319 = vpack.c.b16 %v312, %v311
      %v320 = vpack.c.b16 %v314, %v313
      %v321 = vpack.c.b16 %v316, %v315
      %v322 = vpack.c.b16 %v318, %v317
      %vm327 = vcmask 523264
      %v329 = vsel %vm327, %v299, 0
      %v332 = vsel %vm327, %v300, 0
      %v335 = vsel %vm327, %v301, 0
      %v338 = vsel %vm327, %v302, 0
      %340 = vmatprep.subr.bf16.mxu0 0
      %341 = vmatpush1.bf16.msra.mxu0 0
      %342 = vmatprep.subr.bf16.mxu0 0
      %343 = vmatpush1.bf16.msra.mxu0 0
      %344 = vmatprep.subr.bf16.mxu0 0
      %345 = vmatpush1.bf16.msra.mxu0 0
      %346 = vmatprep.subr.bf16.mxu0 0
      %347 = vmatpush1.bf16.msra.mxu0 0
      %348 = vmatprep.subr.bf16.mxu0 0
      %349 = vmatpush1.bf16.msra.mxu0 %v322
      %350 = vmatprep.subr.bf16.mxu0 0
      %351 = vmatpush1.bf16.msra.mxu0 %v321
      %352 = vmatprep.subr.bf16.mxu0 0
      %353 = vmatpush1.bf16.msra.mxu0 %v320
      %354 = vmatprep.subr.bf16.mxu0 0
      %355 = vmatpush1.bf16.msra.mxu0 %v319
      %356 = vmatprep.subr.bf16.mxu0 0
      %357 = vmatpush2.bf16.msra.mxu0 0
      %358 = vmatprep.subr.bf16.mxu0 0
      %359 = vmatpush2.bf16.msra.mxu0 0
      %360 = vmatprep.subr.bf16.mxu0 0
      %361 = vmatpush2.bf16.msra.mxu0 0
      %362 = vmatprep.subr.bf16.mxu0 0
      %363 = vmatpush2.bf16.msra.mxu0 0
      %364 = vmatprep.subr.bf16.mxu0 0
      %365 = vmatpush2.bf16.msra.mxu0 0
      %366 = vmatprep.subr.bf16.mxu0 0
      %367 = vmatpush2.bf16.msra.mxu0 0
      %368 = vmatprep.subr.bf16.mxu0 0
      %369 = vmatpush2.bf16.msra.mxu0 0
      %370 = vmatprep.subr.bf16.mxu0 0
      %371 = vmatpush2.bf16.msra.mxu0 0
      %372 = vmatprep.mubr.bf16.mxu0 0
      %373 = vmatmul.mubr.bf16.gmra.mxu0 %v329
      %v374 = vpop.f32.mrf.mxu0
      %v375 = vadd.f32 0.0, %v374
      %v376 = vpop.f32.mrf.mxu0
      %v377 = vpop.f32.mrf.mxu0
      %v378 = vadd.f32 0.0, %v377
      %v379 = vpop.f32.mrf.mxu0
      %380 = vmatprep.mubr.bf16.mxu0 0
      %381 = vmatmul.mubr.bf16.gmra.mxu0 %v332
      %v382 = vpop.f32.mrf.mxu0
      %v383 = vadd.f32 0.0, %v382
      %v384 = vpop.f32.mrf.mxu0
      %v385 = vpop.f32.mrf.mxu0
      %v386 = vadd.f32 0.0, %v385
      %v387 = vpop.f32.mrf.mxu0
      %388 = vmatprep.mubr.bf16.mxu0 0
      %389 = vmatmul.mubr.bf16.gmra.mxu0 %v335
      %v390 = vpop.f32.mrf.mxu0
      %v391 = vadd.f32 0.0, %v390
      %v392 = vpop.f32.mrf.mxu0
      %v393 = vpop.f32.mrf.mxu0
      %v394 = vadd.f32 0.0, %v393
      %v395 = vpop.f32.mrf.mxu0
      %396 = vmatprep.mubr.bf16.mxu0 0
      %397 = vmatmul.mubr.bf16.gmra.mxu0 %v338
      %v398 = vpop.f32.mrf.mxu0
      %v399 = vadd.f32 0.0, %v398
      %v400 = vpop.f32.mrf.mxu0
      %v401 = vpop.f32.mrf.mxu0
      %v402 = vadd.f32 0.0, %v401
      %v403 = vpop.f32.mrf.mxu0
      %404 = vdwg.mxu0
      %v405 = vadd.f32 %v259, %v375
      %v406 = vadd.f32 %v260, %v378
      %v407 = vadd.f32 %v261, %v383
      %v408 = vadd.f32 %v262, %v386
      %v409 = vadd.f32 %v263, %v391
      %v410 = vadd.f32 %v264, %v394
      %v411 = vadd.f32 %v265, %v399
      %v412 = vadd.f32 %v266, %v402
      %413 = vst [vmem:[#allocation2] sm:$0xff] %v405
      %414 = vst [vmem:[#allocation2 + $0x8] sm:$0xff] %v406
      %415 = vst [vmem:[#allocation2 + $0x10] sm:$0xff] %v407
      %416 = vst [vmem:[#allocation2 + $0x18] sm:$0xff] %v408
      %417 = vst [vmem:[#allocation2 + $0x20] sm:$0xff] %v409
      %418 = vst [vmem:[#allocation2 + $0x28] sm:$0xff] %v410
      %419 = vst [vmem:[#allocation2 + $0x30] sm:$0xff] %v411
      %420 = vst [vmem:[#allocation2 + $0x38] sm:$0xff] %v412
      // Predicated region
      $region41: #{basic_block_nchw.4} parent=35 // pred_check
        %p421 = pneg %p247
      $region42: #{basic_block_nchw.4} parent=35 // pred_check_branch
        %423 = sbr.rel (%p421) target = $region44
      $region43: #{basic_block_nchw.4} parent=35 // pred_region
        %v424 = vld [vmem:[#allocation2] sm:$0xff]
        %v425 = vld [vmem:[#allocation2 + $0x8] sm:$0xff]
        %v426 = vld [vmem:[#allocation2 + $0x10] sm:$0xff]
        %v427 = vld [vmem:[#allocation2 + $0x18] sm:$0xff]
        %v428 = vld [vmem:[#allocation2 + $0x20] sm:$0xff]
        %v429 = vld [vmem:[#allocation2 + $0x28] sm:$0xff]
        %v430 = vld [vmem:[#allocation2 + $0x30] sm:$0xff]
        %v431 = vld [vmem:[#allocation2 + $0x38] sm:$0xff]
        %v432 = vld [vmem:[%s2] sm:$0x1]
        %v434 = vlaneseq
        %v435 = vshrl.u32 %v434, 7
        %v436 = vsub.s32 0, %v435
        %v437 = vrot.slane %v432, %v436
        %v439 = vmul.f32 %v424, %v437
        %v440 = vmul.f32 %v425, %v437
        %v441 = vmul.f32 %v426, %v437
        %v442 = vmul.f32 %v427, %v437
        %v443 = vmul.f32 %v428, %v437
        %v444 = vmul.f32 %v429, %v437
        %v445 = vmul.f32 %v430, %v437
        %v446 = vmul.f32 %v431, %v437
        %v447 = vld [vmem:[%s3] sm:$0x1]
        %v449 = vlaneseq
        %v450 = vshrl.u32 %v449, 7
        %v451 = vsub.s32 0, %v450
        %v452 = vrot.slane %v447, %v451
        %v454 = vadd.f32 %v439, %v452
        %v455 = vadd.f32 %v440, %v452
        %v456 = vadd.f32 %v441, %v452
        %v457 = vadd.f32 %v442, %v452
        %v458 = vadd.f32 %v443, %v452
        %v459 = vadd.f32 %v444, %v452
        %v460 = vadd.f32 %v445, %v452
        %v461 = vadd.f32 %v446, %v452
        %v462 = vpack.c.bf16 %v455, %v454
        %v463 = vpack.c.bf16 %v457, %v456
        %v464 = vpack.c.bf16 %v459, %v458
        %v465 = vpack.c.bf16 %v461, %v460
        %v470 = vunpack.c.l.b16 %v462
        %v471 = vunpack.c.h.b16 %v462
        %v472 = vunpack.c.l.b16 %v463
        %v473 = vunpack.c.h.b16 %v463
        %v474 = vunpack.c.l.b16 %v464
        %v475 = vunpack.c.h.b16 %v464
        %v476 = vunpack.c.l.b16 %v465
        %v477 = vunpack.c.h.b16 %v465
        %v478 = vpack.c.b16 %v470, %v470
        %v479 = vpack.c.b16 %v471, %v471
        %v480 = vpack.c.b16 %v472, %v472
        %v481 = vpack.c.b16 %v473, %v473
        %v482 = vpack.c.b16 %v474, %v474
        %v483 = vpack.c.b16 %v475, %v475
        %v484 = vpack.c.b16 %v476, %v476
        %v485 = vpack.c.b16 %v477, %v477
        %494 = vst [vmem:[%s244] sm:$0xf] %v478
        %495 = vst [vmem:[%s244 + $0x4] sm:$0xf] %v479
        %496 = vst [vmem:[%s244 + $0x8] sm:$0xf] %v480
        %497 = vst [vmem:[%s244 + $0xc] sm:$0xf] %v481
        %498 = vst [vmem:[%s244 + $0x10] sm:$0xf] %v482
        %499 = vst [vmem:[%s244 + $0x14] sm:$0xf] %v483
        %500 = vst [vmem:[%s244 + $0x18] sm:$0xf] %v484
        %501 = vst [vmem:[%s244 + $0x1c] sm:$0xf] %v485
      $region44: #{basic_block_nchw.4} parent=35 // pred_fallthru
        _
      %s502 = smul.u32 8, %s19
      %p503 = scmp.lt.s32.totalorder %s502, 15
      %s504 = scalar_select %p503, %s502, 15
      %s505 = smul.addr %s504, 4
      %s506 = scalar_lea.vmem %s4, %s505
      // Predicated region
      $region45: #{basic_block_nchw.4} parent=35 // pred_check
        %p507 = pneg %p141
      $region46: #{basic_block_nchw.4} parent=35 // pred_check_branch
        %509 = sbr.rel (%p507) target = $region48
      $region47: #{basic_block_nchw.4} parent=35 // pred_region
        %s510 = smul.u32 8, %s19
      $region48: #{basic_block_nchw.4} parent=35 // pred_fallthru
        _
    $region36: #{basic_block_nchw.4} parent=5 // pred_fallthru
      _
    %p511 = scmp.le.s32.totalorder 2, %s10
    // Predicated region
    $region49: #{basic_block_nchw.4} parent=5 // pred_check
      %p512 = pneg %p511
    $region50: #{basic_block_nchw.4} parent=5 // pred_check_branch
      %514 = sbr.rel (%p512) target = $region52
    $region51: #{basic_block_nchw.4} parent=5 // pred_region
      %s515 = ssub.s32 %s10, 2
      // Predicated region
      $region53: #{basic_block_nchw.4} parent=51 // pred_check
        %p516 = pneg %p147
      $region54: #{basic_block_nchw.4} parent=51 // pred_check_branch
        %518 = sbr.rel (%p516) target = $region56
      $region55: #{basic_block_nchw.4} parent=51 // pred_region
        %s519 = smul.u32 8, %s21
        %p520 = scmp.lt.s32.totalorder %s519, 15
        %s521 = scalar_select %p520, %s519, 15
        %s522 = smul.addr %s521, 4
        %s523 = scalar_lea.vmem %s4, %s522
      $region56: #{basic_block_nchw.4} parent=51 // pred_fallthru
        _
    $region52: #{basic_block_nchw.4} parent=5 // pred_fallthru
      _
  $region6: #{basic_block_nchw.4} parent=0 // loop_footer
    %s14 = sadd.s32 1, %s10
  $region7: #{basic_block_nchw.4} parent=0 // loop_footer_branch
    %9 = sbr.rel target = $region3
  $region8: #{basic_block_nchw.4} parent=0 // loop_exit
    _

// kernel: basic_block_nchw.3
$region0: #{basic_block_nchw.3}
  #allocation0 [shape = 'u32[]', space=smem, size = 0x4, offset = 0x4, fixed_abs, tag = 'smem constant byte address 0x4 - core index']
  #allocation1 [shape = 'u32[144,128]{1,0:T(1,128)}', space=vmem, size = 0x12000, scoped, tag = 'internal scratch']
  #allocation2 [shape = 'f32[64,128]{1,0:T(8,128)}', space=vmem, size = 0x8000, scoped, tag = 'scratch operand']
  %s0 = inlined_call_operand.vmem [shape: bf16[128,576], index: 0, kind: input, shape index: {}]
  %s1 = inlined_call_operand.vmem [shape: bf16[576,128], index: 1, kind: input, shape index: {}]
  %s2 = inlined_call_operand.vmem [shape: f32[1,128], index: 2, kind: input, shape index: {}]
  %s3 = inlined_call_operand.vmem [shape: f32[1,128], index: 3, kind: input, shape index: {}]
  %s4 = inlined_call_operand.vmem [shape: bf16[128,128], index: 4, kind: output, shape index: {}]
  %s5 = sld [smem:[#allocation0]]
  $region57: #{basic_block_nchw.3} parent=0
    _
  %s7 = ssub.s32 1, %s5
  %s8 = scalar_select 0, %s7, %s5
  loop: start=0, step=1, limit=4
  $region2: #{basic_block_nchw.3} parent=0 // loop_pre_header
    _
  $region3: #{basic_block_nchw.3} parent=0 // loop_header
    %s10 = sphi 0, %s14
    %p11 = scmp.ge.s32.totalorder %s10, 4
    %s17 = sphi 0, %s29
    %s18 = sphi 0, %s25
    %s19 = sphi 0, %s17
    %s20 = sphi 0, %s18
    %s21 = sphi 0, %s19
    %s22 = sphi 0, %s20
    %s34 = sphi 0, %s36
    %s37 = sphi 0, %s34
    %s38 = sphi 0, %s37
    %s54 = sphi 0, %s38
    %s60 = sphi 0, %s62
    %s63 = sphi 0, %s60
    %s64 = sphi 0, %s63
    %s80 = sphi 0, %s64
    %s84 = sphi 0, %s84
    %s86 = sphi 0, %s84
    %s87 = sphi 0, %s86
    %s101 = sphi 0, %s87
    %s105 = sphi 0, %s105
    %s107 = sphi 0, %s105
    %s108 = sphi 0, %s107
    %s122 = sphi 0, %s108
    %s128 = sphi 0, %s130
    %s131 = sphi 0, %s128
    %s132 = sphi 0, %s131
    %s148 = sphi 0, %s132
  $region4: #{basic_block_nchw.3} parent=0 // loop_header_branch
    %13 = sbr.rel (%p11) target = $region8
  $region5: #{basic_block_nchw.3} parent=0 // loop_body
    %s15 = ssub.s32 %s10, 1
    %s16 = ssub.s32 %s10, 2
    %s23 = sadd.s32 1, %s18
    %p24 = scmp.ge.s32.totalorder %s23, 1
    %s25 = scalar_select %p24, 0, %s23
    %s26 = sadd.s32 1, %s17
    %s27 = scalar_select %p24, %s26, %s17
    %p28 = scmp.ge.s32.totalorder %s27, 2
    %s29 = scalar_select %p28, 0, %s27
    %s30 = ssub.s32 %s17, %s29
    %s31 = ssub.s32 %s18, %s25
    %s32 = sor.u32 %s30, %s31
    %p33 = scmp.eq.s32.totalorder %s32, 0
    %s35 = sadd.s32 %s34, 1
    %s36 = scalar_select %p33, %s34, %s35
    %p39 = pneg %p33
    %p40 = scmp.eq.s32.totalorder %s10, 1
    %p41 = por %p39, %p40
    %p42 = scmp.ne.s32.totalorder %s34, %s37
    %p43 = scmp.eq.s32.totalorder %s10, 0
    %p44 = por %p42, %p43
    %p45 = scmp.ne.s32.totalorder %s34, %s37
    %p46 = scmp.eq.s32.totalorder %s15, 1
    %p47 = por %p45, %p46
    %p48 = scmp.ne.s32.totalorder %s37, %s38
    %p49 = scmp.eq.s32.totalorder %s15, 0
    %p50 = por %p48, %p49
    %p51 = scmp.ne.s32.totalorder %s37, %s38
    %p52 = scmp.eq.s32.totalorder %s16, 1
    %p53 = por %p51, %p52
    %p55 = scmp.ne.s32.totalorder %s38, %s54
    %p56 = scmp.eq.s32.totalorder %s16, 0
    %p57 = por %p55, %p56
    %s58 = ssub.s32 %s18, %s25
    %p59 = scmp.eq.s32.totalorder %s58, 0
    %s61 = sadd.s32 %s60, 1
    %s62 = scalar_select %p59, %s60, %s61
    %p65 = pneg %p59
    %p66 = scmp.eq.s32.totalorder %s10, 1
    %p67 = por %p65, %p66
    %p68 = scmp.ne.s32.totalorder %s60, %s63
    %p69 = scmp.eq.s32.totalorder %s10, 0
    %p70 = por %p68, %p69
    %p71 = scmp.ne.s32.totalorder %s60, %s63
    %p72 = scmp.eq.s32.totalorder %s15, 1
    %p73 = por %p71, %p72
    %p74 = scmp.ne.s32.totalorder %s63, %s64
    %p75 = scmp.eq.s32.totalorder %s15, 0
    %p76 = por %p74, %p75
    %p77 = scmp.ne.s32.totalorder %s63, %s64
    %p78 = scmp.eq.s32.totalorder %s16, 1
    %p79 = por %p77, %p78
    %p81 = scmp.ne.s32.totalorder %s64, %s80
    %p82 = scmp.eq.s32.totalorder %s16, 0
    %p83 = por %p81, %p82
    %s85 = sadd.s32 %s84, 1
    %p88 = scmp.eq.s32.totalorder %s10, 1
    %p89 = scmp.ne.s32.totalorder %s84, %s86
    %p90 = scmp.eq.s32.totalorder %s10, 0
    %p91 = por %p89, %p90
    %p92 = scmp.ne.s32.totalorder %s84, %s86
    %p93 = scmp.eq.s32.totalorder %s15, 1
    %p94 = por %p92, %p93
    %p95 = scmp.ne.s32.totalorder %s86, %s87
    %p96 = scmp.eq.s32.totalorder %s15, 0
    %p97 = por %p95, %p96
    %p98 = scmp.ne.s32.totalorder %s86, %s87
    %p99 = scmp.eq.s32.totalorder %s16, 1
    %p100 = por %p98, %p99
    %p102 = scmp.ne.s32.totalorder %s87, %s101
    %p103 = scmp.eq.s32.totalorder %s16, 0
    %p104 = por %p102, %p103
    %s106 = sadd.s32 %s105, 1
    %p109 = scmp.eq.s32.totalorder %s10, 1
    %p110 = scmp.ne.s32.totalorder %s105, %s107
    %p111 = scmp.eq.s32.totalorder %s10, 0
    %p112 = por %p110, %p111
    %p113 = scmp.ne.s32.totalorder %s105, %s107
    %p114 = scmp.eq.s32.totalorder %s15, 1
    %p115 = por %p113, %p114
    %p116 = scmp.ne.s32.totalorder %s107, %s108
    %p117 = scmp.eq.s32.totalorder %s15, 0
    %p118 = por %p116, %p117
    %p119 = scmp.ne.s32.totalorder %s107, %s108
    %p120 = scmp.eq.s32.totalorder %s16, 1
    %p121 = por %p119, %p120
    %p123 = scmp.ne.s32.totalorder %s108, %s122
    %p124 = scmp.eq.s32.totalorder %s16, 0
    %p125 = por %p123, %p124
    %s126 = ssub.s32 %s17, %s29
    %p127 = scmp.eq.s32.totalorder %s126, 0
    %s129 = sadd.s32 %s128, 1
    %s130 = scalar_select %p127, %s128, %s129
    %p133 = pneg %p127
    %p134 = scmp.eq.s32.totalorder %s10, 1
    %p135 = por %p133, %p134
    %p136 = scmp.ne.s32.totalorder %s128, %s131
    %p137 = scmp.eq.s32.totalorder %s10, 0
    %p138 = por %p136, %p137
    %p139 = scmp.ne.s32.totalorder %s128, %s131
    %p140 = scmp.eq.s32.totalorder %s15, 1
    %p141 = por %p139, %p140
    %p142 = scmp.ne.s32.totalorder %s131, %s132
    %p143 = scmp.eq.s32.totalorder %s15, 0
    %p144 = por %p142, %p143
    %p145 = scmp.ne.s32.totalorder %s131, %s132
    %p146 = scmp.eq.s32.totalorder %s16, 1
    %p147 = por %p145, %p146
    %p149 = scmp.ne.s32.totalorder %s132, %s148
    %p150 = scmp.eq.s32.totalorder %s16, 0
    %p151 = por %p149, %p150
    %p152 = scmp.le.s32.totalorder 1, %s10
    %p153 = scmp.lt.s32.totalorder %s10, 3
    %p154 = pnand %p152, %p153
    %p155 = pneg %p154
    // Predicated region
    $region9: #{basic_block_nchw.3} parent=5 // pred_check
      _
    $region10: #{basic_block_nchw.3} parent=5 // pred_check_branch
      %157 = sbr.rel (%p154) target = $region12
    $region11: #{basic_block_nchw.3} parent=5 // pred_region
      %s158 = ssub.s32 %s10, 1
      // Predicated region
      $region13: #{basic_block_nchw.3} parent=11 // pred_check
        %p159 = pneg %p76
      $region14: #{basic_block_nchw.3} parent=11 // pred_check_branch
        %161 = sbr.rel (%p159) target = $region16
      $region15: #{basic_block_nchw.3} parent=11 // pred_region
        %s162 = smul.u32 72, %s20
        %p163 = scmp.lt.s32.totalorder %s162, 71
        %s164 = scalar_select %p163, %s162, 71
        %s165 = smul.addr %s164, 4
        %s166 = scalar_lea.vmem %s1, %s165
        %s167 = smul.u32 72, %s20
      $region16: #{basic_block_nchw.3} parent=11 // pred_fallthru
        _
      // Predicated region
      $region17: #{basic_block_nchw.3} parent=11 // pred_check
        %p168 = pneg %p97
      $region18: #{basic_block_nchw.3} parent=11 // pred_check_branch
        %170 = sbr.rel (%p168) target = $region20
      $region19: #{basic_block_nchw.3} parent=11 // pred_region
        _
      $region20: #{basic_block_nchw.3} parent=11 // pred_fallthru
        _
      // Predicated region
      $region21: #{basic_block_nchw.3} parent=11 // pred_check
        %p171 = pneg %p118
      $region22: #{basic_block_nchw.3} parent=11 // pred_check_branch
        %173 = sbr.rel (%p171) target = $region24
      $region23: #{basic_block_nchw.3} parent=11 // pred_region
        _
      $region24: #{basic_block_nchw.3} parent=11 // pred_fallthru
        _
    $region12: #{basic_block_nchw.3} parent=5 // pred_fallthru
      _
    %p174 = scmp.lt.s32.totalorder %s10, 2
    // Predicated region
    $region25: #{basic_block_nchw.3} parent=5 // pred_check
      %p175 = pneg %p174
    $region26: #{basic_block_nchw.3} parent=5 // pred_check_branch
      %177 = sbr.rel (%p175) target = $region28
    $region27: #{basic_block_nchw.3} parent=5 // pred_region
      // Predicated region
      $region29: #{basic_block_nchw.3} parent=27 // pred_check
        %p178 = pneg %p44
      $region30: #{basic_block_nchw.3} parent=27 // pred_check_branch
        %180 = sbr.rel (%p178) target = $region32
      $region31: #{basic_block_nchw.3} parent=27 // pred_region
        %s181 = smul.u32 8, %s17
        %s182 = smul.u32 5, %s18
        %p183 = scmp.lt.s32.totalorder %s181, 15
        %s184 = scalar_select %p183, %s181, 15
        %p185 = scmp.lt.s32.totalorder %s182, 4
        %s186 = scalar_select %p185, %s182, 4
        %s187 = smul.addr %s184, 5
        %s188 = sadd.s32 %s186, %s187
        %s189 = smul.addr %s188, 4
        %s190 = scalar_lea.vmem %s0, %s189
        %s191 = smul.u32 8, %s17
        %s192 = smul.u32 5, %s18
      $region32: #{basic_block_nchw.3} parent=27 // pred_fallthru
        _
    $region28: #{basic_block_nchw.3} parent=5 // pred_fallthru
      _
    %p193 = scmp.le.s32.totalorder 1, %s10
    %p194 = scmp.lt.s32.totalorder %s10, 3
    %p195 = pnand %p193, %p194
    %p196 = pneg %p195
    // Predicated region
    $region33: #{basic_block_nchw.3} parent=5 // pred_check
      _
    $region34: #{basic_block_nchw.3} parent=5 // pred_check_branch
      %198 = sbr.rel (%p195) target = $region36
    $region35: #{basic_block_nchw.3} parent=5 // pred_region
      %s199 = ssub.s32 %s10, 1
      %s200 = smul.u32 8, %s19
      %s201 = smul.u32 5, %s20
      %p202 = scmp.lt.s32.totalorder %s200, 15
      %s203 = scalar_select %p202, %s200, 15
      %p204 = scmp.lt.s32.totalorder %s201, 4
      %s205 = scalar_select %p204, %s201, 4
      %s206 = smul.addr %s203, 5
      %s207 = sadd.s32 %s205, %s206
      %s208 = smul.addr %s207, 4
      %s209 = scalar_lea.vmem %s0, %s208
      %p210 = pneg %p50
      %p211 = pneg %p47
      %s212 = smul.u32 72, %s20
      %p213 = scmp.lt.s32.totalorder %s212, 71
      %s214 = scalar_select %p213, %s212, 71
      %s215 = smul.addr %s214, 4
      %s216 = scalar_lea.vmem %s1, %s215
      %p217 = pneg %p76
      %p218 = pneg %p73
      %p219 = pneg %p97
      %p220 = pneg %p94
      %p221 = pneg %p118
      %p222 = pneg %p115
      %p223 = pneg %p144
      %p224 = pneg %p141
      %s225 = smul.u32 8, %s19
      %p226 = scmp.lt.s32.totalorder %s225, 15
      %s227 = scalar_select %p226, %s225, 15
      %s228 = smul.addr %s227, 4
      %s229 = scalar_lea.vmem %s4, %s228
      %s230 = smul.u32 8, %s19
      %s231 = smul.u32 5, %s20
      %p232 = scmp.lt.s32.totalorder %s230, 15
      %s233 = scalar_select %p232, %s230, 15
      %p234 = scmp.lt.s32.totalorder %s231, 4
      %s235 = scalar_select %p234, %s231, 4
      %s236 = smul.addr %s233, 5
      %s237 = sadd.s32 %s235, %s236
      %s238 = smul.addr %s237, 4
      %s239 = scalar_lea.vmem %s0, %s238
      %s240 = smul.u32 8, %s19
      %s241 = smul.u32 5, %s20
      %s242 = smul.u32 72, %s20
      %p243 = scmp.lt.s32.totalorder %s242, 71
      %s244 = scalar_select %p243, %s242, 71
      %s245 = smul.addr %s244, 4
      %s246 = scalar_lea.vmem %s1, %s245
      %s247 = smul.u32 72, %s20
      %s248 = smul.u32 8, %s19
      %p249 = scmp.lt.s32.totalorder %s248, 15
      %s250 = scalar_select %p249, %s248, 15
      %s251 = smul.addr %s250, 4
      %s252 = scalar_lea.vmem %s4, %s251
      %s253 = smul.u32 8, %s19
      %p255 = scmp.eq.s32.totalorder %s20, 0
      // Predicated region
      $region37: #{basic_block_nchw.3} parent=35 // pred_check
        %p256 = pneg %p255
      $region38: #{basic_block_nchw.3} parent=35 // pred_check_branch
        %258 = sbr.rel (%p256) target = $region40
      $region39: #{basic_block_nchw.3} parent=35 // pred_region
        %259 = vst [vmem:[#allocation2] sm:$0xff] 0.0
        %260 = vst [vmem:[#allocation2 + $0x8] sm:$0xff] 0.0
        %261 = vst [vmem:[#allocation2 + $0x10] sm:$0xff] 0.0
        %262 = vst [vmem:[#allocation2 + $0x18] sm:$0xff] 0.0
        %263 = vst [vmem:[#allocation2 + $0x20] sm:$0xff] 0.0
        %264 = vst [vmem:[#allocation2 + $0x28] sm:$0xff] 0.0
        %265 = vst [vmem:[#allocation2 + $0x30] sm:$0xff] 0.0
        %266 = vst [vmem:[#allocation2 + $0x38] sm:$0xff] 0.0
      $region40: #{basic_block_nchw.3} parent=35 // pred_fallthru
        _
      %v267 = vld [vmem:[#allocation2] sm:$0xff]
      %v268 = vld [vmem:[#allocation2 + $0x8] sm:$0xff]
      %v269 = vld [vmem:[#allocation2 + $0x10] sm:$0xff]
      %v270 = vld [vmem:[#allocation2 + $0x18] sm:$0xff]
      %v271 = vld [vmem:[#allocation2 + $0x20] sm:$0xff]
      %v272 = vld [vmem:[#allocation2 + $0x28] sm:$0xff]
      %v273 = vld [vmem:[#allocation2 + $0x30] sm:$0xff]
      %v274 = vld [vmem:[#allocation2 + $0x38] sm:$0xff]
      %v275 = vld [vmem:[%s239] sm:$0xff]
      %v276 = vld [vmem:[%s239 + $0x8] sm:$0xff]
      %v277 = vld [vmem:[%s239 + $0x10] sm:$0xf]
      %v278 = vld [vmem:[%s239 + $0x14] sm:$0xff]
      %v279 = vld [vmem:[%s239 + $0x1c] sm:$0xff]
      %v280 = vld [vmem:[%s239 + $0x24] sm:$0xf]
      %v281 = vld [vmem:[%s239 + $0x28] sm:$0xff]
      %v282 = vld [vmem:[%s239 + $0x30] sm:$0xff]
      %v283 = vld [vmem:[%s239 + $0x38] sm:$0xf]
      %v284 = vld [vmem:[%s239 + $0x3c] sm:$0xff]
      %v285 = vld [vmem:[%s239 + $0x44] sm:$0xff]
      %v286 = vld [vmem:[%s239 + $0x4c] sm:$0xf]
      %v287 = vld [vmem:[%s239 + $0x50] sm:$0xff]
      %v288 = vld [vmem:[%s239 + $0x58] sm:$0xff]
      %v289 = vld [vmem:[%s239 + $0x60] sm:$0xf]
      %v290 = vld [vmem:[%s239 + $0x64] sm:$0xff]
      %v291 = vld [vmem:[%s239 + $0x6c] sm:$0xff]
      %v292 = vld [vmem:[%s239 + $0x74] sm:$0xf]
      %v293 = vld [vmem:[%s239 + $0x78] sm:$0xff]
      %v294 = vld [vmem:[%s239 + $0x80] sm:$0xff]
      %v295 = vld [vmem:[%s239 + $0x88] sm:$0xf]
      %v296 = vld [vmem:[%s239 + $0x8c] sm:$0xff]
      %v297 = vld [vmem:[%s239 + $0x94] sm:$0xff]
      %v298 = vld [vmem:[%s239 + $0x9c] sm:$0xf]
      %v299 = vld [vmem:[%s246] sm:$0xf]
      %v300 = vld [vmem:[%s246 + $0x4] sm:$0xf]
      %v301 = vld [vmem:[%s246 + $0x8] sm:$0xf]
      %v302 = vld [vmem:[%s246 + $0xc] sm:$0xf]
      %v303 = vld [vmem:[%s246 + $0x10] sm:$0xf]
      %v304 = vld [vmem:[%s246 + $0x14] sm:$0xf]
      %v305 = vld [vmem:[%s246 + $0x18] sm:$0xf]
      %v306 = vld [vmem:[%s246 + $0x1c] sm:$0xf]
      %v307 = vld [vmem:[%s246 + $0x20] sm:$0xf]
      %v308 = vld [vmem:[%s246 + $0x24] sm:$0xf]
      %v309 = vld [vmem:[%s246 + $0x28] sm:$0xf]
      %v310 = vld [vmem:[%s246 + $0x2c] sm:$0xf]
      %v311 = vld [vmem:[%s246 + $0x30] sm:$0xf]
      %v312 = vld [vmem:[%s246 + $0x34] sm:$0xf]
      %v313 = vld [vmem:[%s246 + $0x38] sm:$0xf]
      %v314 = vld [vmem:[%s246 + $0x3c] sm:$0xf]
      %v315 = vld [vmem:[%s246 + $0x40] sm:$0xf]
      %v316 = vld [vmem:[%s246 + $0x44] sm:$0xf]
      %v317 = vld [vmem:[%s246 + $0x48] sm:$0xf]
      %v318 = vld [vmem:[%s246 + $0x4c] sm:$0xf]
      %v319 = vld [vmem:[%s246 + $0x50] sm:$0xf]
      %v320 = vld [vmem:[%s246 + $0x54] sm:$0xf]
      %v321 = vld [vmem:[%s246 + $0x58] sm:$0xf]
      %v322 = vld [vmem:[%s246 + $0x5c] sm:$0xf]
      %v323 = vld [vmem:[%s246 + $0x60] sm:$0xf]
      %v324 = vld [vmem:[%s246 + $0x64] sm:$0xf]
      %v325 = vld [vmem:[%s246 + $0x68] sm:$0xf]
      %v326 = vld [vmem:[%s246 + $0x6c] sm:$0xf]
      %v327 = vld [vmem:[%s246 + $0x70] sm:$0xf]
      %v328 = vld [vmem:[%s246 + $0x74] sm:$0xf]
      %v329 = vld [vmem:[%s246 + $0x78] sm:$0xf]
      %v330 = vld [vmem:[%s246 + $0x7c] sm:$0xf]
      %v331 = vld [vmem:[%s246 + $0x80] sm:$0xf]
      %v332 = vld [vmem:[%s246 + $0x84] sm:$0xf]
      %v333 = vld [vmem:[%s246 + $0x88] sm:$0xf]
      %v334 = vld [vmem:[%s246 + $0x8c] sm:$0xf]
      %v335 = vld [vmem:[%s246 + $0x90] sm:$0xf]
      %v336 = vld [vmem:[%s246 + $0x94] sm:$0xf]
      %v337 = vld [vmem:[%s246 + $0x98] sm:$0xf]
      %v338 = vld [vmem:[%s246 + $0x9c] sm:$0xf]
      %v339 = vld [vmem:[%s246 + $0xa0] sm:$0xf]
      %v340 = vld [vmem:[%s246 + $0xa4] sm:$0xf]
      %v341 = vld [vmem:[%s246 + $0xa8] sm:$0xf]
      %v342 = vld [vmem:[%s246 + $0xac] sm:$0xf]
      %v343 = vld [vmem:[%s246 + $0xb0] sm:$0xf]
      %v344 = vld [vmem:[%s246 + $0xb4] sm:$0xf]
      %v345 = vld [vmem:[%s246 + $0xb8] sm:$0xf]
      %v346 = vld [vmem:[%s246 + $0xbc] sm:$0xf]
      %v347 = vld [vmem:[%s246 + $0xc0] sm:$0xf]
      %v348 = vld [vmem:[%s246 + $0xc4] sm:$0xf]
      %v349 = vld [vmem:[%s246 + $0xc8] sm:$0xf]
      %v350 = vld [vmem:[%s246 + $0xcc] sm:$0xf]
      %v351 = vld [vmem:[%s246 + $0xd0] sm:$0xf]
      %v352 = vld [vmem:[%s246 + $0xd4] sm:$0xf]
      %v353 = vld [vmem:[%s246 + $0xd8] sm:$0xf]
      %v354 = vld [vmem:[%s246 + $0xdc] sm:$0xf]
      %v355 = vld [vmem:[%s246 + $0xe0] sm:$0xf]
      %v356 = vld [vmem:[%s246 + $0xe4] sm:$0xf]
      %v357 = vld [vmem:[%s246 + $0xe8] sm:$0xf]
      %v358 = vld [vmem:[%s246 + $0xec] sm:$0xf]
      %v359 = vld [vmem:[%s246 + $0xf0] sm:$0xf]
      %v360 = vld [vmem:[%s246 + $0xf4] sm:$0xf]
      %v361 = vld [vmem:[%s246 + $0xf8] sm:$0xf]
      %v362 = vld [vmem:[%s246 + $0xfc] sm:$0xf]
      %v363 = vld [vmem:[%s246 + $0x100] sm:$0xf]
      %v364 = vld [vmem:[%s246 + $0x104] sm:$0xf]
      %v365 = vld [vmem:[%s246 + $0x108] sm:$0xf]
      %v366 = vld [vmem:[%s246 + $0x10c] sm:$0xf]
      %v367 = vld [vmem:[%s246 + $0x110] sm:$0xf]
      %v368 = vld [vmem:[%s246 + $0x114] sm:$0xf]
      %v369 = vld [vmem:[%s246 + $0x118] sm:$0xf]
      %v370 = vld [vmem:[%s246 + $0x11c] sm:$0xf]
      %v395 = vunpack.c.l.b16 %v275
      %v396 = vunpack.c.h.b16 %v275
      %v397 = vunpack.c.l.b16 %v276
      %v398 = vunpack.c.h.b16 %v276
      %v399 = vunpack.c.l.b16 %v277
      %v400 = vunpack.c.l.b16 %v278
      %v401 = vunpack.c.h.b16 %v278
      %v402 = vunpack.c.l.b16 %v279
      %v403 = vunpack.c.h.b16 %v279
      %v404 = vunpack.c.l.b16 %v280
      %v405 = vunpack.c.l.b16 %v281
      %v406 = vunpack.c.h.b16 %v281
      %v407 = vunpack.c.l.b16 %v282
      %v408 = vunpack.c.h.b16 %v282
      %v409 = vunpack.c.l.b16 %v283
      %v410 = vunpack.c.l.b16 %v284
      %v411 = vunpack.c.h.b16 %v284
      %v412 = vunpack.c.l.b16 %v285
      %v413 = vunpack.c.h.b16 %v285
      %v414 = vunpack.c.l.b16 %v286
      %v415 = vunpack.c.l.b16 %v287
      %v416 = vunpack.c.h.b16 %v287
      %v417 = vunpack.c.l.b16 %v288
      %v418 = vunpack.c.h.b16 %v288
      %v419 = vunpack.c.l.b16 %v289
      %v420 = vunpack.c.l.b16 %v290
      %v421 = vunpack.c.h.b16 %v290
      %v422 = vunpack.c.l.b16 %v291
      %v423 = vunpack.c.h.b16 %v291
      %v424 = vunpack.c.l.b16 %v292
      %v425 = vunpack.c.l.b16 %v293
      %v426 = vunpack.c.h.b16 %v293
      %v427 = vunpack.c.l.b16 %v294
      %v428 = vunpack.c.h.b16 %v294
      %v429 = vunpack.c.l.b16 %v295
      %v430 = vunpack.c.l.b16 %v296
      %v431 = vunpack.c.h.b16 %v296
      %v432 = vunpack.c.l.b16 %v297
      %v433 = vunpack.c.h.b16 %v297
      %v434 = vunpack.c.l.b16 %v298
      %v435 = vpack.c.b16 %v400, %v395
      %v436 = vpack.c.b16 %v401, %v396
      %v437 = vpack.c.b16 %v402, %v397
      %v438 = vpack.c.b16 %v403, %v398
      %v439 = vpack.c.b16 %v404, %v399
      %v440 = vpack.c.b16 %v410, %v405
      %v441 = vpack.c.b16 %v411, %v406
      %v442 = vpack.c.b16 %v412, %v407
      %v443 = vpack.c.b16 %v413, %v408
      %v444 = vpack.c.b16 %v414, %v409
      %v445 = vpack.c.b16 %v420, %v415
      %v446 = vpack.c.b16 %v421, %v416
      %v447 = vpack.c.b16 %v422, %v417
      %v448 = vpack.c.b16 %v423, %v418
      %v449 = vpack.c.b16 %v424, %v419
      %v450 = vpack.c.b16 %v430, %v425
      %v451 = vpack.c.b16 %v431, %v426
      %v452 = vpack.c.b16 %v432, %v427
      %v453 = vpack.c.b16 %v433, %v428
      %v454 = vpack.c.b16 %v434, %v429
      %v543 = vunpack.c.l.b16 %v299
      %v544 = vunpack.c.l.b16 %v300
      %v545 = vunpack.c.l.b16 %v301
      %v546 = vunpack.c.l.b16 %v302
      %v547 = vunpack.c.l.b16 %v303
      %v548 = vunpack.c.l.b16 %v304
      %v549 = vunpack.c.l.b16 %v305
      %v550 = vunpack.c.l.b16 %v306
      %v551 = vunpack.c.l.b16 %v307
      %v552 = vunpack.c.l.b16 %v308
      %v553 = vunpack.c.l.b16 %v309
      %v554 = vunpack.c.l.b16 %v310
      %v555 = vunpack.c.l.b16 %v311
      %v556 = vunpack.c.l.b16 %v312
      %v557 = vunpack.c.l.b16 %v313
      %v558 = vunpack.c.l.b16 %v314
      %v559 = vunpack.c.l.b16 %v315
      %v560 = vunpack.c.l.b16 %v316
      %v561 = vunpack.c.l.b16 %v317
      %v562 = vunpack.c.l.b16 %v318
      %v563 = vunpack.c.l.b16 %v319
      %v564 = vunpack.c.l.b16 %v320
      %v565 = vunpack.c.l.b16 %v321
      %v566 = vunpack.c.l.b16 %v322
      %v567 = vunpack.c.l.b16 %v323
      %v568 = vunpack.c.l.b16 %v324
      %v569 = vunpack.c.l.b16 %v325
      %v570 = vunpack.c.l.b16 %v326
      %v571 = vunpack.c.l.b16 %v327
      %v572 = vunpack.c.l.b16 %v328
      %v573 = vunpack.c.l.b16 %v329
      %v574 = vunpack.c.l.b16 %v330
      %v575 = vunpack.c.l.b16 %v331
      %v576 = vunpack.c.l.b16 %v332
      %v577 = vunpack.c.l.b16 %v333
      %v578 = vunpack.c.l.b16 %v334
      %v579 = vunpack.c.l.b16 %v335
      %v580 = vunpack.c.l.b16 %v336
      %v581 = vunpack.c.l.b16 %v337
      %v582 = vunpack.c.l.b16 %v338
      %v583 = vunpack.c.l.b16 %v339
      %v584 = vunpack.c.l.b16 %v340
      %v585 = vunpack.c.l.b16 %v341
      %v586 = vunpack.c.l.b16 %v342
      %v587 = vunpack.c.l.b16 %v343
      %v588 = vunpack.c.l.b16 %v344
      %v589 = vunpack.c.l.b16 %v345
      %v590 = vunpack.c.l.b16 %v346
      %v591 = vunpack.c.l.b16 %v347
      %v592 = vunpack.c.l.b16 %v348
      %v593 = vunpack.c.l.b16 %v349
      %v594 = vunpack.c.l.b16 %v350
      %v595 = vunpack.c.l.b16 %v351
      %v596 = vunpack.c.l.b16 %v352
      %v597 = vunpack.c.l.b16 %v353
      %v598 = vunpack.c.l.b16 %v354
      %v599 = vunpack.c.l.b16 %v355
      %v600 = vunpack.c.l.b16 %v356
      %v601 = vunpack.c.l.b16 %v357
      %v602 = vunpack.c.l.b16 %v358
      %v603 = vunpack.c.l.b16 %v359
      %v604 = vunpack.c.l.b16 %v360
      %v605 = vunpack.c.l.b16 %v361
      %v606 = vunpack.c.l.b16 %v362
      %v607 = vunpack.c.l.b16 %v363
      %v608 = vunpack.c.l.b16 %v364
      %v609 = vunpack.c.l.b16 %v365
      %v610 = vunpack.c.l.b16 %v366
      %v611 = vunpack.c.l.b16 %v367
      %v612 = vunpack.c.l.b16 %v368
      %v613 = vunpack.c.l.b16 %v369
      %v614 = vunpack.c.l.b16 %v370
      %v615 = vpack.c.b16 %v544, %v543
      %v616 = vpack.c.b16 %v546, %v545
      %v617 = vpack.c.b16 %v548, %v547
      %v618 = vpack.c.b16 %v550, %v549
      %v619 = vpack.c.b16 %v552, %v551
      %v620 = vpack.c.b16 %v554, %v553
      %v621 = vpack.c.b16 %v556, %v555
      %v622 = vpack.c.b16 %v558, %v557
      %v623 = vpack.c.b16 %v560, %v559
      %v624 = vpack.c.b16 %v562, %v561
      %v625 = vpack.c.b16 %v564, %v563
      %v626 = vpack.c.b16 %v566, %v565
      %v627 = vpack.c.b16 %v568, %v567
      %v628 = vpack.c.b16 %v570, %v569
      %v629 = vpack.c.b16 %v572, %v571
      %v630 = vpack.c.b16 %v574, %v573
      %v631 = vpack.c.b16 %v576, %v575
      %v632 = vpack.c.b16 %v578, %v577
      %v633 = vpack.c.b16 %v580, %v579
      %v634 = vpack.c.b16 %v582, %v581
      %v635 = vpack.c.b16 %v584, %v583
      %v636 = vpack.c.b16 %v586, %v585
      %v637 = vpack.c.b16 %v588, %v587
      %v638 = vpack.c.b16 %v590, %v589
      %v639 = vpack.c.b16 %v592, %v591
      %v640 = vpack.c.b16 %v594, %v593
      %v641 = vpack.c.b16 %v596, %v595
      %v642 = vpack.c.b16 %v598, %v597
      %v643 = vpack.c.b16 %v600, %v599
      %v644 = vpack.c.b16 %v602, %v601
      %v645 = vpack.c.b16 %v604, %v603
      %v646 = vpack.c.b16 %v606, %v605
      %v647 = vpack.c.b16 %v608, %v607
      %v648 = vpack.c.b16 %v610, %v609
      %v649 = vpack.c.b16 %v612, %v611
      %v650 = vpack.c.b16 %v614, %v613
      %vm687 = vcmask 523264
      %v689 = vsel %vm687, %v439, 0
      %v692 = vsel %vm687, %v444, 0
      %v695 = vsel %vm687, %v449, 0
      %v698 = vsel %vm687, %v454, 0
      %700 = vmatprep.subr.bf16.mxu0 0
      %701 = vmatpush1.bf16.msra.mxu0 %v622
      %702 = vmatprep.subr.bf16.mxu0 0
      %703 = vmatpush1.bf16.msra.mxu0 %v621
      %704 = vmatprep.subr.bf16.mxu0 0
      %705 = vmatpush1.bf16.msra.mxu0 %v620
      %706 = vmatprep.subr.bf16.mxu0 0
      %707 = vmatpush1.bf16.msra.mxu0 %v619
      %708 = vmatprep.subr.bf16.mxu0 0
      %709 = vmatpush1.bf16.msra.mxu0 %v618
      %710 = vmatprep.subr.bf16.mxu0 0
      %711 = vmatpush1.bf16.msra.mxu0 %v617
      %712 = vmatprep.subr.bf16.mxu0 0
      %713 = vmatpush1.bf16.msra.mxu0 %v616
      %714 = vmatprep.subr.bf16.mxu0 0
      %715 = vmatpush1.bf16.msra.mxu0 %v615
      %716 = vmatprep.subr.bf16.mxu0 0
      %717 = vmatpush2.bf16.msra.mxu0 %v630
      %718 = vmatprep.subr.bf16.mxu0 0
      %719 = vmatpush2.bf16.msra.mxu0 %v629
      %720 = vmatprep.subr.bf16.mxu0 0
      %721 = vmatpush2.bf16.msra.mxu0 %v628
      %722 = vmatprep.subr.bf16.mxu0 0
      %723 = vmatpush2.bf16.msra.mxu0 %v627
      %724 = vmatprep.subr.bf16.mxu0 0
      %725 = vmatpush2.bf16.msra.mxu0 %v626
      %726 = vmatprep.subr.bf16.mxu0 0
      %727 = vmatpush2.bf16.msra.mxu0 %v625
      %728 = vmatprep.subr.bf16.mxu0 0
      %729 = vmatpush2.bf16.msra.mxu0 %v624
      %730 = vmatprep.subr.bf16.mxu0 0
      %731 = vmatpush2.bf16.msra.mxu0 %v623
      %732 = vmatprep.mubr.bf16.mxu0 %v436
      %733 = vmatmul.mubr.bf16.gmra.mxu0 %v435
      %v734 = vpop.f32.mrf.mxu0
      %v735 = vadd.f32 0.0, %v734
      %v736 = vpop.f32.mrf.mxu0
      %v737 = vpop.f32.mrf.mxu0
      %v738 = vadd.f32 0.0, %v737
      %v739 = vpop.f32.mrf.mxu0
      %740 = vmatprep.mubr.bf16.mxu0 %v441
      %741 = vmatmul.mubr.bf16.gmra.mxu0 %v440
      %v742 = vpop.f32.mrf.mxu0
      %v743 = vadd.f32 0.0, %v742
      %v744 = vpop.f32.mrf.mxu0
      %v745 = vpop.f32.mrf.mxu0
      %v746 = vadd.f32 0.0, %v745
      %v747 = vpop.f32.mrf.mxu0
      %748 = vmatprep.mubr.bf16.mxu0 %v446
      %749 = vmatmul.mubr.bf16.gmra.mxu0 %v445
      %v750 = vpop.f32.mrf.mxu0
      %v751 = vadd.f32 0.0, %v750
      %v752 = vpop.f32.mrf.mxu0
      %v753 = vpop.f32.mrf.mxu0
      %v754 = vadd.f32 0.0, %v753
      %v755 = vpop.f32.mrf.mxu0
      %756 = vmatprep.mubr.bf16.mxu0 %v451
      %757 = vmatmul.mubr.bf16.gmra.mxu0 %v450
      %v758 = vpop.f32.mrf.mxu0
      %v759 = vadd.f32 0.0, %v758
      %v760 = vpop.f32.mrf.mxu0
      %v761 = vpop.f32.mrf.mxu0
      %v762 = vadd.f32 0.0, %v761
      %v763 = vpop.f32.mrf.mxu0
      %764 = vdwg.mxu0
      %765 = vmatprep.subr.bf16.mxu0 0
      %766 = vmatpush1.bf16.msra.mxu0 %v638
      %767 = vmatprep.subr.bf16.mxu0 0
      %768 = vmatpush1.bf16.msra.mxu0 %v637
      %769 = vmatprep.subr.bf16.mxu0 0
      %770 = vmatpush1.bf16.msra.mxu0 %v636
      %771 = vmatprep.subr.bf16.mxu0 0
      %772 = vmatpush1.bf16.msra.mxu0 %v635
      %773 = vmatprep.subr.bf16.mxu0 0
      %774 = vmatpush1.bf16.msra.mxu0 %v634
      %775 = vmatprep.subr.bf16.mxu0 0
      %776 = vmatpush1.bf16.msra.mxu0 %v633
      %777 = vmatprep.subr.bf16.mxu0 0
      %778 = vmatpush1.bf16.msra.mxu0 %v632
      %779 = vmatprep.subr.bf16.mxu0 0
      %780 = vmatpush1.bf16.msra.mxu0 %v631
      %781 = vmatprep.subr.bf16.mxu0 0
      %782 = vmatpush2.bf16.msra.mxu0 %v646
      %783 = vmatprep.subr.bf16.mxu0 0
      %784 = vmatpush2.bf16.msra.mxu0 %v645
      %785 = vmatprep.subr.bf16.mxu0 0
      %786 = vmatpush2.bf16.msra.mxu0 %v644
      %787 = vmatprep.subr.bf16.mxu0 0
      %788 = vmatpush2.bf16.msra.mxu0 %v643
      %789 = vmatprep.subr.bf16.mxu0 0
      %790 = vmatpush2.bf16.msra.mxu0 %v642
      %791 = vmatprep.subr.bf16.mxu0 0
      %792 = vmatpush2.bf16.msra.mxu0 %v641
      %793 = vmatprep.subr.bf16.mxu0 0
      %794 = vmatpush2.bf16.msra.mxu0 %v640
      %795 = vmatprep.subr.bf16.mxu0 0
      %796 = vmatpush2.bf16.msra.mxu0 %v639
      %797 = vmatprep.mubr.bf16.mxu0 %v438
      %798 = vmatmul.mubr.bf16.gmra.mxu0 %v437
      %v799 = vpop.f32.mrf.mxu0
      %v800 = vadd.f32 %v735, %v799
      %v801 = vpop.f32.mrf.mxu0
      %v802 = vpop.f32.mrf.mxu0
      %v803 = vadd.f32 %v738, %v802
      %v804 = vpop.f32.mrf.mxu0
      %805 = vmatprep.mubr.bf16.mxu0 %v443
      %806 = vmatmul.mubr.bf16.gmra.mxu0 %v442
      %v807 = vpop.f32.mrf.mxu0
      %v808 = vadd.f32 %v743, %v807
      %v809 = vpop.f32.mrf.mxu0
      %v810 = vpop.f32.mrf.mxu0
      %v811 = vadd.f32 %v746, %v810
      %v812 = vpop.f32.mrf.mxu0
      %813 = vmatprep.mubr.bf16.mxu0 %v448
      %814 = vmatmul.mubr.bf16.gmra.mxu0 %v447
      %v815 = vpop.f32.mrf.mxu0
      %v816 = vadd.f32 %v751, %v815
      %v817 = vpop.f32.mrf.mxu0
      %v818 = vpop.f32.mrf.mxu0
      %v819 = vadd.f32 %v754, %v818
      %v820 = vpop.f32.mrf.mxu0
      %821 = vmatprep.mubr.bf16.mxu0 %v453
      %822 = vmatmul.mubr.bf16.gmra.mxu0 %v452
      %v823 = vpop.f32.mrf.mxu0
      %v824 = vadd.f32 %v759, %v823
      %v825 = vpop.f32.mrf.mxu0
      %v826 = vpop.f32.mrf.mxu0
      %v827 = vadd.f32 %v762, %v826
      %v828 = vpop.f32.mrf.mxu0
      %829 = vdwg.mxu0
      %830 = vmatprep.subr.bf16.mxu0 0
      %831 = vmatpush1.bf16.msra.mxu0 0
      %832 = vmatprep.subr.bf16.mxu0 0
      %833 = vmatpush1.bf16.msra.mxu0 0
      %834 = vmatprep.subr.bf16.mxu0 0
      %835 = vmatpush1.bf16.msra.mxu0 0
      %836 = vmatprep.subr.bf16.mxu0 0
      %837 = vmatpush1.bf16.msra.mxu0 0
      %838 = vmatprep.subr.bf16.mxu0 0
      %839 = vmatpush1.bf16.msra.mxu0 %v650
      %840 = vmatprep.subr.bf16.mxu0 0
      %841 = vmatpush1.bf16.msra.mxu0 %v649
      %842 = vmatprep.subr.bf16.mxu0 0
      %843 = vmatpush1.bf16.msra.mxu0 %v648
      %844 = vmatprep.subr.bf16.mxu0 0
      %845 = vmatpush1.bf16.msra.mxu0 %v647
      %846 = vmatprep.subr.bf16.mxu0 0
      %847 = vmatpush2.bf16.msra.mxu0 0
      %848 = vmatprep.subr.bf16.mxu0 0
      %849 = vmatpush2.bf16.msra.mxu0 0
      %850 = vmatprep.subr.bf16.mxu0 0
      %851 = vmatpush2.bf16.msra.mxu0 0
      %852 = vmatprep.subr.bf16.mxu0 0
      %853 = vmatpush2.bf16.msra.mxu0 0
      %854 = vmatprep.subr.bf16.mxu0 0
      %855 = vmatpush2.bf16.msra.mxu0 0
      %856 = vmatprep.subr.bf16.mxu0 0
      %857 = vmatpush2.bf16.msra.mxu0 0
      %858 = vmatprep.subr.bf16.mxu0 0
      %859 = vmatpush2.bf16.msra.mxu0 0
      %860 = vmatprep.subr.bf16.mxu0 0
      %861 = vmatpush2.bf16.msra.mxu0 0
      %862 = vmatprep.mubr.bf16.mxu0 0
      %863 = vmatmul.mubr.bf16.gmra.mxu0 %v689
      %v864 = vpop.f32.mrf.mxu0
      %v865 = vadd.f32 %v800, %v864
      %v866 = vpop.f32.mrf.mxu0
      %v867 = vpop.f32.mrf.mxu0
      %v868 = vadd.f32 %v803, %v867
      %v869 = vpop.f32.mrf.mxu0
      %870 = vmatprep.mubr.bf16.mxu0 0
      %871 = vmatmul.mubr.bf16.gmra.mxu0 %v692
      %v872 = vpop.f32.mrf.mxu0
      %v873 = vadd.f32 %v808, %v872
      %v874 = vpop.f32.mrf.mxu0
      %v875 = vpop.f32.mrf.mxu0
      %v876 = vadd.f32 %v811, %v875
      %v877 = vpop.f32.mrf.mxu0
      %878 = vmatprep.mubr.bf16.mxu0 0
      %879 = vmatmul.mubr.bf16.gmra.mxu0 %v695
      %v880 = vpop.f32.mrf.mxu0
      %v881 = vadd.f32 %v816, %v880
      %v882 = vpop.f32.mrf.mxu0
      %v883 = vpop.f32.mrf.mxu0
      %v884 = vadd.f32 %v819, %v883
      %v885 = vpop.f32.mrf.mxu0
      %886 = vmatprep.mubr.bf16.mxu0 0
      %887 = vmatmul.mubr.bf16.gmra.mxu0 %v698
      %v888 = vpop.f32.mrf.mxu0
      %v889 = vadd.f32 %v824, %v888
      %v890 = vpop.f32.mrf.mxu0
      %v891 = vpop.f32.mrf.mxu0
      %v892 = vadd.f32 %v827, %v891
      %v893 = vpop.f32.mrf.mxu0
      %894 = vdwg.mxu0
      %v895 = vadd.f32 %v267, %v865
      %v896 = vadd.f32 %v268, %v868
      %v897 = vadd.f32 %v269, %v873
      %v898 = vadd.f32 %v270, %v876
      %v899 = vadd.f32 %v271, %v881
      %v900 = vadd.f32 %v272, %v884
      %v901 = vadd.f32 %v273, %v889
      %v902 = vadd.f32 %v274, %v892
      %903 = vst [vmem:[#allocation2] sm:$0xff] %v895
      %904 = vst [vmem:[#allocation2 + $0x8] sm:$0xff] %v896
      %905 = vst [vmem:[#allocation2 + $0x10] sm:$0xff] %v897
      %906 = vst [vmem:[#allocation2 + $0x18] sm:$0xff] %v898
      %907 = vst [vmem:[#allocation2 + $0x20] sm:$0xff] %v899
      %908 = vst [vmem:[#allocation2 + $0x28] sm:$0xff] %v900
      %909 = vst [vmem:[#allocation2 + $0x30] sm:$0xff] %v901
      %910 = vst [vmem:[#allocation2 + $0x38] sm:$0xff] %v902
      // Predicated region
      $region41: #{basic_block_nchw.3} parent=35 // pred_check
        %p911 = pneg %p255
      $region42: #{basic_block_nchw.3} parent=35 // pred_check_branch
        %913 = sbr.rel (%p911) target = $region44
      $region43: #{basic_block_nchw.3} parent=35 // pred_region
        %v914 = vld [vmem:[#allocation2] sm:$0xff]
        %v915 = vld [vmem:[#allocation2 + $0x8] sm:$0xff]
        %v916 = vld [vmem:[#allocation2 + $0x10] sm:$0xff]
        %v917 = vld [vmem:[#allocation2 + $0x18] sm:$0xff]
        %v918 = vld [vmem:[#allocation2 + $0x20] sm:$0xff]
        %v919 = vld [vmem:[#allocation2 + $0x28] sm:$0xff]
        %v920 = vld [vmem:[#allocation2 + $0x30] sm:$0xff]
        %v921 = vld [vmem:[#allocation2 + $0x38] sm:$0xff]
        %v922 = vld [vmem:[%s2] sm:$0x1]
        %v924 = vlaneseq
        %v925 = vshrl.u32 %v924, 7
        %v926 = vsub.s32 0, %v925
        %v927 = vrot.slane %v922, %v926
        %v929 = vmul.f32 %v914, %v927
        %v930 = vmul.f32 %v915, %v927
        %v931 = vmul.f32 %v916, %v927
        %v932 = vmul.f32 %v917, %v927
        %v933 = vmul.f32 %v918, %v927
        %v934 = vmul.f32 %v919, %v927
        %v935 = vmul.f32 %v920, %v927
        %v936 = vmul.f32 %v921, %v927
        %v937 = vld [vmem:[%s3] sm:$0x1]
        %v939 = vlaneseq
        %v940 = vshrl.u32 %v939, 7
        %v941 = vsub.s32 0, %v940
        %v942 = vrot.slane %v937, %v941
        %v944 = vadd.f32 %v929, %v942
        %v945 = vadd.f32 %v930, %v942
        %v946 = vadd.f32 %v931, %v942
        %v947 = vadd.f32 %v932, %v942
        %v948 = vadd.f32 %v933, %v942
        %v949 = vadd.f32 %v934, %v942
        %v950 = vadd.f32 %v935, %v942
        %v951 = vadd.f32 %v936, %v942
        %v952 = vmax.f32 %v944, 0.0
        %v953 = vmax.f32 %v945, 0.0
        %v954 = vmax.f32 %v946, 0.0
        %v955 = vmax.f32 %v947, 0.0
        %v956 = vmax.f32 %v948, 0.0
        %v957 = vmax.f32 %v949, 0.0
        %v958 = vmax.f32 %v950, 0.0
        %v959 = vmax.f32 %v951, 0.0
        %v960 = vpack.c.bf16 %v953, %v952
        %v961 = vpack.c.bf16 %v955, %v954
        %v962 = vpack.c.bf16 %v957, %v956
        %v963 = vpack.c.bf16 %v959, %v958
        %v968 = vunpack.c.l.b16 %v960
        %v969 = vunpack.c.h.b16 %v960
        %v970 = vunpack.c.l.b16 %v961
        %v971 = vunpack.c.h.b16 %v961
        %v972 = vunpack.c.l.b16 %v962
        %v973 = vunpack.c.h.b16 %v962
        %v974 = vunpack.c.l.b16 %v963
        %v975 = vunpack.c.h.b16 %v963
        %v976 = vpack.c.b16 %v968, %v968
        %v977 = vpack.c.b16 %v969, %v969
        %v978 = vpack.c.b16 %v970, %v970
        %v979 = vpack.c.b16 %v971, %v971
        %v980 = vpack.c.b16 %v972, %v972
        %v981 = vpack.c.b16 %v973, %v973
        %v982 = vpack.c.b16 %v974, %v974
        %v983 = vpack.c.b16 %v975, %v975
        %992 = vst [vmem:[%s252] sm:$0xf] %v976
        %993 = vst [vmem:[%s252 + $0x4] sm:$0xf] %v977
        %994 = vst [vmem:[%s252 + $0x8] sm:$0xf] %v978
        %995 = vst [vmem:[%s252 + $0xc] sm:$0xf] %v979
        %996 = vst [vmem:[%s252 + $0x10] sm:$0xf] %v980
        %997 = vst [vmem:[%s252 + $0x14] sm:$0xf] %v981
        %998 = vst [vmem:[%s252 + $0x18] sm:$0xf] %v982
        %999 = vst [vmem:[%s252 + $0x1c] sm:$0xf] %v983
      $region44: #{basic_block_nchw.3} parent=35 // pred_fallthru
        _
      %s1000 = smul.u32 8, %s19
      %p1001 = scmp.lt.s32.totalorder %s1000, 15
      %s1002 = scalar_select %p1001, %s1000, 15
      %s1003 = smul.addr %s1002, 4
      %s1004 = scalar_lea.vmem %s4, %s1003
      // Predicated region
      $region45: #{basic_block_nchw.3} parent=35 // pred_check
        %p1005 = pneg %p141
      $region46: #{basic_block_nchw.3} parent=35 // pred_check_branch
        %1007 = sbr.rel (%p1005) target = $region48
      $region47: #{basic_block_nchw.3} parent=35 // pred_region
        %s1008 = smul.u32 8, %s19
      $region48: #{basic_block_nchw.3} parent=35 // pred_fallthru
        _
    $region36: #{basic_block_nchw.3} parent=5 // pred_fallthru
      _
    %p1009 = scmp.le.s32.totalorder 2, %s10
    // Predicated region
    $region49: #{basic_block_nchw.3} parent=5 // pred_check
      %p1010 = pneg %p1009
    $region50: #{basic_block_nchw.3} parent=5 // pred_check_branch
      %1012 = sbr.rel (%p1010) target = $region52
    $region51: #{basic_block_nchw.3} parent=5 // pred_region
      %s1013 = ssub.s32 %s10, 2
      // Predicated region
      $region53: #{basic_block_nchw.3} parent=51 // pred_check
        %p1014 = pneg %p147
      $region54: #{basic_block_nchw.3} parent=51 // pred_check_branch
        %1016 = sbr.rel (%p1014) target = $region56
      $region55: #{basic_block_nchw.3} parent=51 // pred_region
        %s1017 = smul.u32 8, %s21
        %p1018 = scmp.lt.s32.totalorder %s1017, 15
        %s1019 = scalar_select %p1018, %s1017, 15
        %s1020 = smul.addr %s1019, 4
        %s1021 = scalar_lea.vmem %s4, %s1020
      $region56: #{basic_block_nchw.3} parent=51 // pred_fallthru
        _
    $region52: #{basic_block_nchw.3} parent=5 // pred_fallthru
      _
  $region6: #{basic_block_nchw.3} parent=0 // loop_footer
    %s14 = sadd.s32 1, %s10
  $region7: #{basic_block_nchw.3} parent=0 // loop_footer_branch
    %9 = sbr.rel target = $region3
  $region8: #{basic_block_nchw.3} parent=0 // loop_exit
    _

// kernel: basic_block_nchw.5
$region0: #{basic_block_nchw.5}
  #allocation0 [shape = 'u32[]', space=smem, size = 0x4, offset = 0x4, fixed_abs, tag = 'smem constant byte address 0x4 - core index']
  #allocation1 [shape = 'u32[144,128]{1,0:T(1,128)}', space=vmem, size = 0x12000, scoped, tag = 'internal scratch']
  #allocation2 [shape = 'f32[64,128]{1,0:T(8,128)}', space=vmem, size = 0x8000, scoped, tag = 'scratch operand']
  %s0 = inlined_call_operand.vmem [shape: bf16[128,1152], index: 0, kind: input, shape index: {}]
  %s1 = inlined_call_operand.vmem [shape: bf16[1152,128], index: 1, kind: input, shape index: {}]
  %s2 = inlined_call_operand.vmem [shape: f32[1,128], index: 2, kind: input, shape index: {}]
  %s3 = inlined_call_operand.vmem [shape: f32[1,128], index: 3, kind: input, shape index: {}]
  %s4 = inlined_call_operand.vmem [shape: bf16[128,128], index: 4, kind: input, shape index: {}]
  %s5 = inlined_call_operand.hbm [shape: f32[128,128], index: 5, kind: output, shape index: {}]
  %s6 = sld [smem:[#allocation0]]
  $region61: #{basic_block_nchw.5} parent=0
    _
  %s8 = ssub.s32 1, %s6
  %s9 = scalar_select 0, %s8, %s6
  $region1: #{basic_block_nchw.5} parent=0
    #allocation3 [shape = 'u8[65536]{0}', space=vmem, size = 0x10000, scoped, tag = 'output window, operand 0']
    #allocation4 [shape = 's32[2]{0}', space=sflag, size = 0x8, scoped, tag = 'scoped memory for basic_block_nchw.5']
    %10 = vsyncpa [#allocation4], 0
    %s11 = scalar_lea.sflag [#allocation4], 1
    %12 = vsyncpa %s11, 0
    loop: start=0, step=1, limit=4
    $region2: #{basic_block_nchw.5} parent=1 // loop_pre_header
      _
    $region3: #{basic_block_nchw.5} parent=1 // loop_header
      %s14 = sphi 0, %s18
      %p15 = scmp.ge.s32.totalorder %s14, 4
      %s21 = sphi 0, %s33
      %s22 = sphi 0, %s29
      %s23 = sphi 0, %s21
      %s24 = sphi 0, %s22
      %s25 = sphi 0, %s23
      %s26 = sphi 0, %s24
      %s38 = sphi 0, %s40
      %s41 = sphi 0, %s38
      %s42 = sphi 0, %s41
      %s58 = sphi 0, %s42
      %s64 = sphi 0, %s66
      %s67 = sphi 0, %s64
      %s68 = sphi 0, %s67
      %s84 = sphi 0, %s68
      %s88 = sphi 0, %s88
      %s90 = sphi 0, %s88
      %s91 = sphi 0, %s90
      %s105 = sphi 0, %s91
      %s109 = sphi 0, %s109
      %s111 = sphi 0, %s109
      %s112 = sphi 0, %s111
      %s126 = sphi 0, %s112
      %s132 = sphi 0, %s134
      %s135 = sphi 0, %s132
      %s136 = sphi 0, %s135
      %s152 = sphi 0, %s136
      %s158 = sphi 0, %s160
      %s161 = sphi 0, %s158
      %s162 = sphi 0, %s161
      %s178 = sphi 0, %s162
    $region4: #{basic_block_nchw.5} parent=1 // loop_header_branch
      %17 = sbr.rel (%p15) target = $region8
    $region5: #{basic_block_nchw.5} parent=1 // loop_body
      %s19 = ssub.s32 %s14, 1
      %s20 = ssub.s32 %s14, 2
      %s27 = sadd.s32 1, %s22
      %p28 = scmp.ge.s32.totalorder %s27, 1
      %s29 = scalar_select %p28, 0, %s27
      %s30 = sadd.s32 1, %s21
      %s31 = scalar_select %p28, %s30, %s21
      %p32 = scmp.ge.s32.totalorder %s31, 2
      %s33 = scalar_select %p32, 0, %s31
      %s34 = ssub.s32 %s21, %s33
      %s35 = ssub.s32 %s22, %s29
      %s36 = sor.u32 %s34, %s35
      %p37 = scmp.eq.s32.totalorder %s36, 0
      %s39 = sadd.s32 %s38, 1
      %s40 = scalar_select %p37, %s38, %s39
      %p43 = pneg %p37
      %p44 = scmp.eq.s32.totalorder %s14, 1
      %p45 = por %p43, %p44
      %p46 = scmp.ne.s32.totalorder %s38, %s41
      %p47 = scmp.eq.s32.totalorder %s14, 0
      %p48 = por %p46, %p47
      %p49 = scmp.ne.s32.totalorder %s38, %s41
      %p50 = scmp.eq.s32.totalorder %s19, 1
      %p51 = por %p49, %p50
      %p52 = scmp.ne.s32.totalorder %s41, %s42
      %p53 = scmp.eq.s32.totalorder %s19, 0
      %p54 = por %p52, %p53
      %p55 = scmp.ne.s32.totalorder %s41, %s42
      %p56 = scmp.eq.s32.totalorder %s20, 1
      %p57 = por %p55, %p56
      %p59 = scmp.ne.s32.totalorder %s42, %s58
      %p60 = scmp.eq.s32.totalorder %s20, 0
      %p61 = por %p59, %p60
      %s62 = ssub.s32 %s22, %s29
      %p63 = scmp.eq.s32.totalorder %s62, 0
      %s65 = sadd.s32 %s64, 1
      %s66 = scalar_select %p63, %s64, %s65
      %p69 = pneg %p63
      %p70 = scmp.eq.s32.totalorder %s14, 1
      %p71 = por %p69, %p70
      %p72 = scmp.ne.s32.totalorder %s64, %s67
      %p73 = scmp.eq.s32.totalorder %s14, 0
      %p74 = por %p72, %p73
      %p75 = scmp.ne.s32.totalorder %s64, %s67
      %p76 = scmp.eq.s32.totalorder %s19, 1
      %p77 = por %p75, %p76
      %p78 = scmp.ne.s32.totalorder %s67, %s68
      %p79 = scmp.eq.s32.totalorder %s19, 0
      %p80 = por %p78, %p79
      %p81 = scmp.ne.s32.totalorder %s67, %s68
      %p82 = scmp.eq.s32.totalorder %s20, 1
      %p83 = por %p81, %p82
      %p85 = scmp.ne.s32.totalorder %s68, %s84
      %p86 = scmp.eq.s32.totalorder %s20, 0
      %p87 = por %p85, %p86
      %s89 = sadd.s32 %s88, 1
      %p92 = scmp.eq.s32.totalorder %s14, 1
      %p93 = scmp.ne.s32.totalorder %s88, %s90
      %p94 = scmp.eq.s32.totalorder %s14, 0
      %p95 = por %p93, %p94
      %p96 = scmp.ne.s32.totalorder %s88, %s90
      %p97 = scmp.eq.s32.totalorder %s19, 1
      %p98 = por %p96, %p97
      %p99 = scmp.ne.s32.totalorder %s90, %s91
      %p100 = scmp.eq.s32.totalorder %s19, 0
      %p101 = por %p99, %p100
      %p102 = scmp.ne.s32.totalorder %s90, %s91
      %p103 = scmp.eq.s32.totalorder %s20, 1
      %p104 = por %p102, %p103
      %p106 = scmp.ne.s32.totalorder %s91, %s105
      %p107 = scmp.eq.s32.totalorder %s20, 0
      %p108 = por %p106, %p107
      %s110 = sadd.s32 %s109, 1
      %p113 = scmp.eq.s32.totalorder %s14, 1
      %p114 = scmp.ne.s32.totalorder %s109, %s111
      %p115 = scmp.eq.s32.totalorder %s14, 0
      %p116 = por %p114, %p115
      %p117 = scmp.ne.s32.totalorder %s109, %s111
      %p118 = scmp.eq.s32.totalorder %s19, 1
      %p119 = por %p117, %p118
      %p120 = scmp.ne.s32.totalorder %s111, %s112
      %p121 = scmp.eq.s32.totalorder %s19, 0
      %p122 = por %p120, %p121
      %p123 = scmp.ne.s32.totalorder %s111, %s112
      %p124 = scmp.eq.s32.totalorder %s20, 1
      %p125 = por %p123, %p124
      %p127 = scmp.ne.s32.totalorder %s112, %s126
      %p128 = scmp.eq.s32.totalorder %s20, 0
      %p129 = por %p127, %p128
      %s130 = ssub.s32 %s21, %s33
      %p131 = scmp.eq.s32.totalorder %s130, 0
      %s133 = sadd.s32 %s132, 1
      %s134 = scalar_select %p131, %s132, %s133
      %p137 = pneg %p131
      %p138 = scmp.eq.s32.totalorder %s14, 1
      %p139 = por %p137, %p138
      %p140 = scmp.ne.s32.totalorder %s132, %s135
      %p141 = scmp.eq.s32.totalorder %s14, 0
      %p142 = por %p140, %p141
      %p143 = scmp.ne.s32.totalorder %s132, %s135
      %p144 = scmp.eq.s32.totalorder %s19, 1
      %p145 = por %p143, %p144
      %p146 = scmp.ne.s32.totalorder %s135, %s136
      %p147 = scmp.eq.s32.totalorder %s19, 0
      %p148 = por %p146, %p147
      %p149 = scmp.ne.s32.totalorder %s135, %s136
      %p150 = scmp.eq.s32.totalorder %s20, 1
      %p151 = por %p149, %p150
      %p153 = scmp.ne.s32.totalorder %s136, %s152
      %p154 = scmp.eq.s32.totalorder %s20, 0
      %p155 = por %p153, %p154
      %s156 = ssub.s32 %s21, %s33
      %p157 = scmp.eq.s32.totalorder %s156, 0
      %s159 = sadd.s32 %s158, 1
      %s160 = scalar_select %p157, %s158, %s159
      %p163 = pneg %p157
      %p164 = scmp.eq.s32.totalorder %s14, 1
      %p165 = por %p163, %p164
      %p166 = scmp.ne.s32.totalorder %s158, %s161
      %p167 = scmp.eq.s32.totalorder %s14, 0
      %p168 = por %p166, %p167
      %p169 = scmp.ne.s32.totalorder %s158, %s161
      %p170 = scmp.eq.s32.totalorder %s19, 1
      %p171 = por %p169, %p170
      %p172 = scmp.ne.s32.totalorder %s161, %s162
      %p173 = scmp.eq.s32.totalorder %s19, 0
      %p174 = por %p172, %p173
      %p175 = scmp.ne.s32.totalorder %s161, %s162
      %p176 = scmp.eq.s32.totalorder %s20, 1
      %p177 = por %p175, %p176
      %p179 = scmp.ne.s32.totalorder %s162, %s178
      %p180 = scmp.eq.s32.totalorder %s20, 0
      %p181 = por %p179, %p180
      %p182 = scmp.le.s32.totalorder 1, %s14
      %p183 = scmp.lt.s32.totalorder %s14, 3
      %p184 = pnand %p182, %p183
      %p185 = pneg %p184
      // Predicated region
      $region9: #{basic_block_nchw.5} parent=5 // pred_check
        _
      $region10: #{basic_block_nchw.5} parent=5 // pred_check_branch
        %187 = sbr.rel (%p184) target = $region12
      $region11: #{basic_block_nchw.5} parent=5 // pred_region
        %s188 = ssub.s32 %s14, 1
        // Predicated region
        $region13: #{basic_block_nchw.5} parent=11 // pred_check
          %p189 = pneg %p80
        $region14: #{basic_block_nchw.5} parent=11 // pred_check_branch
          %191 = sbr.rel (%p189) target = $region16
        $region15: #{basic_block_nchw.5} parent=11 // pred_region
          %s192 = smul.u32 144, %s24
          %p193 = scmp.lt.s32.totalorder %s192, 143
          %s194 = scalar_select %p193, %s192, 143
          %s195 = smul.addr %s194, 4
          %s196 = scalar_lea.vmem %s1, %s195
          %s197 = smul.u32 144, %s24
        $region16: #{basic_block_nchw.5} parent=11 // pred_fallthru
          _
        // Predicated region
        $region17: #{basic_block_nchw.5} parent=11 // pred_check
          %p198 = pneg %p101
        $region18: #{basic_block_nchw.5} parent=11 // pred_check_branch
          %200 = sbr.rel (%p198) target = $region20
        $region19: #{basic_block_nchw.5} parent=11 // pred_region
          _
        $region20: #{basic_block_nchw.5} parent=11 // pred_fallthru
          _
        // Predicated region
        $region21: #{basic_block_nchw.5} parent=11 // pred_check
          %p201 = pneg %p122
        $region22: #{basic_block_nchw.5} parent=11 // pred_check_branch
          %203 = sbr.rel (%p201) target = $region24
        $region23: #{basic_block_nchw.5} parent=11 // pred_region
          _
        $region24: #{basic_block_nchw.5} parent=11 // pred_fallthru
          _
      $region12: #{basic_block_nchw.5} parent=5 // pred_fallthru
        _
      %p204 = scmp.lt.s32.totalorder %s14, 2
      // Predicated region
      $region25: #{basic_block_nchw.5} parent=5 // pred_check
        %p205 = pneg %p204
      $region26: #{basic_block_nchw.5} parent=5 // pred_check_branch
        %207 = sbr.rel (%p205) target = $region28
      $region27: #{basic_block_nchw.5} parent=5 // pred_region
        // Predicated region
        $region29: #{basic_block_nchw.5} parent=27 // pred_check
          %p208 = pneg %p48
        $region30: #{basic_block_nchw.5} parent=27 // pred_check_branch
          %210 = sbr.rel (%p208) target = $region32
        $region31: #{basic_block_nchw.5} parent=27 // pred_region
          %s211 = smul.u32 8, %s21
          %s212 = smul.u32 9, %s22
          %p213 = scmp.lt.s32.totalorder %s211, 15
          %s214 = scalar_select %p213, %s211, 15
          %p215 = scmp.lt.s32.totalorder %s212, 8
          %s216 = scalar_select %p215, %s212, 8
          %s217 = smul.addr %s214, 9
          %s218 = sadd.s32 %s216, %s217
          %s219 = smul.addr %s218, 4
          %s220 = scalar_lea.vmem %s0, %s219
          %s221 = smul.u32 8, %s21
          %s222 = smul.u32 9, %s22
        $region32: #{basic_block_nchw.5} parent=27 // pred_fallthru
          _
        // Predicated region
        $region33: #{basic_block_nchw.5} parent=27 // pred_check
          %p223 = pneg %p142
        $region34: #{basic_block_nchw.5} parent=27 // pred_check_branch
          %225 = sbr.rel (%p223) target = $region36
        $region35: #{basic_block_nchw.5} parent=27 // pred_region
          %s226 = smul.u32 8, %s21
          %p227 = scmp.lt.s32.totalorder %s226, 15
          %s228 = scalar_select %p227, %s226, 15
          %s229 = smul.addr %s228, 4
          %s230 = scalar_lea.vmem %s4, %s229
          %s231 = smul.u32 8, %s21
        $region36: #{basic_block_nchw.5} parent=27 // pred_fallthru
          _
      $region28: #{basic_block_nchw.5} parent=5 // pred_fallthru
        _
      %p232 = scmp.le.s32.totalorder 1, %s14
      %p233 = scmp.lt.s32.totalorder %s14, 3
      %p234 = pnand %p232, %p233
      %p235 = pneg %p234
      // Predicated region
      $region37: #{basic_block_nchw.5} parent=5 // pred_check
        _
      $region38: #{basic_block_nchw.5} parent=5 // pred_check_branch
        %237 = sbr.rel (%p234) target = $region40
      $region39: #{basic_block_nchw.5} parent=5 // pred_region
        %s238 = ssub.s32 %s14, 1
        %s239 = smul.u32 8, %s23
        %s240 = smul.u32 9, %s24
        %p241 = scmp.lt.s32.totalorder %s239, 15
        %s242 = scalar_select %p241, %s239, 15
        %p243 = scmp.lt.s32.totalorder %s240, 8
        %s244 = scalar_select %p243, %s240, 8
        %s245 = smul.addr %s242, 9
        %s246 = sadd.s32 %s244, %s245
        %s247 = smul.addr %s246, 4
        %s248 = scalar_lea.vmem %s0, %s247
        %p249 = pneg %p54
        %p250 = pneg %p51
        %s251 = smul.u32 144, %s24
        %p252 = scmp.lt.s32.totalorder %s251, 143
        %s253 = scalar_select %p252, %s251, 143
        %s254 = smul.addr %s253, 4
        %s255 = scalar_lea.vmem %s1, %s254
        %p256 = pneg %p80
        %p257 = pneg %p77
        %p258 = pneg %p101
        %p259 = pneg %p98
        %p260 = pneg %p122
        %p261 = pneg %p119
        %s262 = smul.u32 8, %s23
        %p263 = scmp.lt.s32.totalorder %s262, 15
        %s264 = scalar_select %p263, %s262, 15
        %s265 = smul.addr %s264, 4
        %s266 = scalar_lea.vmem %s4, %s265
        %p267 = pneg %p148
        %p268 = pneg %p145
        %p269 = pneg %p174
        %p270 = pneg %p171
        %s271 = sand.u32 %s161, 1
        %s272 = scalar_lea.sflag [#allocation4], %s271
        %s273 = sand.u32 %s161, 1
        %s274 = smul.addr %s273, 64
        %s275 = scalar_lea.vmem [#allocation3], %s274
        %s276 = smul.u32 8, %s23
        %s277 = smul.u32 9, %s24
        %p278 = scmp.lt.s32.totalorder %s276, 15
        %s279 = scalar_select %p278, %s276, 15
        %p280 = scmp.lt.s32.totalorder %s277, 8
        %s281 = scalar_select %p280, %s277, 8
        %s282 = smul.addr %s279, 9
        %s283 = sadd.s32 %s281, %s282
        %s284 = smul.addr %s283, 4
        %s285 = scalar_lea.vmem %s0, %s284
        %s286 = smul.u32 8, %s23
        %s287 = smul.u32 9, %s24
        %s288 = smul.u32 144, %s24
        %p289 = scmp.lt.s32.totalorder %s288, 143
        %s290 = scalar_select %p289, %s288, 143
        %s291 = smul.addr %s290, 4
        %s292 = scalar_lea.vmem %s1, %s291
        %s293 = smul.u32 144, %s24
        %s294 = smul.u32 8, %s23
        %p295 = scmp.lt.s32.totalorder %s294, 15
        %s296 = scalar_select %p295, %s294, 15
        %s297 = smul.addr %s296, 4
        %s298 = scalar_lea.vmem %s4, %s297
        %s299 = smul.u32 8, %s23
        %s300 = smul.u32 8, %s23
        %p302 = scmp.eq.s32.totalorder %s24, 0
        // Predicated region
        $region41: #{basic_block_nchw.5} parent=39 // pred_check
          %p303 = pneg %p302
        $region42: #{basic_block_nchw.5} parent=39 // pred_check_branch
          %305 = sbr.rel (%p303) target = $region44
        $region43: #{basic_block_nchw.5} parent=39 // pred_region
          %306 = vst [vmem:[#allocation2] sm:$0xff] 0.0
          %307 = vst [vmem:[#allocation2 + $0x8] sm:$0xff] 0.0
          %308 = vst [vmem:[#allocation2 + $0x10] sm:$0xff] 0.0
          %309 = vst [vmem:[#allocation2 + $0x18] sm:$0xff] 0.0
          %310 = vst [vmem:[#allocation2 + $0x20] sm:$0xff] 0.0
          %311 = vst [vmem:[#allocation2 + $0x28] sm:$0xff] 0.0
          %312 = vst [vmem:[#allocation2 + $0x30] sm:$0xff] 0.0
          %313 = vst [vmem:[#allocation2 + $0x38] sm:$0xff] 0.0
        $region44: #{basic_block_nchw.5} parent=39 // pred_fallthru
          _
        %v314 = vld [vmem:[#allocation2] sm:$0xff]
        %v315 = vld [vmem:[#allocation2 + $0x8] sm:$0xff]
        %v316 = vld [vmem:[#allocation2 + $0x10] sm:$0xff]
        %v317 = vld [vmem:[#allocation2 + $0x18] sm:$0xff]
        %v318 = vld [vmem:[#allocation2 + $0x20] sm:$0xff]
        %v319 = vld [vmem:[#allocation2 + $0x28] sm:$0xff]
        %v320 = vld [vmem:[#allocation2 + $0x30] sm:$0xff]
        %v321 = vld [vmem:[#allocation2 + $0x38] sm:$0xff]
        %v322 = vld [vmem:[%s285] sm:$0xff]
        %v323 = vld [vmem:[%s285 + $0x8] sm:$0xff]
        %v324 = vld [vmem:[%s285 + $0x10] sm:$0xff]
        %v325 = vld [vmem:[%s285 + $0x18] sm:$0xff]
        %v326 = vld [vmem:[%s285 + $0x20] sm:$0xf]
        %v327 = vld [vmem:[%s285 + $0x24] sm:$0xff]
        %v328 = vld [vmem:[%s285 + $0x2c] sm:$0xff]
        %v329 = vld [vmem:[%s285 + $0x34] sm:$0xff]
        %v330 = vld [vmem:[%s285 + $0x3c] sm:$0xff]
        %v331 = vld [vmem:[%s285 + $0x44] sm:$0xf]
        %v332 = vld [vmem:[%s285 + $0x48] sm:$0xff]
        %v333 = vld [vmem:[%s285 + $0x50] sm:$0xff]
        %v334 = vld [vmem:[%s285 + $0x58] sm:$0xff]
        %v335 = vld [vmem:[%s285 + $0x60] sm:$0xff]
        %v336 = vld [vmem:[%s285 + $0x68] sm:$0xf]
        %v337 = vld [vmem:[%s285 + $0x6c] sm:$0xff]
        %v338 = vld [vmem:[%s285 + $0x74] sm:$0xff]
        %v339 = vld [vmem:[%s285 + $0x7c] sm:$0xff]
        %v340 = vld [vmem:[%s285 + $0x84] sm:$0xff]
        %v341 = vld [vmem:[%s285 + $0x8c] sm:$0xf]
        %v342 = vld [vmem:[%s285 + $0x90] sm:$0xff]
        %v343 = vld [vmem:[%s285 + $0x98] sm:$0xff]
        %v344 = vld [vmem:[%s285 + $0xa0] sm:$0xff]
        %v345 = vld [vmem:[%s285 + $0xa8] sm:$0xff]
        %v346 = vld [vmem:[%s285 + $0xb0] sm:$0xf]
        %v347 = vld [vmem:[%s285 + $0xb4] sm:$0xff]
        %v348 = vld [vmem:[%s285 + $0xbc] sm:$0xff]
        %v349 = vld [vmem:[%s285 + $0xc4] sm:$0xff]
        %v350 = vld [vmem:[%s285 + $0xcc] sm:$0xff]
        %v351 = vld [vmem:[%s285 + $0xd4] sm:$0xf]
        %v352 = vld [vmem:[%s285 + $0xd8] sm:$0xff]
        %v353 = vld [vmem:[%s285 + $0xe0] sm:$0xff]
        %v354 = vld [vmem:[%s285 + $0xe8] sm:$0xff]
        %v355 = vld [vmem:[%s285 + $0xf0] sm:$0xff]
        %v356 = vld [vmem:[%s285 + $0xf8] sm:$0xf]
        %v357 = vld [vmem:[%s285 + $0xfc] sm:$0xff]
        %v358 = vld [vmem:[%s285 + $0x104] sm:$0xff]
        %v359 = vld [vmem:[%s285 + $0x10c] sm:$0xff]
        %v360 = vld [vmem:[%s285 + $0x114] sm:$0xff]
        %v361 = vld [vmem:[%s285 + $0x11c] sm:$0xf]
        %v362 = vld [vmem:[%s292] sm:$0xf]
        %v363 = vld [vmem:[%s292 + $0x4] sm:$0xf]
        %v364 = vld [vmem:[%s292 + $0x8] sm:$0xf]
        %v365 = vld [vmem:[%s292 + $0xc] sm:$0xf]
        %v366 = vld [vmem:[%s292 + $0x10] sm:$0xf]
        %v367 = vld [vmem:[%s292 + $0x14] sm:$0xf]
        %v368 = vld [vmem:[%s292 + $0x18] sm:$0xf]
        %v369 = vld [vmem:[%s292 + $0x1c] sm:$0xf]
        %v370 = vld [vmem:[%s292 + $0x20] sm:$0xf]
        %v371 = vld [vmem:[%s292 + $0x24] sm:$0xf]
        %v372 = vld [vmem:[%s292 + $0x28] sm:$0xf]
        %v373 = vld [vmem:[%s292 + $0x2c] sm:$0xf]
        %v374 = vld [vmem:[%s292 + $0x30] sm:$0xf]
        %v375 = vld [vmem:[%s292 + $0x34] sm:$0xf]
        %v376 = vld [vmem:[%s292 + $0x38] sm:$0xf]
        %v377 = vld [vmem:[%s292 + $0x3c] sm:$0xf]
        %v378 = vld [vmem:[%s292 + $0x40] sm:$0xf]
        %v379 = vld [vmem:[%s292 + $0x44] sm:$0xf]
        %v380 = vld [vmem:[%s292 + $0x48] sm:$0xf]
        %v381 = vld [vmem:[%s292 + $0x4c] sm:$0xf]
        %v382 = vld [vmem:[%s292 + $0x50] sm:$0xf]
        %v383 = vld [vmem:[%s292 + $0x54] sm:$0xf]
        %v384 = vld [vmem:[%s292 + $0x58] sm:$0xf]
        %v385 = vld [vmem:[%s292 + $0x5c] sm:$0xf]
        %v386 = vld [vmem:[%s292 + $0x60] sm:$0xf]
        %v387 = vld [vmem:[%s292 + $0x64] sm:$0xf]
        %v388 = vld [vmem:[%s292 + $0x68] sm:$0xf]
        %v389 = vld [vmem:[%s292 + $0x6c] sm:$0xf]
        %v390 = vld [vmem:[%s292 + $0x70] sm:$0xf]
        %v391 = vld [vmem:[%s292 + $0x74] sm:$0xf]
        %v392 = vld [vmem:[%s292 + $0x78] sm:$0xf]
        %v393 = vld [vmem:[%s292 + $0x7c] sm:$0xf]
        %v394 = vld [vmem:[%s292 + $0x80] sm:$0xf]
        %v395 = vld [vmem:[%s292 + $0x84] sm:$0xf]
        %v396 = vld [vmem:[%s292 + $0x88] sm:$0xf]
        %v397 = vld [vmem:[%s292 + $0x8c] sm:$0xf]
        %v398 = vld [vmem:[%s292 + $0x90] sm:$0xf]
        %v399 = vld [vmem:[%s292 + $0x94] sm:$0xf]
        %v400 = vld [vmem:[%s292 + $0x98] sm:$0xf]
        %v401 = vld [vmem:[%s292 + $0x9c] sm:$0xf]
        %v402 = vld [vmem:[%s292 + $0xa0] sm:$0xf]
        %v403 = vld [vmem:[%s292 + $0xa4] sm:$0xf]
        %v404 = vld [vmem:[%s292 + $0xa8] sm:$0xf]
        %v405 = vld [vmem:[%s292 + $0xac] sm:$0xf]
        %v406 = vld [vmem:[%s292 + $0xb0] sm:$0xf]
        %v407 = vld [vmem:[%s292 + $0xb4] sm:$0xf]
        %v408 = vld [vmem:[%s292 + $0xb8] sm:$0xf]
        %v409 = vld [vmem:[%s292 + $0xbc] sm:$0xf]
        %v410 = vld [vmem:[%s292 + $0xc0] sm:$0xf]
        %v411 = vld [vmem:[%s292 + $0xc4] sm:$0xf]
        %v412 = vld [vmem:[%s292 + $0xc8] sm:$0xf]
        %v413 = vld [vmem:[%s292 + $0xcc] sm:$0xf]
        %v414 = vld [vmem:[%s292 + $0xd0] sm:$0xf]
        %v415 = vld [vmem:[%s292 + $0xd4] sm:$0xf]
        %v416 = vld [vmem:[%s292 + $0xd8] sm:$0xf]
        %v417 = vld [vmem:[%s292 + $0xdc] sm:$0xf]
        %v418 = vld [vmem:[%s292 + $0xe0] sm:$0xf]
        %v419 = vld [vmem:[%s292 + $0xe4] sm:$0xf]
        %v420 = vld [vmem:[%s292 + $0xe8] sm:$0xf]
        %v421 = vld [vmem:[%s292 + $0xec] sm:$0xf]
        %v422 = vld [vmem:[%s292 + $0xf0] sm:$0xf]
        %v423 = vld [vmem:[%s292 + $0xf4] sm:$0xf]
        %v424 = vld [vmem:[%s292 + $0xf8] sm:$0xf]
        %v425 = vld [vmem:[%s292 + $0xfc] sm:$0xf]
        %v426 = vld [vmem:[%s292 + $0x100] sm:$0xf]
        %v427 = vld [vmem:[%s292 + $0x104] sm:$0xf]
        %v428 = vld [vmem:[%s292 + $0x108] sm:$0xf]
        %v429 = vld [vmem:[%s292 + $0x10c] sm:$0xf]
        %v430 = vld [vmem:[%s292 + $0x110] sm:$0xf]
        %v431 = vld [vmem:[%s292 + $0x114] sm:$0xf]
        %v432 = vld [vmem:[%s292 + $0x118] sm:$0xf]
        %v433 = vld [vmem:[%s292 + $0x11c] sm:$0xf]
        %v434 = vld [vmem:[%s292 + $0x120] sm:$0xf]
        %v435 = vld [vmem:[%s292 + $0x124] sm:$0xf]
        %v436 = vld [vmem:[%s292 + $0x128] sm:$0xf]
        %v437 = vld [vmem:[%s292 + $0x12c] sm:$0xf]
        %v438 = vld [vmem:[%s292 + $0x130] sm:$0xf]
        %v439 = vld [vmem:[%s292 + $0x134] sm:$0xf]
        %v440 = vld [vmem:[%s292 + $0x138] sm:$0xf]
        %v441 = vld [vmem:[%s292 + $0x13c] sm:$0xf]
        %v442 = vld [vmem:[%s292 + $0x140] sm:$0xf]
        %v443 = vld [vmem:[%s292 + $0x144] sm:$0xf]
        %v444 = vld [vmem:[%s292 + $0x148] sm:$0xf]
        %v445 = vld [vmem:[%s292 + $0x14c] sm:$0xf]
        %v446 = vld [vmem:[%s292 + $0x150] sm:$0xf]
        %v447 = vld [vmem:[%s292 + $0x154] sm:$0xf]
        %v448 = vld [vmem:[%s292 + $0x158] sm:$0xf]
        %v449 = vld [vmem:[%s292 + $0x15c] sm:$0xf]
        %v450 = vld [vmem:[%s292 + $0x160] sm:$0xf]
        %v451 = vld [vmem:[%s292 + $0x164] sm:$0xf]
        %v452 = vld [vmem:[%s292 + $0x168] sm:$0xf]
        %v453 = vld [vmem:[%s292 + $0x16c] sm:$0xf]
        %v454 = vld [vmem:[%s292 + $0x170] sm:$0xf]
        %v455 = vld [vmem:[%s292 + $0x174] sm:$0xf]
        %v456 = vld [vmem:[%s292 + $0x178] sm:$0xf]
        %v457 = vld [vmem:[%s292 + $0x17c] sm:$0xf]
        %v458 = vld [vmem:[%s292 + $0x180] sm:$0xf]
        %v459 = vld [vmem:[%s292 + $0x184] sm:$0xf]
        %v460 = vld [vmem:[%s292 + $0x188] sm:$0xf]
        %v461 = vld [vmem:[%s292 + $0x18c] sm:$0xf]
        %v462 = vld [vmem:[%s292 + $0x190] sm:$0xf]
        %v463 = vld [vmem:[%s292 + $0x194] sm:$0xf]
        %v464 = vld [vmem:[%s292 + $0x198] sm:$0xf]
        %v465 = vld [vmem:[%s292 + $0x19c] sm:$0xf]
        %v466 = vld [vmem:[%s292 + $0x1a0] sm:$0xf]
        %v467 = vld [vmem:[%s292 + $0x1a4] sm:$0xf]
        %v468 = vld [vmem:[%s292 + $0x1a8] sm:$0xf]
        %v469 = vld [vmem:[%s292 + $0x1ac] sm:$0xf]
        %v470 = vld [vmem:[%s292 + $0x1b0] sm:$0xf]
        %v471 = vld [vmem:[%s292 + $0x1b4] sm:$0xf]
        %v472 = vld [vmem:[%s292 + $0x1b8] sm:$0xf]
        %v473 = vld [vmem:[%s292 + $0x1bc] sm:$0xf]
        %v474 = vld [vmem:[%s292 + $0x1c0] sm:$0xf]
        %v475 = vld [vmem:[%s292 + $0x1c4] sm:$0xf]
        %v476 = vld [vmem:[%s292 + $0x1c8] sm:$0xf]
        %v477 = vld [vmem:[%s292 + $0x1cc] sm:$0xf]
        %v478 = vld [vmem:[%s292 + $0x1d0] sm:$0xf]
        %v479 = vld [vmem:[%s292 + $0x1d4] sm:$0xf]
        %v480 = vld [vmem:[%s292 + $0x1d8] sm:$0xf]
        %v481 = vld [vmem:[%s292 + $0x1dc] sm:$0xf]
        %v482 = vld [vmem:[%s292 + $0x1e0] sm:$0xf]
        %v483 = vld [vmem:[%s292 + $0x1e4] sm:$0xf]
        %v484 = vld [vmem:[%s292 + $0x1e8] sm:$0xf]
        %v485 = vld [vmem:[%s292 + $0x1ec] sm:$0xf]
        %v486 = vld [vmem:[%s292 + $0x1f0] sm:$0xf]
        %v487 = vld [vmem:[%s292 + $0x1f4] sm:$0xf]
        %v488 = vld [vmem:[%s292 + $0x1f8] sm:$0xf]
        %v489 = vld [vmem:[%s292 + $0x1fc] sm:$0xf]
        %v490 = vld [vmem:[%s292 + $0x200] sm:$0xf]
        %v491 = vld [vmem:[%s292 + $0x204] sm:$0xf]
        %v492 = vld [vmem:[%s292 + $0x208] sm:$0xf]
        %v493 = vld [vmem:[%s292 + $0x20c] sm:$0xf]
        %v494 = vld [vmem:[%s292 + $0x210] sm:$0xf]
        %v495 = vld [vmem:[%s292 + $0x214] sm:$0xf]
        %v496 = vld [vmem:[%s292 + $0x218] sm:$0xf]
        %v497 = vld [vmem:[%s292 + $0x21c] sm:$0xf]
        %v498 = vld [vmem:[%s292 + $0x220] sm:$0xf]
        %v499 = vld [vmem:[%s292 + $0x224] sm:$0xf]
        %v500 = vld [vmem:[%s292 + $0x228] sm:$0xf]
        %v501 = vld [vmem:[%s292 + $0x22c] sm:$0xf]
        %v502 = vld [vmem:[%s292 + $0x230] sm:$0xf]
        %v503 = vld [vmem:[%s292 + $0x234] sm:$0xf]
        %v504 = vld [vmem:[%s292 + $0x238] sm:$0xf]
        %v505 = vld [vmem:[%s292 + $0x23c] sm:$0xf]
        %v546 = vunpack.c.l.b16 %v322
        %v547 = vunpack.c.h.b16 %v322
        %v548 = vunpack.c.l.b16 %v323
        %v549 = vunpack.c.h.b16 %v323
        %v550 = vunpack.c.l.b16 %v324
        %v551 = vunpack.c.h.b16 %v324
        %v552 = vunpack.c.l.b16 %v325
        %v553 = vunpack.c.h.b16 %v325
        %v554 = vunpack.c.l.b16 %v326
        %v555 = vunpack.c.l.b16 %v327
        %v556 = vunpack.c.h.b16 %v327
        %v557 = vunpack.c.l.b16 %v328
        %v558 = vunpack.c.h.b16 %v328
        %v559 = vunpack.c.l.b16 %v329
        %v560 = vunpack.c.h.b16 %v329
        %v561 = vunpack.c.l.b16 %v330
        %v562 = vunpack.c.h.b16 %v330
        %v563 = vunpack.c.l.b16 %v331
        %v564 = vunpack.c.l.b16 %v332
        %v565 = vunpack.c.h.b16 %v332
        %v566 = vunpack.c.l.b16 %v333
        %v567 = vunpack.c.h.b16 %v333
        %v568 = vunpack.c.l.b16 %v334
        %v569 = vunpack.c.h.b16 %v334
        %v570 = vunpack.c.l.b16 %v335
        %v571 = vunpack.c.h.b16 %v335
        %v572 = vunpack.c.l.b16 %v336
        %v573 = vunpack.c.l.b16 %v337
        %v574 = vunpack.c.h.b16 %v337
        %v575 = vunpack.c.l.b16 %v338
        %v576 = vunpack.c.h.b16 %v338
        %v577 = vunpack.c.l.b16 %v339
        %v578 = vunpack.c.h.b16 %v339
        %v579 = vunpack.c.l.b16 %v340
        %v580 = vunpack.c.h.b16 %v340
        %v581 = vunpack.c.l.b16 %v341
        %v582 = vunpack.c.l.b16 %v342
        %v583 = vunpack.c.h.b16 %v342
        %v584 = vunpack.c.l.b16 %v343
        %v585 = vunpack.c.h.b16 %v343
        %v586 = vunpack.c.l.b16 %v344
        %v587 = vunpack.c.h.b16 %v344
        %v588 = vunpack.c.l.b16 %v345
        %v589 = vunpack.c.h.b16 %v345
        %v590 = vunpack.c.l.b16 %v346
        %v591 = vunpack.c.l.b16 %v347
        %v592 = vunpack.c.h.b16 %v347
        %v593 = vunpack.c.l.b16 %v348
        %v594 = vunpack.c.h.b16 %v348
        %v595 = vunpack.c.l.b16 %v349
        %v596 = vunpack.c.h.b16 %v349
        %v597 = vunpack.c.l.b16 %v350
        %v598 = vunpack.c.h.b16 %v350
        %v599 = vunpack.c.l.b16 %v351
        %v600 = vunpack.c.l.b16 %v352
        %v601 = vunpack.c.h.b16 %v352
        %v602 = vunpack.c.l.b16 %v353
        %v603 = vunpack.c.h.b16 %v353
        %v604 = vunpack.c.l.b16 %v354
        %v605 = vunpack.c.h.b16 %v354
        %v606 = vunpack.c.l.b16 %v355
        %v607 = vunpack.c.h.b16 %v355
        %v608 = vunpack.c.l.b16 %v356
        %v609 = vunpack.c.l.b16 %v357
        %v610 = vunpack.c.h.b16 %v357
        %v611 = vunpack.c.l.b16 %v358
        %v612 = vunpack.c.h.b16 %v358
        %v613 = vunpack.c.l.b16 %v359
        %v614 = vunpack.c.h.b16 %v359
        %v615 = vunpack.c.l.b16 %v360
        %v616 = vunpack.c.h.b16 %v360
        %v617 = vunpack.c.l.b16 %v361
        %v618 = vpack.c.b16 %v555, %v546
        %v619 = vpack.c.b16 %v556, %v547
        %v620 = vpack.c.b16 %v557, %v548
        %v621 = vpack.c.b16 %v558, %v549
        %v622 = vpack.c.b16 %v559, %v550
        %v623 = vpack.c.b16 %v560, %v551
        %v624 = vpack.c.b16 %v561, %v552
        %v625 = vpack.c.b16 %v562, %v553
        %v626 = vpack.c.b16 %v563, %v554
        %v627 = vpack.c.b16 %v573, %v564
        %v628 = vpack.c.b16 %v574, %v565
        %v629 = vpack.c.b16 %v575, %v566
        %v630 = vpack.c.b16 %v576, %v567
        %v631 = vpack.c.b16 %v577, %v568
        %v632 = vpack.c.b16 %v578, %v569
        %v633 = vpack.c.b16 %v579, %v570
        %v634 = vpack.c.b16 %v580, %v571
        %v635 = vpack.c.b16 %v581, %v572
        %v636 = vpack.c.b16 %v591, %v582
        %v637 = vpack.c.b16 %v592, %v583
        %v638 = vpack.c.b16 %v593, %v584
        %v639 = vpack.c.b16 %v594, %v585
        %v640 = vpack.c.b16 %v595, %v586
        %v641 = vpack.c.b16 %v596, %v587
        %v642 = vpack.c.b16 %v597, %v588
        %v643 = vpack.c.b16 %v598, %v589
        %v644 = vpack.c.b16 %v599, %v590
        %v645 = vpack.c.b16 %v609, %v600
        %v646 = vpack.c.b16 %v610, %v601
        %v647 = vpack.c.b16 %v611, %v602
        %v648 = vpack.c.b16 %v612, %v603
        %v649 = vpack.c.b16 %v613, %v604
        %v650 = vpack.c.b16 %v614, %v605
        %v651 = vpack.c.b16 %v615, %v606
        %v652 = vpack.c.b16 %v616, %v607
        %v653 = vpack.c.b16 %v617, %v608
        %v834 = vunpack.c.l.b16 %v362
        %v835 = vunpack.c.l.b16 %v363
        %v836 = vunpack.c.l.b16 %v364
        %v837 = vunpack.c.l.b16 %v365
        %v838 = vunpack.c.l.b16 %v366
        %v839 = vunpack.c.l.b16 %v367
        %v840 = vunpack.c.l.b16 %v368
        %v841 = vunpack.c.l.b16 %v369
        %v842 = vunpack.c.l.b16 %v370
        %v843 = vunpack.c.l.b16 %v371
        %v844 = vunpack.c.l.b16 %v372
        %v845 = vunpack.c.l.b16 %v373
        %v846 = vunpack.c.l.b16 %v374
        %v847 = vunpack.c.l.b16 %v375
        %v848 = vunpack.c.l.b16 %v376
        %v849 = vunpack.c.l.b16 %v377
        %v850 = vunpack.c.l.b16 %v378
        %v851 = vunpack.c.l.b16 %v379
        %v852 = vunpack.c.l.b16 %v380
        %v853 = vunpack.c.l.b16 %v381
        %v854 = vunpack.c.l.b16 %v382
        %v855 = vunpack.c.l.b16 %v383
        %v856 = vunpack.c.l.b16 %v384
        %v857 = vunpack.c.l.b16 %v385
        %v858 = vunpack.c.l.b16 %v386
        %v859 = vunpack.c.l.b16 %v387
        %v860 = vunpack.c.l.b16 %v388
        %v861 = vunpack.c.l.b16 %v389
        %v862 = vunpack.c.l.b16 %v390
        %v863 = vunpack.c.l.b16 %v391
        %v864 = vunpack.c.l.b16 %v392
        %v865 = vunpack.c.l.b16 %v393
        %v866 = vunpack.c.l.b16 %v394
        %v867 = vunpack.c.l.b16 %v395
        %v868 = vunpack.c.l.b16 %v396
        %v869 = vunpack.c.l.b16 %v397
        %v870 = vunpack.c.l.b16 %v398
        %v871 = vunpack.c.l.b16 %v399
        %v872 = vunpack.c.l.b16 %v400
        %v873 = vunpack.c.l.b16 %v401
        %v874 = vunpack.c.l.b16 %v402
        %v875 = vunpack.c.l.b16 %v403
        %v876 = vunpack.c.l.b16 %v404
        %v877 = vunpack.c.l.b16 %v405
        %v878 = vunpack.c.l.b16 %v406
        %v879 = vunpack.c.l.b16 %v407
        %v880 = vunpack.c.l.b16 %v408
        %v881 = vunpack.c.l.b16 %v409
        %v882 = vunpack.c.l.b16 %v410
        %v883 = vunpack.c.l.b16 %v411
        %v884 = vunpack.c.l.b16 %v412
        %v885 = vunpack.c.l.b16 %v413
        %v886 = vunpack.c.l.b16 %v414
        %v887 = vunpack.c.l.b16 %v415
        %v888 = vunpack.c.l.b16 %v416
        %v889 = vunpack.c.l.b16 %v417
        %v890 = vunpack.c.l.b16 %v418
        %v891 = vunpack.c.l.b16 %v419
        %v892 = vunpack.c.l.b16 %v420
        %v893 = vunpack.c.l.b16 %v421
        %v894 = vunpack.c.l.b16 %v422
        %v895 = vunpack.c.l.b16 %v423
        %v896 = vunpack.c.l.b16 %v424
        %v897 = vunpack.c.l.b16 %v425
        %v898 = vunpack.c.l.b16 %v426
        %v899 = vunpack.c.l.b16 %v427
        %v900 = vunpack.c.l.b16 %v428
        %v901 = vunpack.c.l.b16 %v429
        %v902 = vunpack.c.l.b16 %v430
        %v903 = vunpack.c.l.b16 %v431
        %v904 = vunpack.c.l.b16 %v432
        %v905 = vunpack.c.l.b16 %v433
        %v906 = vunpack.c.l.b16 %v434
        %v907 = vunpack.c.l.b16 %v435
        %v908 = vunpack.c.l.b16 %v436
        %v909 = vunpack.c.l.b16 %v437
        %v910 = vunpack.c.l.b16 %v438
        %v911 = vunpack.c.l.b16 %v439
        %v912 = vunpack.c.l.b16 %v440
        %v913 = vunpack.c.l.b16 %v441
        %v914 = vunpack.c.l.b16 %v442
        %v915 = vunpack.c.l.b16 %v443
        %v916 = vunpack.c.l.b16 %v444
        %v917 = vunpack.c.l.b16 %v445
        %v918 = vunpack.c.l.b16 %v446
        %v919 = vunpack.c.l.b16 %v447
        %v920 = vunpack.c.l.b16 %v448
        %v921 = vunpack.c.l.b16 %v449
        %v922 = vunpack.c.l.b16 %v450
        %v923 = vunpack.c.l.b16 %v451
        %v924 = vunpack.c.l.b16 %v452
        %v925 = vunpack.c.l.b16 %v453
        %v926 = vunpack.c.l.b16 %v454
        %v927 = vunpack.c.l.b16 %v455
        %v928 = vunpack.c.l.b16 %v456
        %v929 = vunpack.c.l.b16 %v457
        %v930 = vunpack.c.l.b16 %v458
        %v931 = vunpack.c.l.b16 %v459
        %v932 = vunpack.c.l.b16 %v460
        %v933 = vunpack.c.l.b16 %v461
        %v934 = vunpack.c.l.b16 %v462
        %v935 = vunpack.c.l.b16 %v463
        %v936 = vunpack.c.l.b16 %v464
        %v937 = vunpack.c.l.b16 %v465
        %v938 = vunpack.c.l.b16 %v466
        %v939 = vunpack.c.l.b16 %v467
        %v940 = vunpack.c.l.b16 %v468
        %v941 = vunpack.c.l.b16 %v469
        %v942 = vunpack.c.l.b16 %v470
        %v943 = vunpack.c.l.b16 %v471
        %v944 = vunpack.c.l.b16 %v472
        %v945 = vunpack.c.l.b16 %v473
        %v946 = vunpack.c.l.b16 %v474
        %v947 = vunpack.c.l.b16 %v475
        %v948 = vunpack.c.l.b16 %v476
        %v949 = vunpack.c.l.b16 %v477
        %v950 = vunpack.c.l.b16 %v478
        %v951 = vunpack.c.l.b16 %v479
        %v952 = vunpack.c.l.b16 %v480
        %v953 = vunpack.c.l.b16 %v481
        %v954 = vunpack.c.l.b16 %v482
        %v955 = vunpack.c.l.b16 %v483
        %v956 = vunpack.c.l.b16 %v484
        %v957 = vunpack.c.l.b16 %v485
        %v958 = vunpack.c.l.b16 %v486
        %v959 = vunpack.c.l.b16 %v487
        %v960 = vunpack.c.l.b16 %v488
        %v961 = vunpack.c.l.b16 %v489
        %v962 = vunpack.c.l.b16 %v490
        %v963 = vunpack.c.l.b16 %v491
        %v964 = vunpack.c.l.b16 %v492
        %v965 = vunpack.c.l.b16 %v493
        %v966 = vunpack.c.l.b16 %v494
        %v967 = vunpack.c.l.b16 %v495
        %v968 = vunpack.c.l.b16 %v496
        %v969 = vunpack.c.l.b16 %v497
        %v970 = vunpack.c.l.b16 %v498
        %v971 = vunpack.c.l.b16 %v499
        %v972 = vunpack.c.l.b16 %v500
        %v973 = vunpack.c.l.b16 %v501
        %v974 = vunpack.c.l.b16 %v502
        %v975 = vunpack.c.l.b16 %v503
        %v976 = vunpack.c.l.b16 %v504
        %v977 = vunpack.c.l.b16 %v505
        %v978 = vpack.c.b16 %v835, %v834
        %v979 = vpack.c.b16 %v837, %v836
        %v980 = vpack.c.b16 %v839, %v838
        %v981 = vpack.c.b16 %v841, %v840
        %v982 = vpack.c.b16 %v843, %v842
        %v983 = vpack.c.b16 %v845, %v844
        %v984 = vpack.c.b16 %v847, %v846
        %v985 = vpack.c.b16 %v849, %v848
        %v986 = vpack.c.b16 %v851, %v850
        %v987 = vpack.c.b16 %v853, %v852
        %v988 = vpack.c.b16 %v855, %v854
        %v989 = vpack.c.b16 %v857, %v856
        %v990 = vpack.c.b16 %v859, %v858
        %v991 = vpack.c.b16 %v861, %v860
        %v992 = vpack.c.b16 %v863, %v862
        %v993 = vpack.c.b16 %v865, %v864
        %v994 = vpack.c.b16 %v867, %v866
        %v995 = vpack.c.b16 %v869, %v868
        %v996 = vpack.c.b16 %v871, %v870
        %v997 = vpack.c.b16 %v873, %v872
        %v998 = vpack.c.b16 %v875, %v874
        %v999 = vpack.c.b16 %v877, %v876
        %v1000 = vpack.c.b16 %v879, %v878
        %v1001 = vpack.c.b16 %v881, %v880
        %v1002 = vpack.c.b16 %v883, %v882
        %v1003 = vpack.c.b16 %v885, %v884
        %v1004 = vpack.c.b16 %v887, %v886
        %v1005 = vpack.c.b16 %v889, %v888
        %v1006 = vpack.c.b16 %v891, %v890
        %v1007 = vpack.c.b16 %v893, %v892
        %v1008 = vpack.c.b16 %v895, %v894
        %v1009 = vpack.c.b16 %v897, %v896
        %v1010 = vpack.c.b16 %v899, %v898
        %v1011 = vpack.c.b16 %v901, %v900
        %v1012 = vpack.c.b16 %v903, %v902
        %v1013 = vpack.c.b16 %v905, %v904
        %v1014 = vpack.c.b16 %v907, %v906
        %v1015 = vpack.c.b16 %v909, %v908
        %v1016 = vpack.c.b16 %v911, %v910
        %v1017 = vpack.c.b16 %v913, %v912
        %v1018 = vpack.c.b16 %v915, %v914
        %v1019 = vpack.c.b16 %v917, %v916
        %v1020 = vpack.c.b16 %v919, %v918
        %v1021 = vpack.c.b16 %v921, %v920
        %v1022 = vpack.c.b16 %v923, %v922
        %v1023 = vpack.c.b16 %v925, %v924
        %v1024 = vpack.c.b16 %v927, %v926
        %v1025 = vpack.c.b16 %v929, %v928
        %v1026 = vpack.c.b16 %v931, %v930
        %v1027 = vpack.c.b16 %v933, %v932
        %v1028 = vpack.c.b16 %v935, %v934
        %v1029 = vpack.c.b16 %v937, %v936
        %v1030 = vpack.c.b16 %v939, %v938
        %v1031 = vpack.c.b16 %v941, %v940
        %v1032 = vpack.c.b16 %v943, %v942
        %v1033 = vpack.c.b16 %v945, %v944
        %v1034 = vpack.c.b16 %v947, %v946
        %v1035 = vpack.c.b16 %v949, %v948
        %v1036 = vpack.c.b16 %v951, %v950
        %v1037 = vpack.c.b16 %v953, %v952
        %v1038 = vpack.c.b16 %v955, %v954
        %v1039 = vpack.c.b16 %v957, %v956
        %v1040 = vpack.c.b16 %v959, %v958
        %v1041 = vpack.c.b16 %v961, %v960
        %v1042 = vpack.c.b16 %v963, %v962
        %v1043 = vpack.c.b16 %v965, %v964
        %v1044 = vpack.c.b16 %v967, %v966
        %v1045 = vpack.c.b16 %v969, %v968
        %v1046 = vpack.c.b16 %v971, %v970
        %v1047 = vpack.c.b16 %v973, %v972
        %v1048 = vpack.c.b16 %v975, %v974
        %v1049 = vpack.c.b16 %v977, %v976
        %1122 = vmatprep.subr.bf16.mxu0 0
        %1123 = vmatpush1.bf16.msra.mxu0 %v985
        %1124 = vmatprep.subr.bf16.mxu0 0
        %1125 = vmatpush1.bf16.msra.mxu0 %v984
        %1126 = vmatprep.subr.bf16.mxu0 0
        %1127 = vmatpush1.bf16.msra.mxu0 %v983
        %1128 = vmatprep.subr.bf16.mxu0 0
        %1129 = vmatpush1.bf16.msra.mxu0 %v982
        %1130 = vmatprep.subr.bf16.mxu0 0
        %1131 = vmatpush1.bf16.msra.mxu0 %v981
        %1132 = vmatprep.subr.bf16.mxu0 0
        %1133 = vmatpush1.bf16.msra.mxu0 %v980
        %1134 = vmatprep.subr.bf16.mxu0 0
        %1135 = vmatpush1.bf16.msra.mxu0 %v979
        %1136 = vmatprep.subr.bf16.mxu0 0
        %1137 = vmatpush1.bf16.msra.mxu0 %v978
        %1138 = vmatprep.subr.bf16.mxu0 0
        %1139 = vmatpush2.bf16.msra.mxu0 %v993
        %1140 = vmatprep.subr.bf16.mxu0 0
        %1141 = vmatpush2.bf16.msra.mxu0 %v992
        %1142 = vmatprep.subr.bf16.mxu0 0
        %1143 = vmatpush2.bf16.msra.mxu0 %v991
        %1144 = vmatprep.subr.bf16.mxu0 0
        %1145 = vmatpush2.bf16.msra.mxu0 %v990
        %1146 = vmatprep.subr.bf16.mxu0 0
        %1147 = vmatpush2.bf16.msra.mxu0 %v989
        %1148 = vmatprep.subr.bf16.mxu0 0
        %1149 = vmatpush2.bf16.msra.mxu0 %v988
        %1150 = vmatprep.subr.bf16.mxu0 0
        %1151 = vmatpush2.bf16.msra.mxu0 %v987
        %1152 = vmatprep.subr.bf16.mxu0 0
        %1153 = vmatpush2.bf16.msra.mxu0 %v986
        %1154 = vmatprep.mubr.bf16.mxu0 %v619
        %1155 = vmatmul.mubr.bf16.gmra.mxu0 %v618
        %v1156 = vpop.f32.mrf.mxu0
        %v1157 = vadd.f32 0.0, %v1156
        %v1158 = vpop.f32.mrf.mxu0
        %v1159 = vpop.f32.mrf.mxu0
        %v1160 = vadd.f32 0.0, %v1159
        %v1161 = vpop.f32.mrf.mxu0
        %1162 = vmatprep.mubr.bf16.mxu0 %v628
        %1163 = vmatmul.mubr.bf16.gmra.mxu0 %v627
        %v1164 = vpop.f32.mrf.mxu0
        %v1165 = vadd.f32 0.0, %v1164
        %v1166 = vpop.f32.mrf.mxu0
        %v1167 = vpop.f32.mrf.mxu0
        %v1168 = vadd.f32 0.0, %v1167
        %v1169 = vpop.f32.mrf.mxu0
        %1170 = vmatprep.mubr.bf16.mxu0 %v637
        %1171 = vmatmul.mubr.bf16.gmra.mxu0 %v636
        %v1172 = vpop.f32.mrf.mxu0
        %v1173 = vadd.f32 0.0, %v1172
        %v1174 = vpop.f32.mrf.mxu0
        %v1175 = vpop.f32.mrf.mxu0
        %v1176 = vadd.f32 0.0, %v1175
        %v1177 = vpop.f32.mrf.mxu0
        %1178 = vmatprep.mubr.bf16.mxu0 %v646
        %1179 = vmatmul.mubr.bf16.gmra.mxu0 %v645
        %v1180 = vpop.f32.mrf.mxu0
        %v1181 = vadd.f32 0.0, %v1180
        %v1182 = vpop.f32.mrf.mxu0
        %v1183 = vpop.f32.mrf.mxu0
        %v1184 = vadd.f32 0.0, %v1183
        %v1185 = vpop.f32.mrf.mxu0
        %1186 = vdwg.mxu0
        %1187 = vmatprep.subr.bf16.mxu0 0
        %1188 = vmatpush1.bf16.msra.mxu0 %v1001
        %1189 = vmatprep.subr.bf16.mxu0 0
        %1190 = vmatpush1.bf16.msra.mxu0 %v1000
        %1191 = vmatprep.subr.bf16.mxu0 0
        %1192 = vmatpush1.bf16.msra.mxu0 %v999
        %1193 = vmatprep.subr.bf16.mxu0 0
        %1194 = vmatpush1.bf16.msra.mxu0 %v998
        %1195 = vmatprep.subr.bf16.mxu0 0
        %1196 = vmatpush1.bf16.msra.mxu0 %v997
        %1197 = vmatprep.subr.bf16.mxu0 0
        %1198 = vmatpush1.bf16.msra.mxu0 %v996
        %1199 = vmatprep.subr.bf16.mxu0 0
        %1200 = vmatpush1.bf16.msra.mxu0 %v995
        %1201 = vmatprep.subr.bf16.mxu0 0
        %1202 = vmatpush1.bf16.msra.mxu0 %v994
        %1203 = vmatprep.subr.bf16.mxu0 0
        %1204 = vmatpush2.bf16.msra.mxu0 %v1009
        %1205 = vmatprep.subr.bf16.mxu0 0
        %1206 = vmatpush2.bf16.msra.mxu0 %v1008
        %1207 = vmatprep.subr.bf16.mxu0 0
        %1208 = vmatpush2.bf16.msra.mxu0 %v1007
        %1209 = vmatprep.subr.bf16.mxu0 0
        %1210 = vmatpush2.bf16.msra.mxu0 %v1006
        %1211 = vmatprep.subr.bf16.mxu0 0
        %1212 = vmatpush2.bf16.msra.mxu0 %v1005
        %1213 = vmatprep.subr.bf16.mxu0 0
        %1214 = vmatpush2.bf16.msra.mxu0 %v1004
        %1215 = vmatprep.subr.bf16.mxu0 0
        %1216 = vmatpush2.bf16.msra.mxu0 %v1003
        %1217 = vmatprep.subr.bf16.mxu0 0
        %1218 = vmatpush2.bf16.msra.mxu0 %v1002
        %1219 = vmatprep.mubr.bf16.mxu0 %v621
        %1220 = vmatmul.mubr.bf16.gmra.mxu0 %v620
        %v1221 = vpop.f32.mrf.mxu0
        %v1222 = vadd.f32 %v1157, %v1221
        %v1223 = vpop.f32.mrf.mxu0
        %v1224 = vpop.f32.mrf.mxu0
        %v1225 = vadd.f32 %v1160, %v1224
        %v1226 = vpop.f32.mrf.mxu0
        %1227 = vmatprep.mubr.bf16.mxu0 %v630
        %1228 = vmatmul.mubr.bf16.gmra.mxu0 %v629
        %v1229 = vpop.f32.mrf.mxu0
        %v1230 = vadd.f32 %v1165, %v1229
        %v1231 = vpop.f32.mrf.mxu0
        %v1232 = vpop.f32.mrf.mxu0
        %v1233 = vadd.f32 %v1168, %v1232
        %v1234 = vpop.f32.mrf.mxu0
        %1235 = vmatprep.mubr.bf16.mxu0 %v639
        %1236 = vmatmul.mubr.bf16.gmra.mxu0 %v638
        %v1237 = vpop.f32.mrf.mxu0
        %v1238 = vadd.f32 %v1173, %v1237
        %v1239 = vpop.f32.mrf.mxu0
        %v1240 = vpop.f32.mrf.mxu0
        %v1241 = vadd.f32 %v1176, %v1240
        %v1242 = vpop.f32.mrf.mxu0
        %1243 = vmatprep.mubr.bf16.mxu0 %v648
        %1244 = vmatmul.mubr.bf16.gmra.mxu0 %v647
        %v1245 = vpop.f32.mrf.mxu0
        %v1246 = vadd.f32 %v1181, %v1245
        %v1247 = vpop.f32.mrf.mxu0
        %v1248 = vpop.f32.mrf.mxu0
        %v1249 = vadd.f32 %v1184, %v1248
        %v1250 = vpop.f32.mrf.mxu0
        %1251 = vdwg.mxu0
        %1252 = vmatprep.subr.bf16.mxu0 0
        %1253 = vmatpush1.bf16.msra.mxu0 %v1017
        %1254 = vmatprep.subr.bf16.mxu0 0
        %1255 = vmatpush1.bf16.msra.mxu0 %v1016
        %1256 = vmatprep.subr.bf16.mxu0 0
        %1257 = vmatpush1.bf16.msra.mxu0 %v1015
        %1258 = vmatprep.subr.bf16.mxu0 0
        %1259 = vmatpush1.bf16.msra.mxu0 %v1014
        %1260 = vmatprep.subr.bf16.mxu0 0
        %1261 = vmatpush1.bf16.msra.mxu0 %v1013
        %1262 = vmatprep.subr.bf16.mxu0 0
        %1263 = vmatpush1.bf16.msra.mxu0 %v1012
        %1264 = vmatprep.subr.bf16.mxu0 0
        %1265 = vmatpush1.bf16.msra.mxu0 %v1011
        %1266 = vmatprep.subr.bf16.mxu0 0
        %1267 = vmatpush1.bf16.msra.mxu0 %v1010
        %1268 = vmatprep.subr.bf16.mxu0 0
        %1269 = vmatpush2.bf16.msra.mxu0 %v1025
        %1270 = vmatprep.subr.bf16.mxu0 0
        %1271 = vmatpush2.bf16.msra.mxu0 %v1024
        %1272 = vmatprep.subr.bf16.mxu0 0
        %1273 = vmatpush2.bf16.msra.mxu0 %v1023
        %1274 = vmatprep.subr.bf16.mxu0 0
        %1275 = vmatpush2.bf16.msra.mxu0 %v1022
        %1276 = vmatprep.subr.bf16.mxu0 0
        %1277 = vmatpush2.bf16.msra.mxu0 %v1021
        %1278 = vmatprep.subr.bf16.mxu0 0
        %1279 = vmatpush2.bf16.msra.mxu0 %v1020
        %1280 = vmatprep.subr.bf16.mxu0 0
        %1281 = vmatpush2.bf16.msra.mxu0 %v1019
        %1282 = vmatprep.subr.bf16.mxu0 0
        %1283 = vmatpush2.bf16.msra.mxu0 %v1018
        %1284 = vmatprep.mubr.bf16.mxu0 %v623
        %1285 = vmatmul.mubr.bf16.gmra.mxu0 %v622
        %v1286 = vpop.f32.mrf.mxu0
        %v1287 = vadd.f32 %v1222, %v1286
        %v1288 = vpop.f32.mrf.mxu0
        %v1289 = vpop.f32.mrf.mxu0
        %v1290 = vadd.f32 %v1225, %v1289
        %v1291 = vpop.f32.mrf.mxu0
        %1292 = vmatprep.mubr.bf16.mxu0 %v632
        %1293 = vmatmul.mubr.bf16.gmra.mxu0 %v631
        %v1294 = vpop.f32.mrf.mxu0
        %v1295 = vadd.f32 %v1230, %v1294
        %v1296 = vpop.f32.mrf.mxu0
        %v1297 = vpop.f32.mrf.mxu0
        %v1298 = vadd.f32 %v1233, %v1297
        %v1299 = vpop.f32.mrf.mxu0
        %1300 = vmatprep.mubr.bf16.mxu0 %v641
        %1301 = vmatmul.mubr.bf16.gmra.mxu0 %v640
        %v1302 = vpop.f32.mrf.mxu0
        %v1303 = vadd.f32 %v1238, %v1302
        %v1304 = vpop.f32.mrf.mxu0
        %v1305 = vpop.f32.mrf.mxu0
        %v1306 = vadd.f32 %v1241, %v1305
        %v1307 = vpop.f32.mrf.mxu0
        %1308 = vmatprep.mubr.bf16.mxu0 %v650
        %1309 = vmatmul.mubr.bf16.gmra.mxu0 %v649
        %v1310 = vpop.f32.mrf.mxu0
        %v1311 = vadd.f32 %v1246, %v1310
        %v1312 = vpop.f32.mrf.mxu0
        %v1313 = vpop.f32.mrf.mxu0
        %v1314 = vadd.f32 %v1249, %v1313
        %v1315 = vpop.f32.mrf.mxu0
        %1316 = vdwg.mxu0
        %1317 = vmatprep.subr.bf16.mxu0 0
        %1318 = vmatpush1.bf16.msra.mxu0 %v1033
        %1319 = vmatprep.subr.bf16.mxu0 0
        %1320 = vmatpush1.bf16.msra.mxu0 %v1032
        %1321 = vmatprep.subr.bf16.mxu0 0
        %1322 = vmatpush1.bf16.msra.mxu0 %v1031
        %1323 = vmatprep.subr.bf16.mxu0 0
        %1324 = vmatpush1.bf16.msra.mxu0 %v1030
        %1325 = vmatprep.subr.bf16.mxu0 0
        %1326 = vmatpush1.bf16.msra.mxu0 %v1029
        %1327 = vmatprep.subr.bf16.mxu0 0
        %1328 = vmatpush1.bf16.msra.mxu0 %v1028
        %1329 = vmatprep.subr.bf16.mxu0 0
        %1330 = vmatpush1.bf16.msra.mxu0 %v1027
        %1331 = vmatprep.subr.bf16.mxu0 0
        %1332 = vmatpush1.bf16.msra.mxu0 %v1026
        %1333 = vmatprep.subr.bf16.mxu0 0
        %1334 = vmatpush2.bf16.msra.mxu0 %v1041
        %1335 = vmatprep.subr.bf16.mxu0 0
        %1336 = vmatpush2.bf16.msra.mxu0 %v1040
        %1337 = vmatprep.subr.bf16.mxu0 0
        %1338 = vmatpush2.bf16.msra.mxu0 %v1039
        %1339 = vmatprep.subr.bf16.mxu0 0
        %1340 = vmatpush2.bf16.msra.mxu0 %v1038
        %1341 = vmatprep.subr.bf16.mxu0 0
        %1342 = vmatpush2.bf16.msra.mxu0 %v1037
        %1343 = vmatprep.subr.bf16.mxu0 0
        %1344 = vmatpush2.bf16.msra.mxu0 %v1036
        %1345 = vmatprep.subr.bf16.mxu0 0
        %1346 = vmatpush2.bf16.msra.mxu0 %v1035
        %1347 = vmatprep.subr.bf16.mxu0 0
        %1348 = vmatpush2.bf16.msra.mxu0 %v1034
        %1349 = vmatprep.mubr.bf16.mxu0 %v625
        %1350 = vmatmul.mubr.bf16.gmra.mxu0 %v624
        %v1351 = vpop.f32.mrf.mxu0
        %v1352 = vadd.f32 %v1287, %v1351
        %v1353 = vpop.f32.mrf.mxu0
        %v1354 = vpop.f32.mrf.mxu0
        %v1355 = vadd.f32 %v1290, %v1354
        %v1356 = vpop.f32.mrf.mxu0
        %1357 = vmatprep.mubr.bf16.mxu0 %v634
        %1358 = vmatmul.mubr.bf16.gmra.mxu0 %v633
        %v1359 = vpop.f32.mrf.mxu0
        %v1360 = vadd.f32 %v1295, %v1359
        %v1361 = vpop.f32.mrf.mxu0
        %v1362 = vpop.f32.mrf.mxu0
        %v1363 = vadd.f32 %v1298, %v1362
        %v1364 = vpop.f32.mrf.mxu0
        %1365 = vmatprep.mubr.bf16.mxu0 %v643
        %1366 = vmatmul.mubr.bf16.gmra.mxu0 %v642
        %v1367 = vpop.f32.mrf.mxu0
        %v1368 = vadd.f32 %v1303, %v1367
        %v1369 = vpop.f32.mrf.mxu0
        %v1370 = vpop.f32.mrf.mxu0
        %v1371 = vadd.f32 %v1306, %v1370
        %v1372 = vpop.f32.mrf.mxu0
        %1373 = vmatprep.mubr.bf16.mxu0 %v652
        %1374 = vmatmul.mubr.bf16.gmra.mxu0 %v651
        %v1375 = vpop.f32.mrf.mxu0
        %v1376 = vadd.f32 %v1311, %v1375
        %v1377 = vpop.f32.mrf.mxu0
        %v1378 = vpop.f32.mrf.mxu0
        %v1379 = vadd.f32 %v1314, %v1378
        %v1380 = vpop.f32.mrf.mxu0
        %1381 = vdwg.mxu0
        %1382 = vmatprep.subr.bf16.mxu0 0
        %1383 = vmatpush1.bf16.msra.mxu0 %v1049
        %1384 = vmatprep.subr.bf16.mxu0 0
        %1385 = vmatpush1.bf16.msra.mxu0 %v1048
        %1386 = vmatprep.subr.bf16.mxu0 0
        %1387 = vmatpush1.bf16.msra.mxu0 %v1047
        %1388 = vmatprep.subr.bf16.mxu0 0
        %1389 = vmatpush1.bf16.msra.mxu0 %v1046
        %1390 = vmatprep.subr.bf16.mxu0 0
        %1391 = vmatpush1.bf16.msra.mxu0 %v1045
        %1392 = vmatprep.subr.bf16.mxu0 0
        %1393 = vmatpush1.bf16.msra.mxu0 %v1044
        %1394 = vmatprep.subr.bf16.mxu0 0
        %1395 = vmatpush1.bf16.msra.mxu0 %v1043
        %1396 = vmatprep.subr.bf16.mxu0 0
        %1397 = vmatpush1.bf16.msra.mxu0 %v1042
        %1398 = vmatprep.subr.bf16.mxu0 0
        %1399 = vmatpush2.bf16.msra.mxu0 0
        %1400 = vmatprep.subr.bf16.mxu0 0
        %1401 = vmatpush2.bf16.msra.mxu0 0
        %1402 = vmatprep.subr.bf16.mxu0 0
        %1403 = vmatpush2.bf16.msra.mxu0 0
        %1404 = vmatprep.subr.bf16.mxu0 0
        %1405 = vmatpush2.bf16.msra.mxu0 0
        %1406 = vmatprep.subr.bf16.mxu0 0
        %1407 = vmatpush2.bf16.msra.mxu0 0
        %1408 = vmatprep.subr.bf16.mxu0 0
        %1409 = vmatpush2.bf16.msra.mxu0 0
        %1410 = vmatprep.subr.bf16.mxu0 0
        %1411 = vmatpush2.bf16.msra.mxu0 0
        %1412 = vmatprep.subr.bf16.mxu0 0
        %1413 = vmatpush2.bf16.msra.mxu0 0
        %1414 = vmatprep.mubr.bf16.mxu0 0
        %1415 = vmatmul.mubr.bf16.gmra.mxu0 %v626
        %v1416 = vpop.f32.mrf.mxu0
        %v1417 = vadd.f32 %v1352, %v1416
        %v1418 = vpop.f32.mrf.mxu0
        %v1419 = vpop.f32.mrf.mxu0
        %v1420 = vadd.f32 %v1355, %v1419
        %v1421 = vpop.f32.mrf.mxu0
        %1422 = vmatprep.mubr.bf16.mxu0 0
        %1423 = vmatmul.mubr.bf16.gmra.mxu0 %v635
        %v1424 = vpop.f32.mrf.mxu0
        %v1425 = vadd.f32 %v1360, %v1424
        %v1426 = vpop.f32.mrf.mxu0
        %v1427 = vpop.f32.mrf.mxu0
        %v1428 = vadd.f32 %v1363, %v1427
        %v1429 = vpop.f32.mrf.mxu0
        %1430 = vmatprep.mubr.bf16.mxu0 0
        %1431 = vmatmul.mubr.bf16.gmra.mxu0 %v644
        %v1432 = vpop.f32.mrf.mxu0
        %v1433 = vadd.f32 %v1368, %v1432
        %v1434 = vpop.f32.mrf.mxu0
        %v1435 = vpop.f32.mrf.mxu0
        %v1436 = vadd.f32 %v1371, %v1435
        %v1437 = vpop.f32.mrf.mxu0
        %1438 = vmatprep.mubr.bf16.mxu0 0
        %1439 = vmatmul.mubr.bf16.gmra.mxu0 %v653
        %v1440 = vpop.f32.mrf.mxu0
        %v1441 = vadd.f32 %v1376, %v1440
        %v1442 = vpop.f32.mrf.mxu0
        %v1443 = vpop.f32.mrf.mxu0
        %v1444 = vadd.f32 %v1379, %v1443
        %v1445 = vpop.f32.mrf.mxu0
        %1446 = vdwg.mxu0
        %v1447 = vadd.f32 %v314, %v1417
        %v1448 = vadd.f32 %v315, %v1420
        %v1449 = vadd.f32 %v316, %v1425
        %v1450 = vadd.f32 %v317, %v1428
        %v1451 = vadd.f32 %v318, %v1433
        %v1452 = vadd.f32 %v319, %v1436
        %v1453 = vadd.f32 %v320, %v1441
        %v1454 = vadd.f32 %v321, %v1444
        %1455 = vst [vmem:[#allocation2] sm:$0xff] %v1447
        %1456 = vst [vmem:[#allocation2 + $0x8] sm:$0xff] %v1448
        %1457 = vst [vmem:[#allocation2 + $0x10] sm:$0xff] %v1449
        %1458 = vst [vmem:[#allocation2 + $0x18] sm:$0xff] %v1450
        %1459 = vst [vmem:[#allocation2 + $0x20] sm:$0xff] %v1451
        %1460 = vst [vmem:[#allocation2 + $0x28] sm:$0xff] %v1452
        %1461 = vst [vmem:[#allocation2 + $0x30] sm:$0xff] %v1453
        %1462 = vst [vmem:[#allocation2 + $0x38] sm:$0xff] %v1454
        // Predicated region
        $region45: #{basic_block_nchw.5} parent=39 // pred_check
          %p1463 = pneg %p302
        $region46: #{basic_block_nchw.5} parent=39 // pred_check_branch
          %1465 = sbr.rel (%p1463) target = $region48
        $region47: #{basic_block_nchw.5} parent=39 // pred_region
          %v1466 = vld [vmem:[#allocation2] sm:$0xff]
          %v1467 = vld [vmem:[#allocation2 + $0x8] sm:$0xff]
          %v1468 = vld [vmem:[#allocation2 + $0x10] sm:$0xff]
          %v1469 = vld [vmem:[#allocation2 + $0x18] sm:$0xff]
          %v1470 = vld [vmem:[#allocation2 + $0x20] sm:$0xff]
          %v1471 = vld [vmem:[#allocation2 + $0x28] sm:$0xff]
          %v1472 = vld [vmem:[#allocation2 + $0x30] sm:$0xff]
          %v1473 = vld [vmem:[#allocation2 + $0x38] sm:$0xff]
          %v1474 = vld [vmem:[%s2] sm:$0x1]
          %v1476 = vlaneseq
          %v1477 = vshrl.u32 %v1476, 7
          %v1478 = vsub.s32 0, %v1477
          %v1479 = vrot.slane %v1474, %v1478
          %v1481 = vmul.f32 %v1466, %v1479
          %v1482 = vmul.f32 %v1467, %v1479
          %v1483 = vmul.f32 %v1468, %v1479
          %v1484 = vmul.f32 %v1469, %v1479
          %v1485 = vmul.f32 %v1470, %v1479
          %v1486 = vmul.f32 %v1471, %v1479
          %v1487 = vmul.f32 %v1472, %v1479
          %v1488 = vmul.f32 %v1473, %v1479
          %v1489 = vld [vmem:[%s3] sm:$0x1]
          %v1491 = vlaneseq
          %v1492 = vshrl.u32 %v1491, 7
          %v1493 = vsub.s32 0, %v1492
          %v1494 = vrot.slane %v1489, %v1493
          %v1496 = vadd.f32 %v1481, %v1494
          %v1497 = vadd.f32 %v1482, %v1494
          %v1498 = vadd.f32 %v1483, %v1494
          %v1499 = vadd.f32 %v1484, %v1494
          %v1500 = vadd.f32 %v1485, %v1494
          %v1501 = vadd.f32 %v1486, %v1494
          %v1502 = vadd.f32 %v1487, %v1494
          %v1503 = vadd.f32 %v1488, %v1494
          %v1504 = vld [vmem:[%s298] sm:$0xf]
          %v1505 = vld [vmem:[%s298 + $0x4] sm:$0xf]
          %v1506 = vld [vmem:[%s298 + $0x8] sm:$0xf]
          %v1507 = vld [vmem:[%s298 + $0xc] sm:$0xf]
          %v1508 = vld [vmem:[%s298 + $0x10] sm:$0xf]
          %v1509 = vld [vmem:[%s298 + $0x14] sm:$0xf]
          %v1510 = vld [vmem:[%s298 + $0x18] sm:$0xf]
          %v1511 = vld [vmem:[%s298 + $0x1c] sm:$0xf]
          %v1512 = vunpack.c.l.bf16 %v1504
          %v1513 = vunpack.c.l.bf16 %v1505
          %v1514 = vunpack.c.l.bf16 %v1506
          %v1515 = vunpack.c.l.bf16 %v1507
          %v1516 = vunpack.c.l.bf16 %v1508
          %v1517 = vunpack.c.l.bf16 %v1509
          %v1518 = vunpack.c.l.bf16 %v1510
          %v1519 = vunpack.c.l.bf16 %v1511
          %v1520 = vadd.f32 %v1496, %v1512
          %v1521 = vadd.f32 %v1497, %v1513
          %v1522 = vadd.f32 %v1498, %v1514
          %v1523 = vadd.f32 %v1499, %v1515
          %v1524 = vadd.f32 %v1500, %v1516
          %v1525 = vadd.f32 %v1501, %v1517
          %v1526 = vadd.f32 %v1502, %v1518
          %v1527 = vadd.f32 %v1503, %v1519
          %v1528 = vmax.f32 %v1520, 0.0
          %v1529 = vmax.f32 %v1521, 0.0
          %v1530 = vmax.f32 %v1522, 0.0
          %v1531 = vmax.f32 %v1523, 0.0
          %v1532 = vmax.f32 %v1524, 0.0
          %v1533 = vmax.f32 %v1525, 0.0
          %v1534 = vmax.f32 %v1526, 0.0
          %v1535 = vmax.f32 %v1527, 0.0
          %1536 = vst [vmem:[%s275] sm:$0xff] %v1528
          %1537 = vst [vmem:[%s275 + $0x8] sm:$0xff] %v1529
          %1538 = vst [vmem:[%s275 + $0x10] sm:$0xff] %v1530
          %1539 = vst [vmem:[%s275 + $0x18] sm:$0xff] %v1531
          %1540 = vst [vmem:[%s275 + $0x20] sm:$0xff] %v1532
          %1541 = vst [vmem:[%s275 + $0x28] sm:$0xff] %v1533
          %1542 = vst [vmem:[%s275 + $0x30] sm:$0xff] %v1534
          %1543 = vst [vmem:[%s275 + $0x38] sm:$0xff] %v1535
        $region48: #{basic_block_nchw.5} parent=39 // pred_fallthru
          _
        %s1544 = sand.u32 %s161, 1
        %s1545 = scalar_lea.sflag [#allocation4], %s1544
        %s1546 = sand.u32 %s161, 1
        %s1547 = smul.addr %s1546, 64
        %s1548 = scalar_lea.vmem [#allocation3], %s1547
        // Predicated region
        $region49: #{basic_block_nchw.5} parent=39 // pred_check
          %p1549 = pneg %p171
        $region50: #{basic_block_nchw.5} parent=39 // pred_check_branch
          %1551 = sbr.rel (%p1549) target = $region52
        $region51: #{basic_block_nchw.5} parent=39 // pred_region
          %s1552 = smul.u32 8, %s23
          %s1554 = ssub.s32 1024, 1024
          %1555 = vsyncadd %s1545, %s1554
          %s1556 = smul.addr %s1552, 128
          %s1557 = scalar_lea.hbm %s5, %s1556
          %s1558 = sshll.u32 %s1548, 4
          %s1559 = int_to_ptr.vmem [resolvable:$true] %s1558
          %1564 = dma.vmem_to_hbm [thread:$0]  %s1559, 1024, %s1557, %s1545, 128, 128, 8
        $region52: #{basic_block_nchw.5} parent=39 // pred_fallthru
          _
      $region40: #{basic_block_nchw.5} parent=5 // pred_fallthru
        _
      %p1565 = scmp.le.s32.totalorder 2, %s14
      // Predicated region
      $region53: #{basic_block_nchw.5} parent=5 // pred_check
        %p1566 = pneg %p1565
      $region54: #{basic_block_nchw.5} parent=5 // pred_check_branch
        %1568 = sbr.rel (%p1566) target = $region56
      $region55: #{basic_block_nchw.5} parent=5 // pred_region
        %s1569 = ssub.s32 %s14, 2
        // Predicated region
        $region57: #{basic_block_nchw.5} parent=55 // pred_check
          %p1570 = pneg %p177
        $region58: #{basic_block_nchw.5} parent=55 // pred_check_branch
          %1572 = sbr.rel (%p1570) target = $region60
        $region59: #{basic_block_nchw.5} parent=55 // pred_region
          %s1573 = sand.u32 %s162, 1
          %s1574 = scalar_lea.sflag [#allocation4], %s1573
          %s1575 = sand.u32 %s162, 1
          %s1576 = smul.addr %s1575, 64
          %s1577 = scalar_lea.vmem [#allocation3], %s1576
          %1578 = dma.done %s1574, 1024
        $region60: #{basic_block_nchw.5} parent=55 // pred_fallthru
          _
      $region56: #{basic_block_nchw.5} parent=5 // pred_fallthru
        _
    $region6: #{basic_block_nchw.5} parent=1 // loop_footer
      %s18 = sadd.s32 1, %s14
    $region7: #{basic_block_nchw.5} parent=1 // loop_footer_branch
      %13 = sbr.rel target = $region3
    $region8: #{basic_block_nchw.5} parent=1 // loop_exit
      _
    %1579 = vsyncpa [#allocation4], 1
    %s1580 = scalar_lea.sflag [#allocation4], 1
    %1581 = vsyncpa %s1580, 1

</llo_original>
